<compile_context>
chip_gen: v5e
topology: v5e:2x2
jax: 0.10.0
libtpu: 0.0.40
codegen_flags: <defaults>
</compile_context>

<pallas_src>
import jax
import jax.numpy as jnp
from jax.experimental import pallas as pl
from jax.experimental.pallas import tpu as pltpu


# ---------------------------------------------------------------------------
# Kernel
# ---------------------------------------------------------------------------
def _make_aspp_kernel(H, W, TH, Cin, Cout, d1, d2, dmax):
    """Fused ASPP kernel body; one (batch, TH-row-tile) step per grid point."""

    def branch_conv(xp_ref, w_ref, d, row_base):
        # Dilated 3x3 conv on the shared dmax-padded image block:
        # nine shifted (TH, W, Cin) windows, each contracted with its
        # (Cin, Cout) tap and accumulated in f32 (MXU-accumulated on v7x).
        off = dmax - d                       # extra offset inside dmax padding
        acc = jnp.zeros((TH * W, Cout), jnp.float32)
        for ky in range(3):
            r0 = row_base + off + ky * d
            for kx in range(3):
                c0 = off + kx * d            # static column offset
                t = ky * 3 + kx
                win = xp_ref[0, pl.ds(r0, TH), c0:c0 + W, :]   # (TH, W, Cin)
                win = win.reshape(TH * W, Cin)                 # leading-dim merge
                acc = acc + jnp.dot(win, w_ref[t * Cin:(t + 1) * Cin, :],
                                    preferred_element_type=jnp.float32)
        return acc                                             # (TH*W, Cout) f32

    def kernel(xp_ref, w1_ref, w2_ref, wp_ref, bias_ref, out_ref):
        # xp_ref  : (1, H+2*dmax, W+2*dmax, Cin)  zero-padded input (one DMA / batch)
        # w1_ref  : (9*Cin, Cout)  branch-1 taps (BN scale pre-folded), (ky,kx,ci)-major
        # w2_ref  : (9*Cin, Cout)  branch-2 taps (BN scale pre-folded)
        # wp_ref  : (2*Cout, Cout) 1x1 projection weight (BN scale pre-folded)
        # bias_ref: (3, Cout) f32  rows: branch-1 bias, branch-2 bias, projection bias
        # out_ref : (1, 1, TH*W, Cout)
        h = pl.program_id(1)
        row_base = pl.multiple_of(h * TH, 8)   # TH is a multiple of 8 (or nH == 1)

        # Branch 1: dilated conv (rate d1) -> bias -> ReLU  (BN scale already in w1)
        y1 = branch_conv(xp_ref, w1_ref, d1, row_base)
        y1 = jnp.maximum(y1 + bias_ref[0:1, :], 0.0)

        # Branch 2: dilated conv (rate d2) -> bias -> ReLU
        y2 = branch_conv(xp_ref, w2_ref, d2, row_base)
        y2 = jnp.maximum(y2 + bias_ref[1:2, :], 0.0)

        # 1x1 projection of concat([y1, y2]) == y1 @ Wa + y2 @ Wb, then bias+ReLU.
        cdt = wp_ref.dtype
        z = (jnp.dot(y1.astype(cdt), wp_ref[0:Cout, :],
                     preferred_element_type=jnp.float32)
             + jnp.dot(y2.astype(cdt), wp_ref[Cout:2 * Cout, :],
                       preferred_element_type=jnp.float32))
        z = jnp.maximum(z + bias_ref[2:3, :], 0.0)

        out_ref[0, 0, :, :] = z.astype(out_ref.dtype)

    return kernel


# ---------------------------------------------------------------------------
# Wrapper helpers
# ---------------------------------------------------------------------------
def _pick_tile_h(H, W, tile_h):
    """Largest TH <= target that divides H and is a multiple of 8; aim TH*W >= 256."""
    want = max(tile_h, -(-256 // max(W, 1)))   # fill the 256-row MXU of v6e/v7x
    want = ((want + 7) // 8) * 8
    th = min(want, H)
    for cand in range(th, 0, -1):
        if H % cand == 0 and (cand % 8 == 0 or cand == H):
            return cand
    # Fallback: whole-height tile (beware VMEM for very large H*W*Cin).
    return H


def _vmem_limit_bytes():
    """3/4 of physical VMEM (~48 MiB on v7x, capped at 96 MiB on 128 MiB parts)."""
    try:
        cap = pltpu.get_tpu_info().vmem_capacity_bytes
        return int(min(cap * 3 // 4, 96 * 1024 * 1024))
    except Exception:
        return 48 * 1024 * 1024


# ---------------------------------------------------------------------------
# Forward
# ---------------------------------------------------------------------------
def aspp_forward_nhwc(x_nhwc, params, atrous_rates=(3, 5), *, tile_h=16,
                      compute_dtype=jnp.bfloat16):
    """Fused ASPP forward on NHWC input: (N, H, W, C) -> (N, H, W, C) float32."""
    d1, d2 = atrous_rates
    dmax = max(d1, d2)
    N, H, W, Cin = x_nhwc.shape
    Cout = Cin
    TH = _pick_tile_h(H, W, tile_h)
    nH = H // TH

    # Single zero-pad to the max dilation; both branches slice the same buffer.
    x = x_nhwc.astype(compute_dtype)
    xp = jnp.pad(x, ((0, 0), (dmax, dmax), (dmax, dmax), (0, 0)))
    Hp, Wp = H + 2 * dmax, W + 2 * dmax

    # Fold the eval-mode BN scale into the conv / projection weights; only the
    # per-channel biases remain for the kernel.  Weight rows are (ky,kx,ci)-major.
    w1 = (params["w1_hwio"] * params["s1"]).reshape(9 * Cin, Cout).astype(compute_dtype)
    w2 = (params["w2_hwio"] * params["s2"]).reshape(9 * Cin, Cout).astype(compute_dtype)
    wp = (params["wp"] * params["sp"]).astype(compute_dtype)          # (2*Cout, Cout)
    bias = jnp.stack([params["b1"], params["b2"], params["bp"]]).astype(jnp.float32)

    kernel = _make_aspp_kernel(H, W, TH, Cin, Cout, d1, d2, dmax)

    # The padded-image block index_map is constant along the row-tile axis, so
    # it is DMA'd once per batch element and reused across row tiles; the next
    # batch's image is prefetched one row-tile ahead.  Weights / biases are
    # constant across the whole grid (fetched once).
    out = pl.pallas_call(
        kernel,
        out_shape=jax.ShapeDtypeStruct((N, nH, TH * W, Cout), jnp.float32),
        grid=(N, nH),
        in_specs=[
            pl.BlockSpec((1, Hp, Wp, Cin), lambda n, h: (n, 0, 0, 0)),
            pl.BlockSpec((9 * Cin, Cout), lambda n, h: (0, 0)),
            pl.BlockSpec((9 * Cin, Cout), lambda n, h: (0, 0)),
            pl.BlockSpec((2 * Cout, Cout), lambda n, h: (0, 0)),
            pl.BlockSpec((3, Cout), lambda n, h: (0, 0)),
        ],
        out_specs=pl.BlockSpec((1, 1, TH * W, Cout), lambda n, h: (n, h, 0, 0)),
        compiler_params=pltpu.CompilerParams(
            # Megacore split on the batch axis only: splitting the row-tile
            # axis would duplicate the per-batch full-image DMA on each core.
            dimension_semantics=("parallel", "arbitrary"),
            vmem_limit_bytes=_vmem_limit_bytes()),
    )(xp, w1, w2, wp, bias)

    # (N, nH, TH*W, Cout) -> (N, H, W, Cout): pure layout plumbing.
    return out.reshape(N, H, W, Cout)


def aspp_forward(x_nchw, params, atrous_rates=(3, 5), *, tile_h=16,
                 compute_dtype=jnp.bfloat16):
    """PyTorch-compatible NCHW interface: (N, C, H, W) -> (N, C, H, W)."""
    x = jnp.transpose(x_nchw, (0, 2, 3, 1))
    y = aspp_forward_nhwc(x, params, atrous_rates, tile_h=tile_h,
                          compute_dtype=compute_dtype)
    return jnp.transpose(y, (0, 3, 1, 2))


# ---------------------------------------------------------------------------
# Parameters & pure-JAX reference
# ---------------------------------------------------------------------------
def make_params(in_channels, atrous_rates=(3, 5), seed=0):
    """Deterministic parameter construction (shapes per the PyTorch module)."""
    Cin = in_channels
    Cout = in_channels
    eps = 1e-5
    key = jax.random.PRNGKey(seed)
    k1, k2, k3 = jax.random.split(key, 3)

    # Conv weights. PyTorch layout is OIHW; stored as HWIO for NHWC math.
    w1_oihw = 0.1 * jax.random.normal(k1, (Cout, Cin, 3, 3), jnp.float32)
    w2_oihw = 0.1 * jax.random.normal(k2, (Cout, Cin, 3, 3), jnp.float32)
    wp_oihw = 0.1 * jax.random.normal(k3, (Cout, 2 * Cout, 1, 1), jnp.float32)

    w1_hwio = jnp.transpose(w1_oihw, (2, 3, 1, 0))        # (3,3,Cin,Cout)
    w2_hwio = jnp.transpose(w2_oihw, (2, 3, 1, 0))
    wp = jnp.transpose(wp_oihw[:, :, 0, 0], (1, 0))       # (2*Cout, Cout)

    # Eval-mode BatchNorm with default init: gamma=1, beta=0, mean=0, var=1.
    def bn_fold(gamma, beta, mean, var):
        scale = gamma / jnp.sqrt(var + eps)
        bias = beta - mean * scale
        return scale, bias

    ones = jnp.ones((Cout,), jnp.float32)
    zeros = jnp.zeros((Cout,), jnp.float32)
    s1, b1 = bn_fold(ones, zeros, zeros, ones)
    s2, b2 = bn_fold(ones, zeros, zeros, ones)
    sp, bp = bn_fold(ones, zeros, zeros, ones)

    return dict(w1_hwio=w1_hwio, w2_hwio=w2_hwio, wp=wp,
                s1=s1, b1=b1, s2=s2, b2=b2, sp=sp, bp=bp)


def aspp_reference(x_nchw, params, atrous_rates=(3, 5)):
    """Pure-JAX reference (lax convs) mirroring the PyTorch forward."""
    d1, d2 = atrous_rates
    x = jnp.transpose(x_nchw, (0, 2, 3, 1)).astype(jnp.float32)  # NHWC

    def conv_bn_relu(xx, w_hwio, d, scale, bias):
        y = jax.lax.conv_general_dilated(
            xx, w_hwio, window_strides=(1, 1),
            padding=[(d, d), (d, d)], rhs_dilation=(d, d),
            dimension_numbers=("NHWC", "HWIO", "NHWC"))
        return jnp.maximum(y * scale + bias, 0.0)

    y1 = conv_bn_relu(x, params["w1_hwio"], d1, params["s1"], params["b1"])
    y2 = conv_bn_relu(x, params["w2_hwio"], d2, params["s2"], params["b2"])
    cat = jnp.concatenate([y1, y2], axis=-1)
    z = jnp.einsum("nhwc,cd->nhwd", cat, params["wp"])
    z = jnp.maximum(z * params["sp"] + params["bp"], 0.0)
    return jnp.transpose(z, (0, 3, 1, 2))


# ---------------------------------------------------------------------------
# Test
# ---------------------------------------------------------------------------
if __name__ == "__main__":
    N, C, H, W = 2, 4, 16, 16
    rates = (3, 5)

    key = jax.random.PRNGKey(0)
    x = jax.random.normal(key, (N, C, H, W), jnp.float32)   # NCHW like PyTorch

    params = make_params(C, rates, seed=0)
    ref = jax.block_until_ready(aspp_reference(x, params, rates))

    # f32 compute path: must match the f32 lax reference tightly.
    out_f32 = jax.block_until_ready(
        aspp_forward(x, params, rates, compute_dtype=jnp.float32))
    assert out_f32.shape == (N, C, H, W), out_f32.shape
    assert jnp.allclose(out_f32, ref, atol=1e-4, rtol=1e-4), (
        float(jnp.max(jnp.abs(out_f32 - ref))))

    # Default bf16 matmul path (f32 accumulation): loose tolerance vs. f32 ref.
    out_bf16 = jax.block_until_ready(aspp_forward(x, params, rates))
    assert out_bf16.shape == (N, C, H, W), out_bf16.shape
    assert jnp.allclose(out_bf16, ref, atol=5e-2, rtol=5e-2), (
        float(jnp.max(jnp.abs(out_bf16 - ref))))

    print("KERNEL_OK")
</pallas_src>

<mosaic_0001>
module attributes {stable_mosaic.version = 11 : i64} {
  func.func @kernel(%arg0: i32, %arg1: i32, %arg2: memref<1x26x26x4xf32, #tpu.memory_space<vmem>>, %arg3: memref<36x4xf32, #tpu.memory_space<vmem>>, %arg4: memref<36x4xf32, #tpu.memory_space<vmem>>, %arg5: memref<8x4xf32, #tpu.memory_space<vmem>>, %arg6: memref<3x4xf32, #tpu.memory_space<vmem>>, %arg7: memref<1x1x256x4xf32, #tpu.memory_space<vmem>>) attributes {dimension_semantics = [#tpu.dimension_semantics<parallel>, #tpu.dimension_semantics<arbitrary>], iteration_bounds = array<i64: 2, 1>, scalar_prefetch = 0 : i64, scratch_operands = 0 : i64, tpu.core_type = #tpu.core_type<tc>, window_params = [{transform_indices = @transform_0, window_bounds = array<i64: 1, 26, 26, 4>}, {pipeline_mode = #tpu.pipeline_mode<synchronous>, transform_indices = @transform_1, window_bounds = array<i64: 36, 4>}, {pipeline_mode = #tpu.pipeline_mode<synchronous>, transform_indices = @transform_2, window_bounds = array<i64: 36, 4>}, {pipeline_mode = #tpu.pipeline_mode<synchronous>, transform_indices = @transform_3, window_bounds = array<i64: 8, 4>}, {pipeline_mode = #tpu.pipeline_mode<synchronous>, transform_indices = @transform_4, window_bounds = array<i64: 3, 4>}, {transform_indices = @transform_5, window_bounds = array<i64: 1, 1, 256, 4>}]} {
    %c16_i32 = arith.constant 16 : i32
    %0 = arith.muli %arg1, %c16_i32 : i32
    %1 = tpu.assume_multiple %0, 8 : i32
    %cst = arith.constant 0.000000e+00 : f32
    %2 = vector.broadcast %cst : f32 to vector<256x4xf32>
    %c2_i32 = arith.constant 2 : i32
    %3 = arith.addi %1, %c2_i32 : i32
    %c0_i32 = arith.constant 0 : i32
    %4 = arith.addi %3, %c0_i32 : i32
    %c0 = arith.constant 0 : index
    %5 = arith.index_cast %4 : i32 to index
    %c2 = arith.constant 2 : index
    %c0_0 = arith.constant 0 : index
    %6 = vector.load %arg2[%c0, %5, %c2, %c0_0] : memref<1x26x26x4xf32, #tpu.memory_space<vmem>>, vector<1x16x16x4xf32>
    %7 = vector.shape_cast %6 : vector<1x16x16x4xf32> to vector<16x16x4xf32>
    %8 = vector.shape_cast %7 : vector<16x16x4xf32> to vector<256x4xf32>
    %c0_1 = arith.constant 0 : index
    %c0_2 = arith.constant 0 : index
    %9 = vector.load %arg3[%c0_1, %c0_2] : memref<36x4xf32, #tpu.memory_space<vmem>>, vector<4x4xf32>
    %cst_3 = arith.constant dense<0.000000e+00> : vector<256x4xf32>
    %10 = tpu.matmul %8, %9, %cst_3 {dimension_numbers = #tpu.dot_dimension_numbers<[1], [0], [0], [1], [0, 0, 1, 1], [], []>} : vector<256x4xf32>, vector<4x4xf32>, vector<256x4xf32> -> vector<256x4xf32>
    %11 = arith.addf %2, %10 : vector<256x4xf32>
    %c0_4 = arith.constant 0 : index
    %12 = arith.index_cast %4 : i32 to index
    %c5 = arith.constant 5 : index
    %c0_5 = arith.constant 0 : index
    %13 = vector.load %arg2[%c0_4, %12, %c5, %c0_5] : memref<1x26x26x4xf32, #tpu.memory_space<vmem>>, vector<1x16x16x4xf32>
    %14 = vector.shape_cast %13 : vector<1x16x16x4xf32> to vector<16x16x4xf32>
    %15 = vector.shape_cast %14 : vector<16x16x4xf32> to vector<256x4xf32>
    %c4 = arith.constant 4 : index
    %c0_6 = arith.constant 0 : index
    %16 = vector.load %arg3[%c4, %c0_6] : memref<36x4xf32, #tpu.memory_space<vmem>>, vector<4x4xf32>
    %cst_7 = arith.constant dense<0.000000e+00> : vector<256x4xf32>
    %17 = tpu.matmul %15, %16, %cst_7 {dimension_numbers = #tpu.dot_dimension_numbers<[1], [0], [0], [1], [0, 0, 1, 1], [], []>} : vector<256x4xf32>, vector<4x4xf32>, vector<256x4xf32> -> vector<256x4xf32>
    %18 = arith.addf %11, %17 : vector<256x4xf32>
    %c0_8 = arith.constant 0 : index
    %19 = arith.index_cast %4 : i32 to index
    %c8 = arith.constant 8 : index
    %c0_9 = arith.constant 0 : index
    %20 = vector.load %arg2[%c0_8, %19, %c8, %c0_9] : memref<1x26x26x4xf32, #tpu.memory_space<vmem>>, vector<1x16x16x4xf32>
    %21 = vector.shape_cast %20 : vector<1x16x16x4xf32> to vector<16x16x4xf32>
    %22 = vector.shape_cast %21 : vector<16x16x4xf32> to vector<256x4xf32>
    %c8_10 = arith.constant 8 : index
    %c0_11 = arith.constant 0 : index
    %23 = vector.load %arg3[%c8_10, %c0_11] : memref<36x4xf32, #tpu.memory_space<vmem>>, vector<4x4xf32>
    %cst_12 = arith.constant dense<0.000000e+00> : vector<256x4xf32>
    %24 = tpu.matmul %22, %23, %cst_12 {dimension_numbers = #tpu.dot_dimension_numbers<[1], [0], [0], [1], [0, 0, 1, 1], [], []>} : vector<256x4xf32>, vector<4x4xf32>, vector<256x4xf32> -> vector<256x4xf32>
    %25 = arith.addf %18, %24 : vector<256x4xf32>
    %c2_i32_13 = arith.constant 2 : i32
    %26 = arith.addi %1, %c2_i32_13 : i32
    %c3_i32 = arith.constant 3 : i32
    %27 = arith.addi %26, %c3_i32 : i32
    %c0_14 = arith.constant 0 : index
    %28 = arith.index_cast %27 : i32 to index
    %c2_15 = arith.constant 2 : index
    %c0_16 = arith.constant 0 : index
    %29 = vector.load %arg2[%c0_14, %28, %c2_15, %c0_16] : memref<1x26x26x4xf32, #tpu.memory_space<vmem>>, vector<1x16x16x4xf32>
    %30 = vector.shape_cast %29 : vector<1x16x16x4xf32> to vector<16x16x4xf32>
    %31 = vector.shape_cast %30 : vector<16x16x4xf32> to vector<256x4xf32>
    %c12 = arith.constant 12 : index
    %c0_17 = arith.constant 0 : index
    %32 = vector.load %arg3[%c12, %c0_17] : memref<36x4xf32, #tpu.memory_space<vmem>>, vector<4x4xf32>
    %cst_18 = arith.constant dense<0.000000e+00> : vector<256x4xf32>
    %33 = tpu.matmul %31, %32, %cst_18 {dimension_numbers = #tpu.dot_dimension_numbers<[1], [0], [0], [1], [0, 0, 1, 1], [], []>} : vector<256x4xf32>, vector<4x4xf32>, vector<256x4xf32> -> vector<256x4xf32>
    %34 = arith.addf %25, %33 : vector<256x4xf32>
    %c0_19 = arith.constant 0 : index
    %35 = arith.index_cast %27 : i32 to index
    %c5_20 = arith.constant 5 : index
    %c0_21 = arith.constant 0 : index
    %36 = vector.load %arg2[%c0_19, %35, %c5_20, %c0_21] : memref<1x26x26x4xf32, #tpu.memory_space<vmem>>, vector<1x16x16x4xf32>
    %37 = vector.shape_cast %36 : vector<1x16x16x4xf32> to vector<16x16x4xf32>
    %38 = vector.shape_cast %37 : vector<16x16x4xf32> to vector<256x4xf32>
    %c16 = arith.constant 16 : index
    %c0_22 = arith.constant 0 : index
    %39 = vector.load %arg3[%c16, %c0_22] : memref<36x4xf32, #tpu.memory_space<vmem>>, vector<4x4xf32>
    %cst_23 = arith.constant dense<0.000000e+00> : vector<256x4xf32>
    %40 = tpu.matmul %38, %39, %cst_23 {dimension_numbers = #tpu.dot_dimension_numbers<[1], [0], [0], [1], [0, 0, 1, 1], [], []>} : vector<256x4xf32>, vector<4x4xf32>, vector<256x4xf32> -> vector<256x4xf32>
    %41 = arith.addf %34, %40 : vector<256x4xf32>
    %c0_24 = arith.constant 0 : index
    %42 = arith.index_cast %27 : i32 to index
    %c8_25 = arith.constant 8 : index
    %c0_26 = arith.constant 0 : index
    %43 = vector.load %arg2[%c0_24, %42, %c8_25, %c0_26] : memref<1x26x26x4xf32, #tpu.memory_space<vmem>>, vector<1x16x16x4xf32>
    %44 = vector.shape_cast %43 : vector<1x16x16x4xf32> to vector<16x16x4xf32>
    %45 = vector.shape_cast %44 : vector<16x16x4xf32> to vector<256x4xf32>
    %c20 = arith.constant 20 : index
    %c0_27 = arith.constant 0 : index
    %46 = vector.load %arg3[%c20, %c0_27] : memref<36x4xf32, #tpu.memory_space<vmem>>, vector<4x4xf32>
    %cst_28 = arith.constant dense<0.000000e+00> : vector<256x4xf32>
    %47 = tpu.matmul %45, %46, %cst_28 {dimension_numbers = #tpu.dot_dimension_numbers<[1], [0], [0], [1], [0, 0, 1, 1], [], []>} : vector<256x4xf32>, vector<4x4xf32>, vector<256x4xf32> -> vector<256x4xf32>
    %48 = arith.addf %41, %47 : vector<256x4xf32>
    %c2_i32_29 = arith.constant 2 : i32
    %49 = arith.addi %1, %c2_i32_29 : i32
    %c6_i32 = arith.constant 6 : i32
    %50 = arith.addi %49, %c6_i32 : i32
    %c0_30 = arith.constant 0 : index
    %51 = arith.index_cast %50 : i32 to index
    %c2_31 = arith.constant 2 : index
    %c0_32 = arith.constant 0 : index
    %52 = vector.load %arg2[%c0_30, %51, %c2_31, %c0_32] : memref<1x26x26x4xf32, #tpu.memory_space<vmem>>, vector<1x16x16x4xf32>
    %53 = vector.shape_cast %52 : vector<1x16x16x4xf32> to vector<16x16x4xf32>
    %54 = vector.shape_cast %53 : vector<16x16x4xf32> to vector<256x4xf32>
    %c24 = arith.constant 24 : index
    %c0_33 = arith.constant 0 : index
    %55 = vector.load %arg3[%c24, %c0_33] : memref<36x4xf32, #tpu.memory_space<vmem>>, vector<4x4xf32>
    %cst_34 = arith.constant dense<0.000000e+00> : vector<256x4xf32>
    %56 = tpu.matmul %54, %55, %cst_34 {dimension_numbers = #tpu.dot_dimension_numbers<[1], [0], [0], [1], [0, 0, 1, 1], [], []>} : vector<256x4xf32>, vector<4x4xf32>, vector<256x4xf32> -> vector<256x4xf32>
    %57 = arith.addf %48, %56 : vector<256x4xf32>
    %c0_35 = arith.constant 0 : index
    %58 = arith.index_cast %50 : i32 to index
    %c5_36 = arith.constant 5 : index
    %c0_37 = arith.constant 0 : index
    %59 = vector.load %arg2[%c0_35, %58, %c5_36, %c0_37] : memref<1x26x26x4xf32, #tpu.memory_space<vmem>>, vector<1x16x16x4xf32>
    %60 = vector.shape_cast %59 : vector<1x16x16x4xf32> to vector<16x16x4xf32>
    %61 = vector.shape_cast %60 : vector<16x16x4xf32> to vector<256x4xf32>
    %c28 = arith.constant 28 : index
    %c0_38 = arith.constant 0 : index
    %62 = vector.load %arg3[%c28, %c0_38] : memref<36x4xf32, #tpu.memory_space<vmem>>, vector<4x4xf32>
    %cst_39 = arith.constant dense<0.000000e+00> : vector<256x4xf32>
    %63 = tpu.matmul %61, %62, %cst_39 {dimension_numbers = #tpu.dot_dimension_numbers<[1], [0], [0], [1], [0, 0, 1, 1], [], []>} : vector<256x4xf32>, vector<4x4xf32>, vector<256x4xf32> -> vector<256x4xf32>
    %64 = arith.addf %57, %63 : vector<256x4xf32>
    %c0_40 = arith.constant 0 : index
    %65 = arith.index_cast %50 : i32 to index
    %c8_41 = arith.constant 8 : index
    %c0_42 = arith.constant 0 : index
    %66 = vector.load %arg2[%c0_40, %65, %c8_41, %c0_42] : memref<1x26x26x4xf32, #tpu.memory_space<vmem>>, vector<1x16x16x4xf32>
    %67 = vector.shape_cast %66 : vector<1x16x16x4xf32> to vector<16x16x4xf32>
    %68 = vector.shape_cast %67 : vector<16x16x4xf32> to vector<256x4xf32>
    %c32 = arith.constant 32 : index
    %c0_43 = arith.constant 0 : index
    %69 = vector.load %arg3[%c32, %c0_43] : memref<36x4xf32, #tpu.memory_space<vmem>>, vector<4x4xf32>
    %cst_44 = arith.constant dense<0.000000e+00> : vector<256x4xf32>
    %70 = tpu.matmul %68, %69, %cst_44 {dimension_numbers = #tpu.dot_dimension_numbers<[1], [0], [0], [1], [0, 0, 1, 1], [], []>} : vector<256x4xf32>, vector<4x4xf32>, vector<256x4xf32> -> vector<256x4xf32>
    %71 = arith.addf %64, %70 : vector<256x4xf32>
    %c0_45 = arith.constant 0 : index
    %c0_46 = arith.constant 0 : index
    %72 = vector.load %arg6[%c0_45, %c0_46] : memref<3x4xf32, #tpu.memory_space<vmem>>, vector<1x4xf32>
    %73 = vector.broadcast %72 : vector<1x4xf32> to vector<256x4xf32>
    %74 = arith.addf %71, %73 : vector<256x4xf32>
    %cst_47 = arith.constant 0.000000e+00 : f32
    %75 = vector.broadcast %cst_47 : f32 to vector<256x4xf32>
    %76 = arith.maximumf %74, %75 : vector<256x4xf32>
    %cst_48 = arith.constant 0.000000e+00 : f32
    %77 = vector.broadcast %cst_48 : f32 to vector<256x4xf32>
    %c0_i32_49 = arith.constant 0 : i32
    %78 = arith.addi %1, %c0_i32_49 : i32
    %c0_i32_50 = arith.constant 0 : i32
    %79 = arith.addi %78, %c0_i32_50 : i32
    %c0_51 = arith.constant 0 : index
    %80 = arith.index_cast %79 : i32 to index
    %c0_52 = arith.constant 0 : index
    %c0_53 = arith.constant 0 : index
    %81 = vector.load %arg2[%c0_51, %80, %c0_52, %c0_53] : memref<1x26x26x4xf32, #tpu.memory_space<vmem>>, vector<1x16x16x4xf32>
    %82 = vector.shape_cast %81 : vector<1x16x16x4xf32> to vector<16x16x4xf32>
    %83 = vector.shape_cast %82 : vector<16x16x4xf32> to vector<256x4xf32>
    %c0_54 = arith.constant 0 : index
    %c0_55 = arith.constant 0 : index
    %84 = vector.load %arg4[%c0_54, %c0_55] : memref<36x4xf32, #tpu.memory_space<vmem>>, vector<4x4xf32>
    %cst_56 = arith.constant dense<0.000000e+00> : vector<256x4xf32>
    %85 = tpu.matmul %83, %84, %cst_56 {dimension_numbers = #tpu.dot_dimension_numbers<[1], [0], [0], [1], [0, 0, 1, 1], [], []>} : vector<256x4xf32>, vector<4x4xf32>, vector<256x4xf32> -> vector<256x4xf32>
    %86 = arith.addf %77, %85 : vector<256x4xf32>
    %c0_57 = arith.constant 0 : index
    %87 = arith.index_cast %79 : i32 to index
    %c5_58 = arith.constant 5 : index
    %c0_59 = arith.constant 0 : index
    %88 = vector.load %arg2[%c0_57, %87, %c5_58, %c0_59] : memref<1x26x26x4xf32, #tpu.memory_space<vmem>>, vector<1x16x16x4xf32>
    %89 = vector.shape_cast %88 : vector<1x16x16x4xf32> to vector<16x16x4xf32>
    %90 = vector.shape_cast %89 : vector<16x16x4xf32> to vector<256x4xf32>
    %c4_60 = arith.constant 4 : index
    %c0_61 = arith.constant 0 : index
    %91 = vector.load %arg4[%c4_60, %c0_61] : memref<36x4xf32, #tpu.memory_space<vmem>>, vector<4x4xf32>
    %cst_62 = arith.constant dense<0.000000e+00> : vector<256x4xf32>
    %92 = tpu.matmul %90, %91, %cst_62 {dimension_numbers = #tpu.dot_dimension_numbers<[1], [0], [0], [1], [0, 0, 1, 1], [], []>} : vector<256x4xf32>, vector<4x4xf32>, vector<256x4xf32> -> vector<256x4xf32>
    %93 = arith.addf %86, %92 : vector<256x4xf32>
    %c0_63 = arith.constant 0 : index
    %94 = arith.index_cast %79 : i32 to index
    %c10 = arith.constant 10 : index
    %c0_64 = arith.constant 0 : index
    %95 = vector.load %arg2[%c0_63, %94, %c10, %c0_64] : memref<1x26x26x4xf32, #tpu.memory_space<vmem>>, vector<1x16x16x4xf32>
    %96 = vector.shape_cast %95 : vector<1x16x16x4xf32> to vector<16x16x4xf32>
    %97 = vector.shape_cast %96 : vector<16x16x4xf32> to vector<256x4xf32>
    %c8_65 = arith.constant 8 : index
    %c0_66 = arith.constant 0 : index
    %98 = vector.load %arg4[%c8_65, %c0_66] : memref<36x4xf32, #tpu.memory_space<vmem>>, vector<4x4xf32>
    %cst_67 = arith.constant dense<0.000000e+00> : vector<256x4xf32>
    %99 = tpu.matmul %97, %98, %cst_67 {dimension_numbers = #tpu.dot_dimension_numbers<[1], [0], [0], [1], [0, 0, 1, 1], [], []>} : vector<256x4xf32>, vector<4x4xf32>, vector<256x4xf32> -> vector<256x4xf32>
    %100 = arith.addf %93, %99 : vector<256x4xf32>
    %c0_i32_68 = arith.constant 0 : i32
    %101 = arith.addi %1, %c0_i32_68 : i32
    %c5_i32 = arith.constant 5 : i32
    %102 = arith.addi %101, %c5_i32 : i32
    %c0_69 = arith.constant 0 : index
    %103 = arith.index_cast %102 : i32 to index
    %c0_70 = arith.constant 0 : index
    %c0_71 = arith.constant 0 : index
    %104 = vector.load %arg2[%c0_69, %103, %c0_70, %c0_71] : memref<1x26x26x4xf32, #tpu.memory_space<vmem>>, vector<1x16x16x4xf32>
    %105 = vector.shape_cast %104 : vector<1x16x16x4xf32> to vector<16x16x4xf32>
    %106 = vector.shape_cast %105 : vector<16x16x4xf32> to vector<256x4xf32>
    %c12_72 = arith.constant 12 : index
    %c0_73 = arith.constant 0 : index
    %107 = vector.load %arg4[%c12_72, %c0_73] : memref<36x4xf32, #tpu.memory_space<vmem>>, vector<4x4xf32>
    %cst_74 = arith.constant dense<0.000000e+00> : vector<256x4xf32>
    %108 = tpu.matmul %106, %107, %cst_74 {dimension_numbers = #tpu.dot_dimension_numbers<[1], [0], [0], [1], [0, 0, 1, 1], [], []>} : vector<256x4xf32>, vector<4x4xf32>, vector<256x4xf32> -> vector<256x4xf32>
    %109 = arith.addf %100, %108 : vector<256x4xf32>
    %c0_75 = arith.constant 0 : index
    %110 = arith.index_cast %102 : i32 to index
    %c5_76 = arith.constant 5 : index
    %c0_77 = arith.constant 0 : index
    %111 = vector.load %arg2[%c0_75, %110, %c5_76, %c0_77] : memref<1x26x26x4xf32, #tpu.memory_space<vmem>>, vector<1x16x16x4xf32>
    %112 = vector.shape_cast %111 : vector<1x16x16x4xf32> to vector<16x16x4xf32>
    %113 = vector.shape_cast %112 : vector<16x16x4xf32> to vector<256x4xf32>
    %c16_78 = arith.constant 16 : index
    %c0_79 = arith.constant 0 : index
    %114 = vector.load %arg4[%c16_78, %c0_79] : memref<36x4xf32, #tpu.memory_space<vmem>>, vector<4x4xf32>
    %cst_80 = arith.constant dense<0.000000e+00> : vector<256x4xf32>
    %115 = tpu.matmul %113, %114, %cst_80 {dimension_numbers = #tpu.dot_dimension_numbers<[1], [0], [0], [1], [0, 0, 1, 1], [], []>} : vector<256x4xf32>, vector<4x4xf32>, vector<256x4xf32> -> vector<256x4xf32>
    %116 = arith.addf %109, %115 : vector<256x4xf32>
    %c0_81 = arith.constant 0 : index
    %117 = arith.index_cast %102 : i32 to index
    %c10_82 = arith.constant 10 : index
    %c0_83 = arith.constant 0 : index
    %118 = vector.load %arg2[%c0_81, %117, %c10_82, %c0_83] : memref<1x26x26x4xf32, #tpu.memory_space<vmem>>, vector<1x16x16x4xf32>
    %119 = vector.shape_cast %118 : vector<1x16x16x4xf32> to vector<16x16x4xf32>
    %120 = vector.shape_cast %119 : vector<16x16x4xf32> to vector<256x4xf32>
    %c20_84 = arith.constant 20 : index
    %c0_85 = arith.constant 0 : index
    %121 = vector.load %arg4[%c20_84, %c0_85] : memref<36x4xf32, #tpu.memory_space<vmem>>, vector<4x4xf32>
    %cst_86 = arith.constant dense<0.000000e+00> : vector<256x4xf32>
    %122 = tpu.matmul %120, %121, %cst_86 {dimension_numbers = #tpu.dot_dimension_numbers<[1], [0], [0], [1], [0, 0, 1, 1], [], []>} : vector<256x4xf32>, vector<4x4xf32>, vector<256x4xf32> -> vector<256x4xf32>
    %123 = arith.addf %116, %122 : vector<256x4xf32>
    %c0_i32_87 = arith.constant 0 : i32
    %124 = arith.addi %1, %c0_i32_87 : i32
    %c10_i32 = arith.constant 10 : i32
    %125 = arith.addi %124, %c10_i32 : i32
    %c0_88 = arith.constant 0 : index
    %126 = arith.index_cast %125 : i32 to index
    %c0_89 = arith.constant 0 : index
    %c0_90 = arith.constant 0 : index
    %127 = vector.load %arg2[%c0_88, %126, %c0_89, %c0_90] : memref<1x26x26x4xf32, #tpu.memory_space<vmem>>, vector<1x16x16x4xf32>
    %128 = vector.shape_cast %127 : vector<1x16x16x4xf32> to vector<16x16x4xf32>
    %129 = vector.shape_cast %128 : vector<16x16x4xf32> to vector<256x4xf32>
    %c24_91 = arith.constant 24 : index
    %c0_92 = arith.constant 0 : index
    %130 = vector.load %arg4[%c24_91, %c0_92] : memref<36x4xf32, #tpu.memory_space<vmem>>, vector<4x4xf32>
    %cst_93 = arith.constant dense<0.000000e+00> : vector<256x4xf32>
    %131 = tpu.matmul %129, %130, %cst_93 {dimension_numbers = #tpu.dot_dimension_numbers<[1], [0], [0], [1], [0, 0, 1, 1], [], []>} : vector<256x4xf32>, vector<4x4xf32>, vector<256x4xf32> -> vector<256x4xf32>
    %132 = arith.addf %123, %131 : vector<256x4xf32>
    %c0_94 = arith.constant 0 : index
    %133 = arith.index_cast %125 : i32 to index
    %c5_95 = arith.constant 5 : index
    %c0_96 = arith.constant 0 : index
    %134 = vector.load %arg2[%c0_94, %133, %c5_95, %c0_96] : memref<1x26x26x4xf32, #tpu.memory_space<vmem>>, vector<1x16x16x4xf32>
    %135 = vector.shape_cast %134 : vector<1x16x16x4xf32> to vector<16x16x4xf32>
    %136 = vector.shape_cast %135 : vector<16x16x4xf32> to vector<256x4xf32>
    %c28_97 = arith.constant 28 : index
    %c0_98 = arith.constant 0 : index
    %137 = vector.load %arg4[%c28_97, %c0_98] : memref<36x4xf32, #tpu.memory_space<vmem>>, vector<4x4xf32>
    %cst_99 = arith.constant dense<0.000000e+00> : vector<256x4xf32>
    %138 = tpu.matmul %136, %137, %cst_99 {dimension_numbers = #tpu.dot_dimension_numbers<[1], [0], [0], [1], [0, 0, 1, 1], [], []>} : vector<256x4xf32>, vector<4x4xf32>, vector<256x4xf32> -> vector<256x4xf32>
    %139 = arith.addf %132, %138 : vector<256x4xf32>
    %c0_100 = arith.constant 0 : index
    %140 = arith.index_cast %125 : i32 to index
    %c10_101 = arith.constant 10 : index
    %c0_102 = arith.constant 0 : index
    %141 = vector.load %arg2[%c0_100, %140, %c10_101, %c0_102] : memref<1x26x26x4xf32, #tpu.memory_space<vmem>>, vector<1x16x16x4xf32>
    %142 = vector.shape_cast %141 : vector<1x16x16x4xf32> to vector<16x16x4xf32>
    %143 = vector.shape_cast %142 : vector<16x16x4xf32> to vector<256x4xf32>
    %c32_103 = arith.constant 32 : index
    %c0_104 = arith.constant 0 : index
    %144 = vector.load %arg4[%c32_103, %c0_104] : memref<36x4xf32, #tpu.memory_space<vmem>>, vector<4x4xf32>
    %cst_105 = arith.constant dense<0.000000e+00> : vector<256x4xf32>
    %145 = tpu.matmul %143, %144, %cst_105 {dimension_numbers = #tpu.dot_dimension_numbers<[1], [0], [0], [1], [0, 0, 1, 1], [], []>} : vector<256x4xf32>, vector<4x4xf32>, vector<256x4xf32> -> vector<256x4xf32>
    %146 = arith.addf %139, %145 : vector<256x4xf32>
    %c1 = arith.constant 1 : index
    %c0_106 = arith.constant 0 : index
    %147 = vector.load %arg6[%c1, %c0_106] : memref<3x4xf32, #tpu.memory_space<vmem>>, vector<1x4xf32>
    %148 = vector.broadcast %147 : vector<1x4xf32> to vector<256x4xf32>
    %149 = arith.addf %146, %148 : vector<256x4xf32>
    %cst_107 = arith.constant 0.000000e+00 : f32
    %150 = vector.broadcast %cst_107 : f32 to vector<256x4xf32>
    %151 = arith.maximumf %149, %150 : vector<256x4xf32>
    %c0_108 = arith.constant 0 : index
    %c0_109 = arith.constant 0 : index
    %152 = vector.load %arg5[%c0_108, %c0_109] : memref<8x4xf32, #tpu.memory_space<vmem>>, vector<4x4xf32>
    %cst_110 = arith.constant dense<0.000000e+00> : vector<256x4xf32>
    %153 = tpu.matmul %76, %152, %cst_110 {dimension_numbers = #tpu.dot_dimension_numbers<[1], [0], [0], [1], [0, 0, 1, 1], [], []>} : vector<256x4xf32>, vector<4x4xf32>, vector<256x4xf32> -> vector<256x4xf32>
    %c4_111 = arith.constant 4 : index
    %c0_112 = arith.constant 0 : index
    %154 = vector.load %arg5[%c4_111, %c0_112] : memref<8x4xf32, #tpu.memory_space<vmem>>, vector<4x4xf32>
    %cst_113 = arith.constant dense<0.000000e+00> : vector<256x4xf32>
    %155 = tpu.matmul %151, %154, %cst_113 {dimension_numbers = #tpu.dot_dimension_numbers<[1], [0], [0], [1], [0, 0, 1, 1], [], []>} : vector<256x4xf32>, vector<4x4xf32>, vector<256x4xf32> -> vector<256x4xf32>
    %156 = arith.addf %153, %155 : vector<256x4xf32>
    %c2_114 = arith.constant 2 : index
    %c0_115 = arith.constant 0 : index
    %157 = vector.load %arg6[%c2_114, %c0_115] : memref<3x4xf32, #tpu.memory_space<vmem>>, vector<1x4xf32>
    %158 = vector.broadcast %157 : vector<1x4xf32> to vector<256x4xf32>
    %159 = arith.addf %156, %158 : vector<256x4xf32>
    %cst_116 = arith.constant 0.000000e+00 : f32
    %160 = vector.broadcast %cst_116 : f32 to vector<256x4xf32>
    %161 = arith.maximumf %159, %160 : vector<256x4xf32>
    %c0_117 = arith.constant 0 : index
    %c0_118 = arith.constant 0 : index
    %c0_119 = arith.constant 0 : index
    %c0_120 = arith.constant 0 : index
    %162 = vector.load %arg7[%c0_117, %c0_118, %c0_119, %c0_120] : memref<1x1x256x4xf32, #tpu.memory_space<vmem>>, vector<1x1x256x4xf32>
    %163 = vector.shape_cast %162 : vector<1x1x256x4xf32> to vector<256x4xf32>
    %164 = vector.shape_cast %161 : vector<256x4xf32> to vector<1x1x256x4xf32>
    tpu.vector_store %arg7[%c0_117, %c0_118, %c0_119, %c0_120], %164 {strides = array<i32>} : memref<1x1x256x4xf32, #tpu.memory_space<vmem>>, vector<1x1x256x4xf32>,
    return
  }
  func.func @transform_0(%arg0: i32, %arg1: i32) -> (i32, i32, i32, i32) {
    %c0_i32 = arith.constant 0 : i32
    %c0_i32_0 = arith.constant 0 : i32
    %c0_i32_1 = arith.constant 0 : i32
    %c0_i32_2 = arith.constant 0 : i32
    return %arg0, %c0_i32, %c0_i32_0, %c0_i32_1 : i32, i32, i32, i32
  }
  func.func @transform_1(%arg0: i32, %arg1: i32) -> (i32, i32) {
    %c0_i32 = arith.constant 0 : i32
    %c0_i32_0 = arith.constant 0 : i32
    %c0_i32_1 = arith.constant 0 : i32
    return %c0_i32, %c0_i32_0 : i32, i32
  }
  func.func @transform_2(%arg0: i32, %arg1: i32) -> (i32, i32) {
    %c0_i32 = arith.constant 0 : i32
    %c0_i32_0 = arith.constant 0 : i32
    %c0_i32_1 = arith.constant 0 : i32
    return %c0_i32, %c0_i32_0 : i32, i32
  }
  func.func @transform_3(%arg0: i32, %arg1: i32) -> (i32, i32) {
    %c0_i32 = arith.constant 0 : i32
    %c0_i32_0 = arith.constant 0 : i32
    %c0_i32_1 = arith.constant 0 : i32
    return %c0_i32, %c0_i32_0 : i32, i32
  }
  func.func @transform_4(%arg0: i32, %arg1: i32) -> (i32, i32) {
    %c0_i32 = arith.constant 0 : i32
    %c0_i32_0 = arith.constant 0 : i32
    %c0_i32_1 = arith.constant 0 : i32
    return %c0_i32, %c0_i32_0 : i32, i32
  }
  func.func @transform_5(%arg0: i32, %arg1: i32) -> (i32, i32, i32, i32) {
    %c0_i32 = arith.constant 0 : i32
    %c0_i32_0 = arith.constant 0 : i32
    %c0_i32_1 = arith.constant 0 : i32
    return %arg0, %arg1, %c0_i32, %c0_i32_0 : i32, i32, i32, i32
  }
}

</mosaic_0001>

<llo_original>
// kernel: tpu_custom_call.1
$region0: #{tpu_custom_call.1}
  #allocation0 [shape = 'u32[]', space=smem, size = 0x4, offset = 0x4, fixed_abs, tag = 'smem constant byte address 0x4 - core index']
  #allocation1 [shape = 'u32[72,128]{1,0:T(1,128)}', space=vmem, size = 0x9000, scoped, tag = 'internal scratch']
  %s0 = inlined_call_operand.vmem [shape: f32[2,26,26,4], index: 0, kind: input, shape index: {}]
  %s1 = inlined_call_operand.vmem [shape: f32[36,4], index: 1, kind: input, shape index: {}]
  %s2 = inlined_call_operand.vmem [shape: f32[36,4], index: 2, kind: input, shape index: {}]
  %s3 = inlined_call_operand.vmem [shape: f32[8,4], index: 3, kind: input, shape index: {}]
  %s4 = inlined_call_operand.vmem [shape: f32[3,4], index: 4, kind: input, shape index: {}]
  %s5 = inlined_call_operand.vmem [shape: f32[2,1,256,4], index: 5, kind: output, shape index: {}]
  %s6 = sld [smem:[#allocation0]]
  $region53: #{tpu_custom_call.1} parent=0
    _
  %s8 = ssub.s32 1, %s6
  %s9 = scalar_select 0, %s8, %s6
  loop: start=0, step=1, limit=4
  $region2: #{tpu_custom_call.1} parent=0 // loop_pre_header
    _
  $region3: #{tpu_custom_call.1} parent=0 // loop_header
    %s11 = sphi 0, %s15
    %p12 = scmp.ge.s32.totalorder %s11, 4
    %s18 = sphi 0, %s30
    %s19 = sphi 0, %s26
    %s20 = sphi 0, %s18
    %s21 = sphi 0, %s19
    %s22 = sphi 0, %s20
    %s23 = sphi 0, %s21
    %s33 = sphi 0, %s35
    %s36 = sphi 0, %s33
    %s37 = sphi 0, %s36
    %s53 = sphi 0, %s37
    %s57 = sphi 0, %s57
    %s59 = sphi 0, %s57
    %s60 = sphi 0, %s59
    %s74 = sphi 0, %s60
    %s78 = sphi 0, %s78
    %s80 = sphi 0, %s78
    %s81 = sphi 0, %s80
    %s95 = sphi 0, %s81
    %s99 = sphi 0, %s99
    %s101 = sphi 0, %s99
    %s102 = sphi 0, %s101
    %s116 = sphi 0, %s102
    %s120 = sphi 0, %s120
    %s122 = sphi 0, %s120
    %s123 = sphi 0, %s122
    %s137 = sphi 0, %s123
    %s145 = sphi 0, %s147
    %s148 = sphi 0, %s145
    %s149 = sphi 0, %s148
    %s165 = sphi 0, %s149
  $region4: #{tpu_custom_call.1} parent=0 // loop_header_branch
    %14 = sbr.rel (%p12) target = $region8
  $region5: #{tpu_custom_call.1} parent=0 // loop_body
    %s16 = ssub.s32 %s11, 1
    %s17 = ssub.s32 %s11, 2
    %s24 = sadd.s32 1, %s19
    %p25 = scmp.ge.s32.totalorder %s24, 1
    %s26 = scalar_select %p25, 0, %s24
    %s27 = sadd.s32 1, %s18
    %s28 = scalar_select %p25, %s27, %s18
    %p29 = scmp.ge.s32.totalorder %s28, 2
    %s30 = scalar_select %p29, 0, %s28
    %s31 = ssub.s32 %s18, %s30
    %p32 = scmp.eq.s32.totalorder %s31, 0
    %s34 = sadd.s32 %s33, 1
    %s35 = scalar_select %p32, %s33, %s34
    %p38 = pneg %p32
    %p39 = scmp.eq.s32.totalorder %s11, 1
    %p40 = por %p38, %p39
    %p41 = scmp.ne.s32.totalorder %s33, %s36
    %p42 = scmp.eq.s32.totalorder %s11, 0
    %p43 = por %p41, %p42
    %p44 = scmp.ne.s32.totalorder %s33, %s36
    %p45 = scmp.eq.s32.totalorder %s16, 1
    %p46 = por %p44, %p45
    %p47 = scmp.ne.s32.totalorder %s36, %s37
    %p48 = scmp.eq.s32.totalorder %s16, 0
    %p49 = por %p47, %p48
    %p50 = scmp.ne.s32.totalorder %s36, %s37
    %p51 = scmp.eq.s32.totalorder %s17, 1
    %p52 = por %p50, %p51
    %p54 = scmp.ne.s32.totalorder %s37, %s53
    %p55 = scmp.eq.s32.totalorder %s17, 0
    %p56 = por %p54, %p55
    %s58 = sadd.s32 %s57, 1
    %p61 = scmp.eq.s32.totalorder %s11, 1
    %p62 = scmp.ne.s32.totalorder %s57, %s59
    %p63 = scmp.eq.s32.totalorder %s11, 0
    %p64 = por %p62, %p63
    %p65 = scmp.ne.s32.totalorder %s57, %s59
    %p66 = scmp.eq.s32.totalorder %s16, 1
    %p67 = por %p65, %p66
    %p68 = scmp.ne.s32.totalorder %s59, %s60
    %p69 = scmp.eq.s32.totalorder %s16, 0
    %p70 = por %p68, %p69
    %p71 = scmp.ne.s32.totalorder %s59, %s60
    %p72 = scmp.eq.s32.totalorder %s17, 1
    %p73 = por %p71, %p72
    %p75 = scmp.ne.s32.totalorder %s60, %s74
    %p76 = scmp.eq.s32.totalorder %s17, 0
    %p77 = por %p75, %p76
    %s79 = sadd.s32 %s78, 1
    %p82 = scmp.eq.s32.totalorder %s11, 1
    %p83 = scmp.ne.s32.totalorder %s78, %s80
    %p84 = scmp.eq.s32.totalorder %s11, 0
    %p85 = por %p83, %p84
    %p86 = scmp.ne.s32.totalorder %s78, %s80
    %p87 = scmp.eq.s32.totalorder %s16, 1
    %p88 = por %p86, %p87
    %p89 = scmp.ne.s32.totalorder %s80, %s81
    %p90 = scmp.eq.s32.totalorder %s16, 0
    %p91 = por %p89, %p90
    %p92 = scmp.ne.s32.totalorder %s80, %s81
    %p93 = scmp.eq.s32.totalorder %s17, 1
    %p94 = por %p92, %p93
    %p96 = scmp.ne.s32.totalorder %s81, %s95
    %p97 = scmp.eq.s32.totalorder %s17, 0
    %p98 = por %p96, %p97
    %s100 = sadd.s32 %s99, 1
    %p103 = scmp.eq.s32.totalorder %s11, 1
    %p104 = scmp.ne.s32.totalorder %s99, %s101
    %p105 = scmp.eq.s32.totalorder %s11, 0
    %p106 = por %p104, %p105
    %p107 = scmp.ne.s32.totalorder %s99, %s101
    %p108 = scmp.eq.s32.totalorder %s16, 1
    %p109 = por %p107, %p108
    %p110 = scmp.ne.s32.totalorder %s101, %s102
    %p111 = scmp.eq.s32.totalorder %s16, 0
    %p112 = por %p110, %p111
    %p113 = scmp.ne.s32.totalorder %s101, %s102
    %p114 = scmp.eq.s32.totalorder %s17, 1
    %p115 = por %p113, %p114
    %p117 = scmp.ne.s32.totalorder %s102, %s116
    %p118 = scmp.eq.s32.totalorder %s17, 0
    %p119 = por %p117, %p118
    %s121 = sadd.s32 %s120, 1
    %p124 = scmp.eq.s32.totalorder %s11, 1
    %p125 = scmp.ne.s32.totalorder %s120, %s122
    %p126 = scmp.eq.s32.totalorder %s11, 0
    %p127 = por %p125, %p126
    %p128 = scmp.ne.s32.totalorder %s120, %s122
    %p129 = scmp.eq.s32.totalorder %s16, 1
    %p130 = por %p128, %p129
    %p131 = scmp.ne.s32.totalorder %s122, %s123
    %p132 = scmp.eq.s32.totalorder %s16, 0
    %p133 = por %p131, %p132
    %p134 = scmp.ne.s32.totalorder %s122, %s123
    %p135 = scmp.eq.s32.totalorder %s17, 1
    %p136 = por %p134, %p135
    %p138 = scmp.ne.s32.totalorder %s123, %s137
    %p139 = scmp.eq.s32.totalorder %s17, 0
    %p140 = por %p138, %p139
    %s141 = ssub.s32 %s18, %s30
    %s142 = ssub.s32 %s19, %s26
    %s143 = sor.u32 %s141, %s142
    %p144 = scmp.eq.s32.totalorder %s143, 0
    %s146 = sadd.s32 %s145, 1
    %s147 = scalar_select %p144, %s145, %s146
    %p150 = pneg %p144
    %p151 = scmp.eq.s32.totalorder %s11, 1
    %p152 = por %p150, %p151
    %p153 = scmp.ne.s32.totalorder %s145, %s148
    %p154 = scmp.eq.s32.totalorder %s11, 0
    %p155 = por %p153, %p154
    %p156 = scmp.ne.s32.totalorder %s145, %s148
    %p157 = scmp.eq.s32.totalorder %s16, 1
    %p158 = por %p156, %p157
    %p159 = scmp.ne.s32.totalorder %s148, %s149
    %p160 = scmp.eq.s32.totalorder %s16, 0
    %p161 = por %p159, %p160
    %p162 = scmp.ne.s32.totalorder %s148, %s149
    %p163 = scmp.eq.s32.totalorder %s17, 1
    %p164 = por %p162, %p163
    %p166 = scmp.ne.s32.totalorder %s149, %s165
    %p167 = scmp.eq.s32.totalorder %s17, 0
    %p168 = por %p166, %p167
    %p169 = scmp.le.s32.totalorder 1, %s11
    %p170 = scmp.lt.s32.totalorder %s11, 3
    %p171 = pnand %p169, %p170
    %p172 = pneg %p171
    // Predicated region
    $region9: #{tpu_custom_call.1} parent=5 // pred_check
      _
    $region10: #{tpu_custom_call.1} parent=5 // pred_check_branch
      %174 = sbr.rel (%p171) target = $region12
    $region11: #{tpu_custom_call.1} parent=5 // pred_region
      %s175 = ssub.s32 %s11, 1
      // Predicated region
      $region13: #{tpu_custom_call.1} parent=11 // pred_check
        %p176 = pneg %p70
      $region14: #{tpu_custom_call.1} parent=11 // pred_check_branch
        %178 = sbr.rel (%p176) target = $region16
      $region15: #{tpu_custom_call.1} parent=11 // pred_region
        _
      $region16: #{tpu_custom_call.1} parent=11 // pred_fallthru
        _
      // Predicated region
      $region17: #{tpu_custom_call.1} parent=11 // pred_check
        %p179 = pneg %p91
      $region18: #{tpu_custom_call.1} parent=11 // pred_check_branch
        %181 = sbr.rel (%p179) target = $region20
      $region19: #{tpu_custom_call.1} parent=11 // pred_region
        _
      $region20: #{tpu_custom_call.1} parent=11 // pred_fallthru
        _
      // Predicated region
      $region21: #{tpu_custom_call.1} parent=11 // pred_check
        %p182 = pneg %p112
      $region22: #{tpu_custom_call.1} parent=11 // pred_check_branch
        %184 = sbr.rel (%p182) target = $region24
      $region23: #{tpu_custom_call.1} parent=11 // pred_region
        _
      $region24: #{tpu_custom_call.1} parent=11 // pred_fallthru
        _
      // Predicated region
      $region25: #{tpu_custom_call.1} parent=11 // pred_check
        %p185 = pneg %p133
      $region26: #{tpu_custom_call.1} parent=11 // pred_check_branch
        %187 = sbr.rel (%p185) target = $region28
      $region27: #{tpu_custom_call.1} parent=11 // pred_region
        _
      $region28: #{tpu_custom_call.1} parent=11 // pred_fallthru
        _
    $region12: #{tpu_custom_call.1} parent=5 // pred_fallthru
      _
    %p188 = scmp.lt.s32.totalorder %s11, 2
    // Predicated region
    $region29: #{tpu_custom_call.1} parent=5 // pred_check
      %p189 = pneg %p188
    $region30: #{tpu_custom_call.1} parent=5 // pred_check_branch
      %191 = sbr.rel (%p189) target = $region32
    $region31: #{tpu_custom_call.1} parent=5 // pred_region
      // Predicated region
      $region33: #{tpu_custom_call.1} parent=31 // pred_check
        %p192 = pneg %p43
      $region34: #{tpu_custom_call.1} parent=31 // pred_check_branch
        %194 = sbr.rel (%p192) target = $region36
      $region35: #{tpu_custom_call.1} parent=31 // pred_region
        %p195 = scmp.lt.s32.totalorder %s18, 1
        %s196 = scalar_select %p195, %s18, 1
        %s197 = smul.addr %s196, 104
        %s198 = smul.addr %s197, 8
        %s199 = scalar_lea.vmem %s0, %s198
      $region36: #{tpu_custom_call.1} parent=31 // pred_fallthru
        _
    $region32: #{tpu_custom_call.1} parent=5 // pred_fallthru
      _
    %p200 = scmp.le.s32.totalorder 1, %s11
    %p201 = scmp.lt.s32.totalorder %s11, 3
    %p202 = pnand %p200, %p201
    %p203 = pneg %p202
    // Predicated region
    $region37: #{tpu_custom_call.1} parent=5 // pred_check
      _
    $region38: #{tpu_custom_call.1} parent=5 // pred_check_branch
      %205 = sbr.rel (%p202) target = $region40
    $region39: #{tpu_custom_call.1} parent=5 // pred_region
      %s206 = ssub.s32 %s11, 1
      %p207 = scmp.lt.s32.totalorder %s20, 1
      %s208 = scalar_select %p207, %s20, 1
      %s209 = smul.addr %s208, 104
      %s210 = smul.addr %s209, 8
      %s211 = scalar_lea.vmem %s0, %s210
      %p212 = pneg %p49
      %p213 = pneg %p46
      %p214 = pneg %p70
      %p215 = pneg %p67
      %p216 = pneg %p91
      %p217 = pneg %p88
      %p218 = pneg %p112
      %p219 = pneg %p109
      %p220 = pneg %p133
      %p221 = pneg %p130
      %p222 = pneg %p161
      %p223 = pneg %p158
      %p224 = scmp.lt.s32.totalorder %s20, 1
      %s225 = scalar_select %p224, %s20, 1
      %p226 = scmp.lt.s32.totalorder %s21, 0
      %s227 = scalar_select %p226, %s21, 0
      %s228 = smul.addr %s227, 32
      %s229 = smul.addr %s225, 32
      %s230 = sadd.s32 %s228, %s229
      %s231 = smul.addr %s230, 8
      %s232 = scalar_lea.vmem %s5, %s231
      %p233 = scmp.lt.s32.totalorder %s20, 1
      %s234 = scalar_select %p233, %s20, 1
      %s235 = smul.addr %s234, 104
      %s236 = smul.addr %s235, 8
      %s237 = scalar_lea.vmem %s0, %s236
      %p238 = scmp.lt.s32.totalorder %s20, 1
      %s239 = scalar_select %p238, %s20, 1
      %p240 = scmp.lt.s32.totalorder %s21, 0
      %s241 = scalar_select %p240, %s21, 0
      %s242 = smul.addr %s241, 32
      %s243 = smul.addr %s239, 32
      %s244 = sadd.s32 %s242, %s243
      %s245 = smul.addr %s244, 8
      %s246 = scalar_lea.vmem %s5, %s245
      %s247 = smul.u32 %s21, 16
      %s248 = sadd.s32 %s247, 2
      %s249 = smul.u32 %s248, 32
      %s250 = scalar_lea.vmem %s237, %s249
      %v251 = vld [vmem:[%s250 + $0x2] sm:$0xff]
      %v252 = vld [vmem:[%s250 + $0xa] sm:$0xff]
      %v253 = vld [vmem:[%s250 + $0x22] sm:$0xff]
      %v254 = vld [vmem:[%s250 + $0x2a] sm:$0xff]
      %v255 = vld [vmem:[%s250 + $0x42] sm:$0xff]
      %v256 = vld [vmem:[%s250 + $0x4a] sm:$0xff]
      %v257 = vld [vmem:[%s250 + $0x62] sm:$0xff]
      %v258 = vld [vmem:[%s250 + $0x6a] sm:$0xff]
      %v259 = vld [vmem:[%s250 + $0x82] sm:$0xff]
      %v260 = vld [vmem:[%s250 + $0x8a] sm:$0xff]
      %v261 = vld [vmem:[%s250 + $0xa2] sm:$0xff]
      %v262 = vld [vmem:[%s250 + $0xaa] sm:$0xff]
      %v263 = vld [vmem:[%s250 + $0xc2] sm:$0xff]
      %v264 = vld [vmem:[%s250 + $0xca] sm:$0xff]
      %v265 = vld [vmem:[%s250 + $0xe2] sm:$0xff]
      %v266 = vld [vmem:[%s250 + $0xea] sm:$0xff]
      %v267 = vld [vmem:[%s250 + $0x102] sm:$0xff]
      %v268 = vld [vmem:[%s250 + $0x10a] sm:$0xff]
      %v269 = vld [vmem:[%s250 + $0x122] sm:$0xff]
      %v270 = vld [vmem:[%s250 + $0x12a] sm:$0xff]
      %v271 = vld [vmem:[%s250 + $0x142] sm:$0xff]
      %v272 = vld [vmem:[%s250 + $0x14a] sm:$0xff]
      %v273 = vld [vmem:[%s250 + $0x162] sm:$0xff]
      %v274 = vld [vmem:[%s250 + $0x16a] sm:$0xff]
      %v275 = vld [vmem:[%s250 + $0x182] sm:$0xff]
      %v276 = vld [vmem:[%s250 + $0x18a] sm:$0xff]
      %v277 = vld [vmem:[%s250 + $0x1a2] sm:$0xff]
      %v278 = vld [vmem:[%s250 + $0x1aa] sm:$0xff]
      %v279 = vld [vmem:[%s250 + $0x1c2] sm:$0xff]
      %v280 = vld [vmem:[%s250 + $0x1ca] sm:$0xff]
      %v281 = vld [vmem:[%s250 + $0x1e2] sm:$0xff]
      %v282 = vld [vmem:[%s250 + $0x1ea] sm:$0xff]
      %v283 = vld [vmem:[%s1] sm:$0xf]
      %v284 = vld [vmem:[%s250 + $0x5] sm:$0xff]
      %v285 = vld [vmem:[%s250 + $0xd] sm:$0xff]
      %v286 = vld [vmem:[%s250 + $0x25] sm:$0xff]
      %v287 = vld [vmem:[%s250 + $0x2d] sm:$0xff]
      %v288 = vld [vmem:[%s250 + $0x45] sm:$0xff]
      %v289 = vld [vmem:[%s250 + $0x4d] sm:$0xff]
      %v290 = vld [vmem:[%s250 + $0x65] sm:$0xff]
      %v291 = vld [vmem:[%s250 + $0x6d] sm:$0xff]
      %v292 = vld [vmem:[%s250 + $0x85] sm:$0xff]
      %v293 = vld [vmem:[%s250 + $0x8d] sm:$0xff]
      %v294 = vld [vmem:[%s250 + $0xa5] sm:$0xff]
      %v295 = vld [vmem:[%s250 + $0xad] sm:$0xff]
      %v296 = vld [vmem:[%s250 + $0xc5] sm:$0xff]
      %v297 = vld [vmem:[%s250 + $0xcd] sm:$0xff]
      %v298 = vld [vmem:[%s250 + $0xe5] sm:$0xff]
      %v299 = vld [vmem:[%s250 + $0xed] sm:$0xff]
      %v300 = vld [vmem:[%s250 + $0x105] sm:$0xff]
      %v301 = vld [vmem:[%s250 + $0x10d] sm:$0xff]
      %v302 = vld [vmem:[%s250 + $0x125] sm:$0xff]
      %v303 = vld [vmem:[%s250 + $0x12d] sm:$0xff]
      %v304 = vld [vmem:[%s250 + $0x145] sm:$0xff]
      %v305 = vld [vmem:[%s250 + $0x14d] sm:$0xff]
      %v306 = vld [vmem:[%s250 + $0x165] sm:$0xff]
      %v307 = vld [vmem:[%s250 + $0x16d] sm:$0xff]
      %v308 = vld [vmem:[%s250 + $0x185] sm:$0xff]
      %v309 = vld [vmem:[%s250 + $0x18d] sm:$0xff]
      %v310 = vld [vmem:[%s250 + $0x1a5] sm:$0xff]
      %v311 = vld [vmem:[%s250 + $0x1ad] sm:$0xff]
      %v312 = vld [vmem:[%s250 + $0x1c5] sm:$0xff]
      %v313 = vld [vmem:[%s250 + $0x1cd] sm:$0xff]
      %v314 = vld [vmem:[%s250 + $0x1e5] sm:$0xff]
      %v315 = vld [vmem:[%s250 + $0x1ed] sm:$0xff]
      %v316 = vld [vmem:[%s1 + $0x4] sm:$0xf]
      %vm317 = vcmask 31744
      %v319 = vsel %vm317, %v284, 0
      %v322 = vsel %vm317, %v285, 0
      %v325 = vsel %vm317, %v286, 0
      %v328 = vsel %vm317, %v287, 0
      %v331 = vsel %vm317, %v288, 0
      %v334 = vsel %vm317, %v289, 0
      %v337 = vsel %vm317, %v290, 0
      %v340 = vsel %vm317, %v291, 0
      %v343 = vsel %vm317, %v292, 0
      %v346 = vsel %vm317, %v293, 0
      %v349 = vsel %vm317, %v294, 0
      %v352 = vsel %vm317, %v295, 0
      %v355 = vsel %vm317, %v296, 0
      %v358 = vsel %vm317, %v297, 0
      %v361 = vsel %vm317, %v298, 0
      %v364 = vsel %vm317, %v299, 0
      %v367 = vsel %vm317, %v300, 0
      %v370 = vsel %vm317, %v301, 0
      %v373 = vsel %vm317, %v302, 0
      %v376 = vsel %vm317, %v303, 0
      %v379 = vsel %vm317, %v304, 0
      %v382 = vsel %vm317, %v305, 0
      %v385 = vsel %vm317, %v306, 0
      %v388 = vsel %vm317, %v307, 0
      %v391 = vsel %vm317, %v308, 0
      %v394 = vsel %vm317, %v309, 0
      %v397 = vsel %vm317, %v310, 0
      %v400 = vsel %vm317, %v311, 0
      %v403 = vsel %vm317, %v312, 0
      %v406 = vsel %vm317, %v313, 0
      %v409 = vsel %vm317, %v314, 0
      %v412 = vsel %vm317, %v315, 0
      %vm414 = vcmask 1043456
      %v416 = vsel %vm414, %v316, 0
      %418 = vmatpush.msra.mxu0 0.0
      %419 = vmatpush.msra.mxu0 0.0
      %420 = vmatpush.msra.mxu0 0.0
      %421 = vmatpush.msra.mxu0 0.0
      %422 = vmatpush.msra.mxu0 0.0
      %423 = vmatpush.msra.mxu0 0.0
      %424 = vmatpush.msra.mxu0 0.0
      %425 = vmatpush.msra.mxu0 0.0
      %426 = vmatpush.msra.mxu0 0.0
      %427 = vmatpush.msra.mxu0 0.0
      %428 = vmatpush.msra.mxu0 0.0
      %429 = vmatpush.msra.mxu0 0.0
      %430 = vmatpush.msra.mxu0 0.0
      %431 = vmatpush.msra.mxu0 0.0
      %432 = vmatpush.msra.mxu0 0.0
      %433 = vmatpush.msra.mxu0 %v416
      %434 = vmatmul.f32.gmra.mxu0 %v319
      %v435 = vpop.f32.mrf.mxu0
      %v436 = vadd.f32 0.0, %v435
      %437 = vmatmul.f32.gmra.mxu0 %v322
      %v438 = vpop.f32.mrf.mxu0
      %v439 = vadd.f32 0.0, %v438
      %440 = vmatmul.f32.gmra.mxu0 %v325
      %v441 = vpop.f32.mrf.mxu0
      %v442 = vadd.f32 0.0, %v441
      %443 = vmatmul.f32.gmra.mxu0 %v328
      %v444 = vpop.f32.mrf.mxu0
      %v445 = vadd.f32 0.0, %v444
      %446 = vmatmul.f32.gmra.mxu0 %v331
      %v447 = vpop.f32.mrf.mxu0
      %v448 = vadd.f32 0.0, %v447
      %449 = vmatmul.f32.gmra.mxu0 %v334
      %v450 = vpop.f32.mrf.mxu0
      %v451 = vadd.f32 0.0, %v450
      %452 = vmatmul.f32.gmra.mxu0 %v337
      %v453 = vpop.f32.mrf.mxu0
      %v454 = vadd.f32 0.0, %v453
      %455 = vmatmul.f32.gmra.mxu0 %v340
      %v456 = vpop.f32.mrf.mxu0
      %v457 = vadd.f32 0.0, %v456
      %458 = vmatmul.f32.gmra.mxu0 %v343
      %v459 = vpop.f32.mrf.mxu0
      %v460 = vadd.f32 0.0, %v459
      %461 = vmatmul.f32.gmra.mxu0 %v346
      %v462 = vpop.f32.mrf.mxu0
      %v463 = vadd.f32 0.0, %v462
      %464 = vmatmul.f32.gmra.mxu0 %v349
      %v465 = vpop.f32.mrf.mxu0
      %v466 = vadd.f32 0.0, %v465
      %467 = vmatmul.f32.gmra.mxu0 %v352
      %v468 = vpop.f32.mrf.mxu0
      %v469 = vadd.f32 0.0, %v468
      %470 = vmatmul.f32.gmra.mxu0 %v355
      %v471 = vpop.f32.mrf.mxu0
      %v472 = vadd.f32 0.0, %v471
      %473 = vmatmul.f32.gmra.mxu0 %v358
      %v474 = vpop.f32.mrf.mxu0
      %v475 = vadd.f32 0.0, %v474
      %476 = vmatmul.f32.gmra.mxu0 %v361
      %v477 = vpop.f32.mrf.mxu0
      %v478 = vadd.f32 0.0, %v477
      %479 = vmatmul.f32.gmra.mxu0 %v364
      %v480 = vpop.f32.mrf.mxu0
      %v481 = vadd.f32 0.0, %v480
      %482 = vmatmul.f32.gmra.mxu0 %v367
      %v483 = vpop.f32.mrf.mxu0
      %v484 = vadd.f32 0.0, %v483
      %485 = vmatmul.f32.gmra.mxu0 %v370
      %v486 = vpop.f32.mrf.mxu0
      %v487 = vadd.f32 0.0, %v486
      %488 = vmatmul.f32.gmra.mxu0 %v373
      %v489 = vpop.f32.mrf.mxu0
      %v490 = vadd.f32 0.0, %v489
      %491 = vmatmul.f32.gmra.mxu0 %v376
      %v492 = vpop.f32.mrf.mxu0
      %v493 = vadd.f32 0.0, %v492
      %494 = vmatmul.f32.gmra.mxu0 %v379
      %v495 = vpop.f32.mrf.mxu0
      %v496 = vadd.f32 0.0, %v495
      %497 = vmatmul.f32.gmra.mxu0 %v382
      %v498 = vpop.f32.mrf.mxu0
      %v499 = vadd.f32 0.0, %v498
      %500 = vmatmul.f32.gmra.mxu0 %v385
      %v501 = vpop.f32.mrf.mxu0
      %v502 = vadd.f32 0.0, %v501
      %503 = vmatmul.f32.gmra.mxu0 %v388
      %v504 = vpop.f32.mrf.mxu0
      %v505 = vadd.f32 0.0, %v504
      %506 = vmatmul.f32.gmra.mxu0 %v391
      %v507 = vpop.f32.mrf.mxu0
      %v508 = vadd.f32 0.0, %v507
      %509 = vmatmul.f32.gmra.mxu0 %v394
      %v510 = vpop.f32.mrf.mxu0
      %v511 = vadd.f32 0.0, %v510
      %512 = vmatmul.f32.gmra.mxu0 %v397
      %v513 = vpop.f32.mrf.mxu0
      %v514 = vadd.f32 0.0, %v513
      %515 = vmatmul.f32.gmra.mxu0 %v400
      %v516 = vpop.f32.mrf.mxu0
      %v517 = vadd.f32 0.0, %v516
      %518 = vmatmul.f32.gmra.mxu0 %v403
      %v519 = vpop.f32.mrf.mxu0
      %v520 = vadd.f32 0.0, %v519
      %521 = vmatmul.f32.gmra.mxu0 %v406
      %v522 = vpop.f32.mrf.mxu0
      %v523 = vadd.f32 0.0, %v522
      %524 = vmatmul.f32.gmra.mxu0 %v409
      %v525 = vpop.f32.mrf.mxu0
      %v526 = vadd.f32 0.0, %v525
      %527 = vmatmul.f32.gmra.mxu0 %v412
      %v528 = vpop.f32.mrf.mxu0
      %v529 = vadd.f32 0.0, %v528
      %530 = vdwg.mxu0
      %v532 = vsel %vm317, %v251, 0
      %v535 = vsel %vm317, %v252, 0
      %v538 = vsel %vm317, %v253, 0
      %v541 = vsel %vm317, %v254, 0
      %v544 = vsel %vm317, %v255, 0
      %v547 = vsel %vm317, %v256, 0
      %v550 = vsel %vm317, %v257, 0
      %v553 = vsel %vm317, %v258, 0
      %v556 = vsel %vm317, %v259, 0
      %v559 = vsel %vm317, %v260, 0
      %v562 = vsel %vm317, %v261, 0
      %v565 = vsel %vm317, %v262, 0
      %v568 = vsel %vm317, %v263, 0
      %v571 = vsel %vm317, %v264, 0
      %v574 = vsel %vm317, %v265, 0
      %v577 = vsel %vm317, %v266, 0
      %v580 = vsel %vm317, %v267, 0
      %v583 = vsel %vm317, %v268, 0
      %v586 = vsel %vm317, %v269, 0
      %v589 = vsel %vm317, %v270, 0
      %v592 = vsel %vm317, %v271, 0
      %v595 = vsel %vm317, %v272, 0
      %v598 = vsel %vm317, %v273, 0
      %v601 = vsel %vm317, %v274, 0
      %v604 = vsel %vm317, %v275, 0
      %v607 = vsel %vm317, %v276, 0
      %v610 = vsel %vm317, %v277, 0
      %v613 = vsel %vm317, %v278, 0
      %v616 = vsel %vm317, %v279, 0
      %v619 = vsel %vm317, %v280, 0
      %v622 = vsel %vm317, %v281, 0
      %v625 = vsel %vm317, %v282, 0
      %v628 = vsel %vm414, %v283, 0
      %630 = vmatpush.msra.mxu0 0.0
      %631 = vmatpush.msra.mxu0 0.0
      %632 = vmatpush.msra.mxu0 0.0
      %633 = vmatpush.msra.mxu0 0.0
      %634 = vmatpush.msra.mxu0 0.0
      %635 = vmatpush.msra.mxu0 0.0
      %636 = vmatpush.msra.mxu0 0.0
      %637 = vmatpush.msra.mxu0 0.0
      %638 = vmatpush.msra.mxu0 0.0
      %639 = vmatpush.msra.mxu0 0.0
      %640 = vmatpush.msra.mxu0 0.0
      %641 = vmatpush.msra.mxu0 0.0
      %642 = vmatpush.msra.mxu0 0.0
      %643 = vmatpush.msra.mxu0 0.0
      %644 = vmatpush.msra.mxu0 0.0
      %645 = vmatpush.msra.mxu0 %v628
      %646 = vmatmul.f32.gmra.mxu0 %v532
      %v647 = vpop.f32.mrf.mxu0
      %v648 = vadd.f32 %v436, %v647
      %649 = vmatmul.f32.gmra.mxu0 %v535
      %v650 = vpop.f32.mrf.mxu0
      %v651 = vadd.f32 %v439, %v650
      %652 = vmatmul.f32.gmra.mxu0 %v538
      %v653 = vpop.f32.mrf.mxu0
      %v654 = vadd.f32 %v442, %v653
      %655 = vmatmul.f32.gmra.mxu0 %v541
      %v656 = vpop.f32.mrf.mxu0
      %v657 = vadd.f32 %v445, %v656
      %658 = vmatmul.f32.gmra.mxu0 %v544
      %v659 = vpop.f32.mrf.mxu0
      %v660 = vadd.f32 %v448, %v659
      %661 = vmatmul.f32.gmra.mxu0 %v547
      %v662 = vpop.f32.mrf.mxu0
      %v663 = vadd.f32 %v451, %v662
      %664 = vmatmul.f32.gmra.mxu0 %v550
      %v665 = vpop.f32.mrf.mxu0
      %v666 = vadd.f32 %v454, %v665
      %667 = vmatmul.f32.gmra.mxu0 %v553
      %v668 = vpop.f32.mrf.mxu0
      %v669 = vadd.f32 %v457, %v668
      %670 = vmatmul.f32.gmra.mxu0 %v556
      %v671 = vpop.f32.mrf.mxu0
      %v672 = vadd.f32 %v460, %v671
      %673 = vmatmul.f32.gmra.mxu0 %v559
      %v674 = vpop.f32.mrf.mxu0
      %v675 = vadd.f32 %v463, %v674
      %676 = vmatmul.f32.gmra.mxu0 %v562
      %v677 = vpop.f32.mrf.mxu0
      %v678 = vadd.f32 %v466, %v677
      %679 = vmatmul.f32.gmra.mxu0 %v565
      %v680 = vpop.f32.mrf.mxu0
      %v681 = vadd.f32 %v469, %v680
      %682 = vmatmul.f32.gmra.mxu0 %v568
      %v683 = vpop.f32.mrf.mxu0
      %v684 = vadd.f32 %v472, %v683
      %685 = vmatmul.f32.gmra.mxu0 %v571
      %v686 = vpop.f32.mrf.mxu0
      %v687 = vadd.f32 %v475, %v686
      %688 = vmatmul.f32.gmra.mxu0 %v574
      %v689 = vpop.f32.mrf.mxu0
      %v690 = vadd.f32 %v478, %v689
      %691 = vmatmul.f32.gmra.mxu0 %v577
      %v692 = vpop.f32.mrf.mxu0
      %v693 = vadd.f32 %v481, %v692
      %694 = vmatmul.f32.gmra.mxu0 %v580
      %v695 = vpop.f32.mrf.mxu0
      %v696 = vadd.f32 %v484, %v695
      %697 = vmatmul.f32.gmra.mxu0 %v583
      %v698 = vpop.f32.mrf.mxu0
      %v699 = vadd.f32 %v487, %v698
      %700 = vmatmul.f32.gmra.mxu0 %v586
      %v701 = vpop.f32.mrf.mxu0
      %v702 = vadd.f32 %v490, %v701
      %703 = vmatmul.f32.gmra.mxu0 %v589
      %v704 = vpop.f32.mrf.mxu0
      %v705 = vadd.f32 %v493, %v704
      %706 = vmatmul.f32.gmra.mxu0 %v592
      %v707 = vpop.f32.mrf.mxu0
      %v708 = vadd.f32 %v496, %v707
      %709 = vmatmul.f32.gmra.mxu0 %v595
      %v710 = vpop.f32.mrf.mxu0
      %v711 = vadd.f32 %v499, %v710
      %712 = vmatmul.f32.gmra.mxu0 %v598
      %v713 = vpop.f32.mrf.mxu0
      %v714 = vadd.f32 %v502, %v713
      %715 = vmatmul.f32.gmra.mxu0 %v601
      %v716 = vpop.f32.mrf.mxu0
      %v717 = vadd.f32 %v505, %v716
      %718 = vmatmul.f32.gmra.mxu0 %v604
      %v719 = vpop.f32.mrf.mxu0
      %v720 = vadd.f32 %v508, %v719
      %721 = vmatmul.f32.gmra.mxu0 %v607
      %v722 = vpop.f32.mrf.mxu0
      %v723 = vadd.f32 %v511, %v722
      %724 = vmatmul.f32.gmra.mxu0 %v610
      %v725 = vpop.f32.mrf.mxu0
      %v726 = vadd.f32 %v514, %v725
      %727 = vmatmul.f32.gmra.mxu0 %v613
      %v728 = vpop.f32.mrf.mxu0
      %v729 = vadd.f32 %v517, %v728
      %730 = vmatmul.f32.gmra.mxu0 %v616
      %v731 = vpop.f32.mrf.mxu0
      %v732 = vadd.f32 %v520, %v731
      %733 = vmatmul.f32.gmra.mxu0 %v619
      %v734 = vpop.f32.mrf.mxu0
      %v735 = vadd.f32 %v523, %v734
      %736 = vmatmul.f32.gmra.mxu0 %v622
      %v737 = vpop.f32.mrf.mxu0
      %v738 = vadd.f32 %v526, %v737
      %739 = vmatmul.f32.gmra.mxu0 %v625
      %v740 = vpop.f32.mrf.mxu0
      %v741 = vadd.f32 %v529, %v740
      %742 = vdwg.mxu0
      %v743 = vld [vmem:[%s250 + $0x8] sm:$0xff]
      %v744 = vld [vmem:[%s250 + $0x10] sm:$0xff]
      %v745 = vld [vmem:[%s250 + $0x28] sm:$0xff]
      %v746 = vld [vmem:[%s250 + $0x30] sm:$0xff]
      %v747 = vld [vmem:[%s250 + $0x48] sm:$0xff]
      %v748 = vld [vmem:[%s250 + $0x50] sm:$0xff]
      %v749 = vld [vmem:[%s250 + $0x68] sm:$0xff]
      %v750 = vld [vmem:[%s250 + $0x70] sm:$0xff]
      %v751 = vld [vmem:[%s250 + $0x88] sm:$0xff]
      %v752 = vld [vmem:[%s250 + $0x90] sm:$0xff]
      %v753 = vld [vmem:[%s250 + $0xa8] sm:$0xff]
      %v754 = vld [vmem:[%s250 + $0xb0] sm:$0xff]
      %v755 = vld [vmem:[%s250 + $0xc8] sm:$0xff]
      %v756 = vld [vmem:[%s250 + $0xd0] sm:$0xff]
      %v757 = vld [vmem:[%s250 + $0xe8] sm:$0xff]
      %v758 = vld [vmem:[%s250 + $0xf0] sm:$0xff]
      %v759 = vld [vmem:[%s250 + $0x108] sm:$0xff]
      %v760 = vld [vmem:[%s250 + $0x110] sm:$0xff]
      %v761 = vld [vmem:[%s250 + $0x128] sm:$0xff]
      %v762 = vld [vmem:[%s250 + $0x130] sm:$0xff]
      %v763 = vld [vmem:[%s250 + $0x148] sm:$0xff]
      %v764 = vld [vmem:[%s250 + $0x150] sm:$0xff]
      %v765 = vld [vmem:[%s250 + $0x168] sm:$0xff]
      %v766 = vld [vmem:[%s250 + $0x170] sm:$0xff]
      %v767 = vld [vmem:[%s250 + $0x188] sm:$0xff]
      %v768 = vld [vmem:[%s250 + $0x190] sm:$0xff]
      %v769 = vld [vmem:[%s250 + $0x1a8] sm:$0xff]
      %v770 = vld [vmem:[%s250 + $0x1b0] sm:$0xff]
      %v771 = vld [vmem:[%s250 + $0x1c8] sm:$0xff]
      %v772 = vld [vmem:[%s250 + $0x1d0] sm:$0xff]
      %v773 = vld [vmem:[%s250 + $0x1e8] sm:$0xff]
      %v774 = vld [vmem:[%s250 + $0x1f0] sm:$0xff]
      %v775 = vld [vmem:[%s1 + $0x8] sm:$0xf]
      %v777 = vsel %vm317, %v743, 0
      %v780 = vsel %vm317, %v744, 0
      %v783 = vsel %vm317, %v745, 0
      %v786 = vsel %vm317, %v746, 0
      %v789 = vsel %vm317, %v747, 0
      %v792 = vsel %vm317, %v748, 0
      %v795 = vsel %vm317, %v749, 0
      %v798 = vsel %vm317, %v750, 0
      %v801 = vsel %vm317, %v751, 0
      %v804 = vsel %vm317, %v752, 0
      %v807 = vsel %vm317, %v753, 0
      %v810 = vsel %vm317, %v754, 0
      %v813 = vsel %vm317, %v755, 0
      %v816 = vsel %vm317, %v756, 0
      %v819 = vsel %vm317, %v757, 0
      %v822 = vsel %vm317, %v758, 0
      %v825 = vsel %vm317, %v759, 0
      %v828 = vsel %vm317, %v760, 0
      %v831 = vsel %vm317, %v761, 0
      %v834 = vsel %vm317, %v762, 0
      %v837 = vsel %vm317, %v763, 0
      %v840 = vsel %vm317, %v764, 0
      %v843 = vsel %vm317, %v765, 0
      %v846 = vsel %vm317, %v766, 0
      %v849 = vsel %vm317, %v767, 0
      %v852 = vsel %vm317, %v768, 0
      %v855 = vsel %vm317, %v769, 0
      %v858 = vsel %vm317, %v770, 0
      %v861 = vsel %vm317, %v771, 0
      %v864 = vsel %vm317, %v772, 0
      %v867 = vsel %vm317, %v773, 0
      %v870 = vsel %vm317, %v774, 0
      %v873 = vsel %vm414, %v775, 0
      %875 = vmatpush.msra.mxu0 0.0
      %876 = vmatpush.msra.mxu0 0.0
      %877 = vmatpush.msra.mxu0 0.0
      %878 = vmatpush.msra.mxu0 0.0
      %879 = vmatpush.msra.mxu0 0.0
      %880 = vmatpush.msra.mxu0 0.0
      %881 = vmatpush.msra.mxu0 0.0
      %882 = vmatpush.msra.mxu0 0.0
      %883 = vmatpush.msra.mxu0 0.0
      %884 = vmatpush.msra.mxu0 0.0
      %885 = vmatpush.msra.mxu0 0.0
      %886 = vmatpush.msra.mxu0 0.0
      %887 = vmatpush.msra.mxu0 0.0
      %888 = vmatpush.msra.mxu0 0.0
      %889 = vmatpush.msra.mxu0 0.0
      %890 = vmatpush.msra.mxu0 %v873
      %891 = vmatmul.f32.gmra.mxu0 %v777
      %v892 = vpop.f32.mrf.mxu0
      %v893 = vadd.f32 0.0, %v892
      %894 = vmatmul.f32.gmra.mxu0 %v780
      %v895 = vpop.f32.mrf.mxu0
      %v896 = vadd.f32 0.0, %v895
      %897 = vmatmul.f32.gmra.mxu0 %v783
      %v898 = vpop.f32.mrf.mxu0
      %v899 = vadd.f32 0.0, %v898
      %900 = vmatmul.f32.gmra.mxu0 %v786
      %v901 = vpop.f32.mrf.mxu0
      %v902 = vadd.f32 0.0, %v901
      %903 = vmatmul.f32.gmra.mxu0 %v789
      %v904 = vpop.f32.mrf.mxu0
      %v905 = vadd.f32 0.0, %v904
      %906 = vmatmul.f32.gmra.mxu0 %v792
      %v907 = vpop.f32.mrf.mxu0
      %v908 = vadd.f32 0.0, %v907
      %909 = vmatmul.f32.gmra.mxu0 %v795
      %v910 = vpop.f32.mrf.mxu0
      %v911 = vadd.f32 0.0, %v910
      %912 = vmatmul.f32.gmra.mxu0 %v798
      %v913 = vpop.f32.mrf.mxu0
      %v914 = vadd.f32 0.0, %v913
      %915 = vmatmul.f32.gmra.mxu0 %v801
      %v916 = vpop.f32.mrf.mxu0
      %v917 = vadd.f32 0.0, %v916
      %918 = vmatmul.f32.gmra.mxu0 %v804
      %v919 = vpop.f32.mrf.mxu0
      %v920 = vadd.f32 0.0, %v919
      %921 = vmatmul.f32.gmra.mxu0 %v807
      %v922 = vpop.f32.mrf.mxu0
      %v923 = vadd.f32 0.0, %v922
      %924 = vmatmul.f32.gmra.mxu0 %v810
      %v925 = vpop.f32.mrf.mxu0
      %v926 = vadd.f32 0.0, %v925
      %927 = vmatmul.f32.gmra.mxu0 %v813
      %v928 = vpop.f32.mrf.mxu0
      %v929 = vadd.f32 0.0, %v928
      %930 = vmatmul.f32.gmra.mxu0 %v816
      %v931 = vpop.f32.mrf.mxu0
      %v932 = vadd.f32 0.0, %v931
      %933 = vmatmul.f32.gmra.mxu0 %v819
      %v934 = vpop.f32.mrf.mxu0
      %v935 = vadd.f32 0.0, %v934
      %936 = vmatmul.f32.gmra.mxu0 %v822
      %v937 = vpop.f32.mrf.mxu0
      %v938 = vadd.f32 0.0, %v937
      %939 = vmatmul.f32.gmra.mxu0 %v825
      %v940 = vpop.f32.mrf.mxu0
      %v941 = vadd.f32 0.0, %v940
      %942 = vmatmul.f32.gmra.mxu0 %v828
      %v943 = vpop.f32.mrf.mxu0
      %v944 = vadd.f32 0.0, %v943
      %945 = vmatmul.f32.gmra.mxu0 %v831
      %v946 = vpop.f32.mrf.mxu0
      %v947 = vadd.f32 0.0, %v946
      %948 = vmatmul.f32.gmra.mxu0 %v834
      %v949 = vpop.f32.mrf.mxu0
      %v950 = vadd.f32 0.0, %v949
      %951 = vmatmul.f32.gmra.mxu0 %v837
      %v952 = vpop.f32.mrf.mxu0
      %v953 = vadd.f32 0.0, %v952
      %954 = vmatmul.f32.gmra.mxu0 %v840
      %v955 = vpop.f32.mrf.mxu0
      %v956 = vadd.f32 0.0, %v955
      %957 = vmatmul.f32.gmra.mxu0 %v843
      %v958 = vpop.f32.mrf.mxu0
      %v959 = vadd.f32 0.0, %v958
      %960 = vmatmul.f32.gmra.mxu0 %v846
      %v961 = vpop.f32.mrf.mxu0
      %v962 = vadd.f32 0.0, %v961
      %963 = vmatmul.f32.gmra.mxu0 %v849
      %v964 = vpop.f32.mrf.mxu0
      %v965 = vadd.f32 0.0, %v964
      %966 = vmatmul.f32.gmra.mxu0 %v852
      %v967 = vpop.f32.mrf.mxu0
      %v968 = vadd.f32 0.0, %v967
      %969 = vmatmul.f32.gmra.mxu0 %v855
      %v970 = vpop.f32.mrf.mxu0
      %v971 = vadd.f32 0.0, %v970
      %972 = vmatmul.f32.gmra.mxu0 %v858
      %v973 = vpop.f32.mrf.mxu0
      %v974 = vadd.f32 0.0, %v973
      %975 = vmatmul.f32.gmra.mxu0 %v861
      %v976 = vpop.f32.mrf.mxu0
      %v977 = vadd.f32 0.0, %v976
      %978 = vmatmul.f32.gmra.mxu0 %v864
      %v979 = vpop.f32.mrf.mxu0
      %v980 = vadd.f32 0.0, %v979
      %981 = vmatmul.f32.gmra.mxu0 %v867
      %v982 = vpop.f32.mrf.mxu0
      %v983 = vadd.f32 0.0, %v982
      %984 = vmatmul.f32.gmra.mxu0 %v870
      %v985 = vpop.f32.mrf.mxu0
      %v986 = vadd.f32 0.0, %v985
      %987 = vdwg.mxu0
      %v988 = vadd.f32 %v648, %v893
      %v989 = vadd.f32 %v651, %v896
      %v990 = vadd.f32 %v654, %v899
      %v991 = vadd.f32 %v657, %v902
      %v992 = vadd.f32 %v660, %v905
      %v993 = vadd.f32 %v663, %v908
      %v994 = vadd.f32 %v666, %v911
      %v995 = vadd.f32 %v669, %v914
      %v996 = vadd.f32 %v672, %v917
      %v997 = vadd.f32 %v675, %v920
      %v998 = vadd.f32 %v678, %v923
      %v999 = vadd.f32 %v681, %v926
      %v1000 = vadd.f32 %v684, %v929
      %v1001 = vadd.f32 %v687, %v932
      %v1002 = vadd.f32 %v690, %v935
      %v1003 = vadd.f32 %v693, %v938
      %v1004 = vadd.f32 %v696, %v941
      %v1005 = vadd.f32 %v699, %v944
      %v1006 = vadd.f32 %v702, %v947
      %v1007 = vadd.f32 %v705, %v950
      %v1008 = vadd.f32 %v708, %v953
      %v1009 = vadd.f32 %v711, %v956
      %v1010 = vadd.f32 %v714, %v959
      %v1011 = vadd.f32 %v717, %v962
      %v1012 = vadd.f32 %v720, %v965
      %v1013 = vadd.f32 %v723, %v968
      %v1014 = vadd.f32 %v726, %v971
      %v1015 = vadd.f32 %v729, %v974
      %v1016 = vadd.f32 %v732, %v977
      %v1017 = vadd.f32 %v735, %v980
      %v1018 = vadd.f32 %v738, %v983
      %v1019 = vadd.f32 %v741, %v986
      %s1020 = sadd.s32 %s247, 5
      %s1021 = smul.u32 %s1020, 32
      %s1022 = scalar_lea.vmem %s237, %s1021
      %v1023 = vld [vmem:[%s1022 + $0x2] sm:$0xff]
      %v1024 = vld [vmem:[%s1022 + $0xa] sm:$0xff]
      %v1025 = vld [vmem:[%s1022 + $0x22] sm:$0xff]
      %v1026 = vld [vmem:[%s1022 + $0x2a] sm:$0xff]
      %v1027 = vld [vmem:[%s1022 + $0x42] sm:$0xff]
      %v1028 = vld [vmem:[%s1022 + $0x4a] sm:$0xff]
      %v1029 = vld [vmem:[%s1022 + $0x62] sm:$0xff]
      %v1030 = vld [vmem:[%s1022 + $0x6a] sm:$0xff]
      %v1031 = vld [vmem:[%s1022 + $0x82] sm:$0xff]
      %v1032 = vld [vmem:[%s1022 + $0x8a] sm:$0xff]
      %v1033 = vld [vmem:[%s1022 + $0xa2] sm:$0xff]
      %v1034 = vld [vmem:[%s1022 + $0xaa] sm:$0xff]
      %v1035 = vld [vmem:[%s1022 + $0xc2] sm:$0xff]
      %v1036 = vld [vmem:[%s1022 + $0xca] sm:$0xff]
      %v1037 = vld [vmem:[%s1022 + $0xe2] sm:$0xff]
      %v1038 = vld [vmem:[%s1022 + $0xea] sm:$0xff]
      %v1039 = vld [vmem:[%s1022 + $0x102] sm:$0xff]
      %v1040 = vld [vmem:[%s1022 + $0x10a] sm:$0xff]
      %v1041 = vld [vmem:[%s1022 + $0x122] sm:$0xff]
      %v1042 = vld [vmem:[%s1022 + $0x12a] sm:$0xff]
      %v1043 = vld [vmem:[%s1022 + $0x142] sm:$0xff]
      %v1044 = vld [vmem:[%s1022 + $0x14a] sm:$0xff]
      %v1045 = vld [vmem:[%s1022 + $0x162] sm:$0xff]
      %v1046 = vld [vmem:[%s1022 + $0x16a] sm:$0xff]
      %v1047 = vld [vmem:[%s1022 + $0x182] sm:$0xff]
      %v1048 = vld [vmem:[%s1022 + $0x18a] sm:$0xff]
      %v1049 = vld [vmem:[%s1022 + $0x1a2] sm:$0xff]
      %v1050 = vld [vmem:[%s1022 + $0x1aa] sm:$0xff]
      %v1051 = vld [vmem:[%s1022 + $0x1c2] sm:$0xff]
      %v1052 = vld [vmem:[%s1022 + $0x1ca] sm:$0xff]
      %v1053 = vld [vmem:[%s1022 + $0x1e2] sm:$0xff]
      %v1054 = vld [vmem:[%s1022 + $0x1ea] sm:$0xff]
      %v1055 = vld [vmem:[%s1 + $0xc] sm:$0xf]
      %v1057 = vsel %vm317, %v1023, 0
      %v1060 = vsel %vm317, %v1024, 0
      %v1063 = vsel %vm317, %v1025, 0
      %v1066 = vsel %vm317, %v1026, 0
      %v1069 = vsel %vm317, %v1027, 0
      %v1072 = vsel %vm317, %v1028, 0
      %v1075 = vsel %vm317, %v1029, 0
      %v1078 = vsel %vm317, %v1030, 0
      %v1081 = vsel %vm317, %v1031, 0
      %v1084 = vsel %vm317, %v1032, 0
      %v1087 = vsel %vm317, %v1033, 0
      %v1090 = vsel %vm317, %v1034, 0
      %v1093 = vsel %vm317, %v1035, 0
      %v1096 = vsel %vm317, %v1036, 0
      %v1099 = vsel %vm317, %v1037, 0
      %v1102 = vsel %vm317, %v1038, 0
      %v1105 = vsel %vm317, %v1039, 0
      %v1108 = vsel %vm317, %v1040, 0
      %v1111 = vsel %vm317, %v1041, 0
      %v1114 = vsel %vm317, %v1042, 0
      %v1117 = vsel %vm317, %v1043, 0
      %v1120 = vsel %vm317, %v1044, 0
      %v1123 = vsel %vm317, %v1045, 0
      %v1126 = vsel %vm317, %v1046, 0
      %v1129 = vsel %vm317, %v1047, 0
      %v1132 = vsel %vm317, %v1048, 0
      %v1135 = vsel %vm317, %v1049, 0
      %v1138 = vsel %vm317, %v1050, 0
      %v1141 = vsel %vm317, %v1051, 0
      %v1144 = vsel %vm317, %v1052, 0
      %v1147 = vsel %vm317, %v1053, 0
      %v1150 = vsel %vm317, %v1054, 0
      %v1153 = vsel %vm414, %v1055, 0
      %1155 = vmatpush.msra.mxu0 0.0
      %1156 = vmatpush.msra.mxu0 0.0
      %1157 = vmatpush.msra.mxu0 0.0
      %1158 = vmatpush.msra.mxu0 0.0
      %1159 = vmatpush.msra.mxu0 0.0
      %1160 = vmatpush.msra.mxu0 0.0
      %1161 = vmatpush.msra.mxu0 0.0
      %1162 = vmatpush.msra.mxu0 0.0
      %1163 = vmatpush.msra.mxu0 0.0
      %1164 = vmatpush.msra.mxu0 0.0
      %1165 = vmatpush.msra.mxu0 0.0
      %1166 = vmatpush.msra.mxu0 0.0
      %1167 = vmatpush.msra.mxu0 0.0
      %1168 = vmatpush.msra.mxu0 0.0
      %1169 = vmatpush.msra.mxu0 0.0
      %1170 = vmatpush.msra.mxu0 %v1153
      %1171 = vmatmul.f32.gmra.mxu0 %v1057
      %v1172 = vpop.f32.mrf.mxu0
      %v1173 = vadd.f32 0.0, %v1172
      %1174 = vmatmul.f32.gmra.mxu0 %v1060
      %v1175 = vpop.f32.mrf.mxu0
      %v1176 = vadd.f32 0.0, %v1175
      %1177 = vmatmul.f32.gmra.mxu0 %v1063
      %v1178 = vpop.f32.mrf.mxu0
      %v1179 = vadd.f32 0.0, %v1178
      %1180 = vmatmul.f32.gmra.mxu0 %v1066
      %v1181 = vpop.f32.mrf.mxu0
      %v1182 = vadd.f32 0.0, %v1181
      %1183 = vmatmul.f32.gmra.mxu0 %v1069
      %v1184 = vpop.f32.mrf.mxu0
      %v1185 = vadd.f32 0.0, %v1184
      %1186 = vmatmul.f32.gmra.mxu0 %v1072
      %v1187 = vpop.f32.mrf.mxu0
      %v1188 = vadd.f32 0.0, %v1187
      %1189 = vmatmul.f32.gmra.mxu0 %v1075
      %v1190 = vpop.f32.mrf.mxu0
      %v1191 = vadd.f32 0.0, %v1190
      %1192 = vmatmul.f32.gmra.mxu0 %v1078
      %v1193 = vpop.f32.mrf.mxu0
      %v1194 = vadd.f32 0.0, %v1193
      %1195 = vmatmul.f32.gmra.mxu0 %v1081
      %v1196 = vpop.f32.mrf.mxu0
      %v1197 = vadd.f32 0.0, %v1196
      %1198 = vmatmul.f32.gmra.mxu0 %v1084
      %v1199 = vpop.f32.mrf.mxu0
      %v1200 = vadd.f32 0.0, %v1199
      %1201 = vmatmul.f32.gmra.mxu0 %v1087
      %v1202 = vpop.f32.mrf.mxu0
      %v1203 = vadd.f32 0.0, %v1202
      %1204 = vmatmul.f32.gmra.mxu0 %v1090
      %v1205 = vpop.f32.mrf.mxu0
      %v1206 = vadd.f32 0.0, %v1205
      %1207 = vmatmul.f32.gmra.mxu0 %v1093
      %v1208 = vpop.f32.mrf.mxu0
      %v1209 = vadd.f32 0.0, %v1208
      %1210 = vmatmul.f32.gmra.mxu0 %v1096
      %v1211 = vpop.f32.mrf.mxu0
      %v1212 = vadd.f32 0.0, %v1211
      %1213 = vmatmul.f32.gmra.mxu0 %v1099
      %v1214 = vpop.f32.mrf.mxu0
      %v1215 = vadd.f32 0.0, %v1214
      %1216 = vmatmul.f32.gmra.mxu0 %v1102
      %v1217 = vpop.f32.mrf.mxu0
      %v1218 = vadd.f32 0.0, %v1217
      %1219 = vmatmul.f32.gmra.mxu0 %v1105
      %v1220 = vpop.f32.mrf.mxu0
      %v1221 = vadd.f32 0.0, %v1220
      %1222 = vmatmul.f32.gmra.mxu0 %v1108
      %v1223 = vpop.f32.mrf.mxu0
      %v1224 = vadd.f32 0.0, %v1223
      %1225 = vmatmul.f32.gmra.mxu0 %v1111
      %v1226 = vpop.f32.mrf.mxu0
      %v1227 = vadd.f32 0.0, %v1226
      %1228 = vmatmul.f32.gmra.mxu0 %v1114
      %v1229 = vpop.f32.mrf.mxu0
      %v1230 = vadd.f32 0.0, %v1229
      %1231 = vmatmul.f32.gmra.mxu0 %v1117
      %v1232 = vpop.f32.mrf.mxu0
      %v1233 = vadd.f32 0.0, %v1232
      %1234 = vmatmul.f32.gmra.mxu0 %v1120
      %v1235 = vpop.f32.mrf.mxu0
      %v1236 = vadd.f32 0.0, %v1235
      %1237 = vmatmul.f32.gmra.mxu0 %v1123
      %v1238 = vpop.f32.mrf.mxu0
      %v1239 = vadd.f32 0.0, %v1238
      %1240 = vmatmul.f32.gmra.mxu0 %v1126
      %v1241 = vpop.f32.mrf.mxu0
      %v1242 = vadd.f32 0.0, %v1241
      %1243 = vmatmul.f32.gmra.mxu0 %v1129
      %v1244 = vpop.f32.mrf.mxu0
      %v1245 = vadd.f32 0.0, %v1244
      %1246 = vmatmul.f32.gmra.mxu0 %v1132
      %v1247 = vpop.f32.mrf.mxu0
      %v1248 = vadd.f32 0.0, %v1247
      %1249 = vmatmul.f32.gmra.mxu0 %v1135
      %v1250 = vpop.f32.mrf.mxu0
      %v1251 = vadd.f32 0.0, %v1250
      %1252 = vmatmul.f32.gmra.mxu0 %v1138
      %v1253 = vpop.f32.mrf.mxu0
      %v1254 = vadd.f32 0.0, %v1253
      %1255 = vmatmul.f32.gmra.mxu0 %v1141
      %v1256 = vpop.f32.mrf.mxu0
      %v1257 = vadd.f32 0.0, %v1256
      %1258 = vmatmul.f32.gmra.mxu0 %v1144
      %v1259 = vpop.f32.mrf.mxu0
      %v1260 = vadd.f32 0.0, %v1259
      %1261 = vmatmul.f32.gmra.mxu0 %v1147
      %v1262 = vpop.f32.mrf.mxu0
      %v1263 = vadd.f32 0.0, %v1262
      %1264 = vmatmul.f32.gmra.mxu0 %v1150
      %v1265 = vpop.f32.mrf.mxu0
      %v1266 = vadd.f32 0.0, %v1265
      %1267 = vdwg.mxu0
      %v1268 = vadd.f32 %v988, %v1173
      %v1269 = vadd.f32 %v989, %v1176
      %v1270 = vadd.f32 %v990, %v1179
      %v1271 = vadd.f32 %v991, %v1182
      %v1272 = vadd.f32 %v992, %v1185
      %v1273 = vadd.f32 %v993, %v1188
      %v1274 = vadd.f32 %v994, %v1191
      %v1275 = vadd.f32 %v995, %v1194
      %v1276 = vadd.f32 %v996, %v1197
      %v1277 = vadd.f32 %v997, %v1200
      %v1278 = vadd.f32 %v998, %v1203
      %v1279 = vadd.f32 %v999, %v1206
      %v1280 = vadd.f32 %v1000, %v1209
      %v1281 = vadd.f32 %v1001, %v1212
      %v1282 = vadd.f32 %v1002, %v1215
      %v1283 = vadd.f32 %v1003, %v1218
      %v1284 = vadd.f32 %v1004, %v1221
      %v1285 = vadd.f32 %v1005, %v1224
      %v1286 = vadd.f32 %v1006, %v1227
      %v1287 = vadd.f32 %v1007, %v1230
      %v1288 = vadd.f32 %v1008, %v1233
      %v1289 = vadd.f32 %v1009, %v1236
      %v1290 = vadd.f32 %v1010, %v1239
      %v1291 = vadd.f32 %v1011, %v1242
      %v1292 = vadd.f32 %v1012, %v1245
      %v1293 = vadd.f32 %v1013, %v1248
      %v1294 = vadd.f32 %v1014, %v1251
      %v1295 = vadd.f32 %v1015, %v1254
      %v1296 = vadd.f32 %v1016, %v1257
      %v1297 = vadd.f32 %v1017, %v1260
      %v1298 = vadd.f32 %v1018, %v1263
      %v1299 = vadd.f32 %v1019, %v1266
      %v1300 = vld [vmem:[%s1022 + $0x5] sm:$0xff]
      %v1301 = vld [vmem:[%s1022 + $0xd] sm:$0xff]
      %v1302 = vld [vmem:[%s1022 + $0x25] sm:$0xff]
      %v1303 = vld [vmem:[%s1022 + $0x2d] sm:$0xff]
      %v1304 = vld [vmem:[%s1022 + $0x45] sm:$0xff]
      %v1305 = vld [vmem:[%s1022 + $0x4d] sm:$0xff]
      %v1306 = vld [vmem:[%s1022 + $0x65] sm:$0xff]
      %v1307 = vld [vmem:[%s1022 + $0x6d] sm:$0xff]
      %v1308 = vld [vmem:[%s1022 + $0x85] sm:$0xff]
      %v1309 = vld [vmem:[%s1022 + $0x8d] sm:$0xff]
      %v1310 = vld [vmem:[%s1022 + $0xa5] sm:$0xff]
      %v1311 = vld [vmem:[%s1022 + $0xad] sm:$0xff]
      %v1312 = vld [vmem:[%s1022 + $0xc5] sm:$0xff]
      %v1313 = vld [vmem:[%s1022 + $0xcd] sm:$0xff]
      %v1314 = vld [vmem:[%s1022 + $0xe5] sm:$0xff]
      %v1315 = vld [vmem:[%s1022 + $0xed] sm:$0xff]
      %v1316 = vld [vmem:[%s1022 + $0x105] sm:$0xff]
      %v1317 = vld [vmem:[%s1022 + $0x10d] sm:$0xff]
      %v1318 = vld [vmem:[%s1022 + $0x125] sm:$0xff]
      %v1319 = vld [vmem:[%s1022 + $0x12d] sm:$0xff]
      %v1320 = vld [vmem:[%s1022 + $0x145] sm:$0xff]
      %v1321 = vld [vmem:[%s1022 + $0x14d] sm:$0xff]
      %v1322 = vld [vmem:[%s1022 + $0x165] sm:$0xff]
      %v1323 = vld [vmem:[%s1022 + $0x16d] sm:$0xff]
      %v1324 = vld [vmem:[%s1022 + $0x185] sm:$0xff]
      %v1325 = vld [vmem:[%s1022 + $0x18d] sm:$0xff]
      %v1326 = vld [vmem:[%s1022 + $0x1a5] sm:$0xff]
      %v1327 = vld [vmem:[%s1022 + $0x1ad] sm:$0xff]
      %v1328 = vld [vmem:[%s1022 + $0x1c5] sm:$0xff]
      %v1329 = vld [vmem:[%s1022 + $0x1cd] sm:$0xff]
      %v1330 = vld [vmem:[%s1022 + $0x1e5] sm:$0xff]
      %v1331 = vld [vmem:[%s1022 + $0x1ed] sm:$0xff]
      %v1332 = vld [vmem:[%s1 + $0x10] sm:$0xf]
      %v1334 = vsel %vm317, %v1300, 0
      %v1337 = vsel %vm317, %v1301, 0
      %v1340 = vsel %vm317, %v1302, 0
      %v1343 = vsel %vm317, %v1303, 0
      %v1346 = vsel %vm317, %v1304, 0
      %v1349 = vsel %vm317, %v1305, 0
      %v1352 = vsel %vm317, %v1306, 0
      %v1355 = vsel %vm317, %v1307, 0
      %v1358 = vsel %vm317, %v1308, 0
      %v1361 = vsel %vm317, %v1309, 0
      %v1364 = vsel %vm317, %v1310, 0
      %v1367 = vsel %vm317, %v1311, 0
      %v1370 = vsel %vm317, %v1312, 0
      %v1373 = vsel %vm317, %v1313, 0
      %v1376 = vsel %vm317, %v1314, 0
      %v1379 = vsel %vm317, %v1315, 0
      %v1382 = vsel %vm317, %v1316, 0
      %v1385 = vsel %vm317, %v1317, 0
      %v1388 = vsel %vm317, %v1318, 0
      %v1391 = vsel %vm317, %v1319, 0
      %v1394 = vsel %vm317, %v1320, 0
      %v1397 = vsel %vm317, %v1321, 0
      %v1400 = vsel %vm317, %v1322, 0
      %v1403 = vsel %vm317, %v1323, 0
      %v1406 = vsel %vm317, %v1324, 0
      %v1409 = vsel %vm317, %v1325, 0
      %v1412 = vsel %vm317, %v1326, 0
      %v1415 = vsel %vm317, %v1327, 0
      %v1418 = vsel %vm317, %v1328, 0
      %v1421 = vsel %vm317, %v1329, 0
      %v1424 = vsel %vm317, %v1330, 0
      %v1427 = vsel %vm317, %v1331, 0
      %v1430 = vsel %vm414, %v1332, 0
      %1432 = vmatpush.msra.mxu0 0.0
      %1433 = vmatpush.msra.mxu0 0.0
      %1434 = vmatpush.msra.mxu0 0.0
      %1435 = vmatpush.msra.mxu0 0.0
      %1436 = vmatpush.msra.mxu0 0.0
      %1437 = vmatpush.msra.mxu0 0.0
      %1438 = vmatpush.msra.mxu0 0.0
      %1439 = vmatpush.msra.mxu0 0.0
      %1440 = vmatpush.msra.mxu0 0.0
      %1441 = vmatpush.msra.mxu0 0.0
      %1442 = vmatpush.msra.mxu0 0.0
      %1443 = vmatpush.msra.mxu0 0.0
      %1444 = vmatpush.msra.mxu0 0.0
      %1445 = vmatpush.msra.mxu0 0.0
      %1446 = vmatpush.msra.mxu0 0.0
      %1447 = vmatpush.msra.mxu0 %v1430
      %1448 = vmatmul.f32.gmra.mxu0 %v1334
      %v1449 = vpop.f32.mrf.mxu0
      %v1450 = vadd.f32 0.0, %v1449
      %1451 = vmatmul.f32.gmra.mxu0 %v1337
      %v1452 = vpop.f32.mrf.mxu0
      %v1453 = vadd.f32 0.0, %v1452
      %1454 = vmatmul.f32.gmra.mxu0 %v1340
      %v1455 = vpop.f32.mrf.mxu0
      %v1456 = vadd.f32 0.0, %v1455
      %1457 = vmatmul.f32.gmra.mxu0 %v1343
      %v1458 = vpop.f32.mrf.mxu0
      %v1459 = vadd.f32 0.0, %v1458
      %1460 = vmatmul.f32.gmra.mxu0 %v1346
      %v1461 = vpop.f32.mrf.mxu0
      %v1462 = vadd.f32 0.0, %v1461
      %1463 = vmatmul.f32.gmra.mxu0 %v1349
      %v1464 = vpop.f32.mrf.mxu0
      %v1465 = vadd.f32 0.0, %v1464
      %1466 = vmatmul.f32.gmra.mxu0 %v1352
      %v1467 = vpop.f32.mrf.mxu0
      %v1468 = vadd.f32 0.0, %v1467
      %1469 = vmatmul.f32.gmra.mxu0 %v1355
      %v1470 = vpop.f32.mrf.mxu0
      %v1471 = vadd.f32 0.0, %v1470
      %1472 = vmatmul.f32.gmra.mxu0 %v1358
      %v1473 = vpop.f32.mrf.mxu0
      %v1474 = vadd.f32 0.0, %v1473
      %1475 = vmatmul.f32.gmra.mxu0 %v1361
      %v1476 = vpop.f32.mrf.mxu0
      %v1477 = vadd.f32 0.0, %v1476
      %1478 = vmatmul.f32.gmra.mxu0 %v1364
      %v1479 = vpop.f32.mrf.mxu0
      %v1480 = vadd.f32 0.0, %v1479
      %1481 = vmatmul.f32.gmra.mxu0 %v1367
      %v1482 = vpop.f32.mrf.mxu0
      %v1483 = vadd.f32 0.0, %v1482
      %1484 = vmatmul.f32.gmra.mxu0 %v1370
      %v1485 = vpop.f32.mrf.mxu0
      %v1486 = vadd.f32 0.0, %v1485
      %1487 = vmatmul.f32.gmra.mxu0 %v1373
      %v1488 = vpop.f32.mrf.mxu0
      %v1489 = vadd.f32 0.0, %v1488
      %1490 = vmatmul.f32.gmra.mxu0 %v1376
      %v1491 = vpop.f32.mrf.mxu0
      %v1492 = vadd.f32 0.0, %v1491
      %1493 = vmatmul.f32.gmra.mxu0 %v1379
      %v1494 = vpop.f32.mrf.mxu0
      %v1495 = vadd.f32 0.0, %v1494
      %1496 = vmatmul.f32.gmra.mxu0 %v1382
      %v1497 = vpop.f32.mrf.mxu0
      %v1498 = vadd.f32 0.0, %v1497
      %1499 = vmatmul.f32.gmra.mxu0 %v1385
      %v1500 = vpop.f32.mrf.mxu0
      %v1501 = vadd.f32 0.0, %v1500
      %1502 = vmatmul.f32.gmra.mxu0 %v1388
      %v1503 = vpop.f32.mrf.mxu0
      %v1504 = vadd.f32 0.0, %v1503
      %1505 = vmatmul.f32.gmra.mxu0 %v1391
      %v1506 = vpop.f32.mrf.mxu0
      %v1507 = vadd.f32 0.0, %v1506
      %1508 = vmatmul.f32.gmra.mxu0 %v1394
      %v1509 = vpop.f32.mrf.mxu0
      %v1510 = vadd.f32 0.0, %v1509
      %1511 = vmatmul.f32.gmra.mxu0 %v1397
      %v1512 = vpop.f32.mrf.mxu0
      %v1513 = vadd.f32 0.0, %v1512
      %1514 = vmatmul.f32.gmra.mxu0 %v1400
      %v1515 = vpop.f32.mrf.mxu0
      %v1516 = vadd.f32 0.0, %v1515
      %1517 = vmatmul.f32.gmra.mxu0 %v1403
      %v1518 = vpop.f32.mrf.mxu0
      %v1519 = vadd.f32 0.0, %v1518
      %1520 = vmatmul.f32.gmra.mxu0 %v1406
      %v1521 = vpop.f32.mrf.mxu0
      %v1522 = vadd.f32 0.0, %v1521
      %1523 = vmatmul.f32.gmra.mxu0 %v1409
      %v1524 = vpop.f32.mrf.mxu0
      %v1525 = vadd.f32 0.0, %v1524
      %1526 = vmatmul.f32.gmra.mxu0 %v1412
      %v1527 = vpop.f32.mrf.mxu0
      %v1528 = vadd.f32 0.0, %v1527
      %1529 = vmatmul.f32.gmra.mxu0 %v1415
      %v1530 = vpop.f32.mrf.mxu0
      %v1531 = vadd.f32 0.0, %v1530
      %1532 = vmatmul.f32.gmra.mxu0 %v1418
      %v1533 = vpop.f32.mrf.mxu0
      %v1534 = vadd.f32 0.0, %v1533
      %1535 = vmatmul.f32.gmra.mxu0 %v1421
      %v1536 = vpop.f32.mrf.mxu0
      %v1537 = vadd.f32 0.0, %v1536
      %1538 = vmatmul.f32.gmra.mxu0 %v1424
      %v1539 = vpop.f32.mrf.mxu0
      %v1540 = vadd.f32 0.0, %v1539
      %1541 = vmatmul.f32.gmra.mxu0 %v1427
      %v1542 = vpop.f32.mrf.mxu0
      %v1543 = vadd.f32 0.0, %v1542
      %1544 = vdwg.mxu0
      %v1545 = vadd.f32 %v1268, %v1450
      %v1546 = vadd.f32 %v1269, %v1453
      %v1547 = vadd.f32 %v1270, %v1456
      %v1548 = vadd.f32 %v1271, %v1459
      %v1549 = vadd.f32 %v1272, %v1462
      %v1550 = vadd.f32 %v1273, %v1465
      %v1551 = vadd.f32 %v1274, %v1468
      %v1552 = vadd.f32 %v1275, %v1471
      %v1553 = vadd.f32 %v1276, %v1474
      %v1554 = vadd.f32 %v1277, %v1477
      %v1555 = vadd.f32 %v1278, %v1480
      %v1556 = vadd.f32 %v1279, %v1483
      %v1557 = vadd.f32 %v1280, %v1486
      %v1558 = vadd.f32 %v1281, %v1489
      %v1559 = vadd.f32 %v1282, %v1492
      %v1560 = vadd.f32 %v1283, %v1495
      %v1561 = vadd.f32 %v1284, %v1498
      %v1562 = vadd.f32 %v1285, %v1501
      %v1563 = vadd.f32 %v1286, %v1504
      %v1564 = vadd.f32 %v1287, %v1507
      %v1565 = vadd.f32 %v1288, %v1510
      %v1566 = vadd.f32 %v1289, %v1513
      %v1567 = vadd.f32 %v1290, %v1516
      %v1568 = vadd.f32 %v1291, %v1519
      %v1569 = vadd.f32 %v1292, %v1522
      %v1570 = vadd.f32 %v1293, %v1525
      %v1571 = vadd.f32 %v1294, %v1528
      %v1572 = vadd.f32 %v1295, %v1531
      %v1573 = vadd.f32 %v1296, %v1534
      %v1574 = vadd.f32 %v1297, %v1537
      %v1575 = vadd.f32 %v1298, %v1540
      %v1576 = vadd.f32 %v1299, %v1543
      %v1577 = vld [vmem:[%s1022 + $0x8] sm:$0xff]
      %v1578 = vld [vmem:[%s1022 + $0x10] sm:$0xff]
      %v1579 = vld [vmem:[%s1022 + $0x28] sm:$0xff]
      %v1580 = vld [vmem:[%s1022 + $0x30] sm:$0xff]
      %v1581 = vld [vmem:[%s1022 + $0x48] sm:$0xff]
      %v1582 = vld [vmem:[%s1022 + $0x50] sm:$0xff]
      %v1583 = vld [vmem:[%s1022 + $0x68] sm:$0xff]
      %v1584 = vld [vmem:[%s1022 + $0x70] sm:$0xff]
      %v1585 = vld [vmem:[%s1022 + $0x88] sm:$0xff]
      %v1586 = vld [vmem:[%s1022 + $0x90] sm:$0xff]
      %v1587 = vld [vmem:[%s1022 + $0xa8] sm:$0xff]
      %v1588 = vld [vmem:[%s1022 + $0xb0] sm:$0xff]
      %v1589 = vld [vmem:[%s1022 + $0xc8] sm:$0xff]
      %v1590 = vld [vmem:[%s1022 + $0xd0] sm:$0xff]
      %v1591 = vld [vmem:[%s1022 + $0xe8] sm:$0xff]
      %v1592 = vld [vmem:[%s1022 + $0xf0] sm:$0xff]
      %v1593 = vld [vmem:[%s1022 + $0x108] sm:$0xff]
      %v1594 = vld [vmem:[%s1022 + $0x110] sm:$0xff]
      %v1595 = vld [vmem:[%s1022 + $0x128] sm:$0xff]
      %v1596 = vld [vmem:[%s1022 + $0x130] sm:$0xff]
      %v1597 = vld [vmem:[%s1022 + $0x148] sm:$0xff]
      %v1598 = vld [vmem:[%s1022 + $0x150] sm:$0xff]
      %v1599 = vld [vmem:[%s1022 + $0x168] sm:$0xff]
      %v1600 = vld [vmem:[%s1022 + $0x170] sm:$0xff]
      %v1601 = vld [vmem:[%s1022 + $0x188] sm:$0xff]
      %v1602 = vld [vmem:[%s1022 + $0x190] sm:$0xff]
      %v1603 = vld [vmem:[%s1022 + $0x1a8] sm:$0xff]
      %v1604 = vld [vmem:[%s1022 + $0x1b0] sm:$0xff]
      %v1605 = vld [vmem:[%s1022 + $0x1c8] sm:$0xff]
      %v1606 = vld [vmem:[%s1022 + $0x1d0] sm:$0xff]
      %v1607 = vld [vmem:[%s1022 + $0x1e8] sm:$0xff]
      %v1608 = vld [vmem:[%s1022 + $0x1f0] sm:$0xff]
      %v1609 = vld [vmem:[%s1 + $0x14] sm:$0xf]
      %v1611 = vsel %vm317, %v1577, 0
      %v1614 = vsel %vm317, %v1578, 0
      %v1617 = vsel %vm317, %v1579, 0
      %v1620 = vsel %vm317, %v1580, 0
      %v1623 = vsel %vm317, %v1581, 0
      %v1626 = vsel %vm317, %v1582, 0
      %v1629 = vsel %vm317, %v1583, 0
      %v1632 = vsel %vm317, %v1584, 0
      %v1635 = vsel %vm317, %v1585, 0
      %v1638 = vsel %vm317, %v1586, 0
      %v1641 = vsel %vm317, %v1587, 0
      %v1644 = vsel %vm317, %v1588, 0
      %v1647 = vsel %vm317, %v1589, 0
      %v1650 = vsel %vm317, %v1590, 0
      %v1653 = vsel %vm317, %v1591, 0
      %v1656 = vsel %vm317, %v1592, 0
      %v1659 = vsel %vm317, %v1593, 0
      %v1662 = vsel %vm317, %v1594, 0
      %v1665 = vsel %vm317, %v1595, 0
      %v1668 = vsel %vm317, %v1596, 0
      %v1671 = vsel %vm317, %v1597, 0
      %v1674 = vsel %vm317, %v1598, 0
      %v1677 = vsel %vm317, %v1599, 0
      %v1680 = vsel %vm317, %v1600, 0
      %v1683 = vsel %vm317, %v1601, 0
      %v1686 = vsel %vm317, %v1602, 0
      %v1689 = vsel %vm317, %v1603, 0
      %v1692 = vsel %vm317, %v1604, 0
      %v1695 = vsel %vm317, %v1605, 0
      %v1698 = vsel %vm317, %v1606, 0
      %v1701 = vsel %vm317, %v1607, 0
      %v1704 = vsel %vm317, %v1608, 0
      %v1707 = vsel %vm414, %v1609, 0
      %1709 = vmatpush.msra.mxu0 0.0
      %1710 = vmatpush.msra.mxu0 0.0
      %1711 = vmatpush.msra.mxu0 0.0
      %1712 = vmatpush.msra.mxu0 0.0
      %1713 = vmatpush.msra.mxu0 0.0
      %1714 = vmatpush.msra.mxu0 0.0
      %1715 = vmatpush.msra.mxu0 0.0
      %1716 = vmatpush.msra.mxu0 0.0
      %1717 = vmatpush.msra.mxu0 0.0
      %1718 = vmatpush.msra.mxu0 0.0
      %1719 = vmatpush.msra.mxu0 0.0
      %1720 = vmatpush.msra.mxu0 0.0
      %1721 = vmatpush.msra.mxu0 0.0
      %1722 = vmatpush.msra.mxu0 0.0
      %1723 = vmatpush.msra.mxu0 0.0
      %1724 = vmatpush.msra.mxu0 %v1707
      %1725 = vmatmul.f32.gmra.mxu0 %v1611
      %v1726 = vpop.f32.mrf.mxu0
      %v1727 = vadd.f32 0.0, %v1726
      %1728 = vmatmul.f32.gmra.mxu0 %v1614
      %v1729 = vpop.f32.mrf.mxu0
      %v1730 = vadd.f32 0.0, %v1729
      %1731 = vmatmul.f32.gmra.mxu0 %v1617
      %v1732 = vpop.f32.mrf.mxu0
      %v1733 = vadd.f32 0.0, %v1732
      %1734 = vmatmul.f32.gmra.mxu0 %v1620
      %v1735 = vpop.f32.mrf.mxu0
      %v1736 = vadd.f32 0.0, %v1735
      %1737 = vmatmul.f32.gmra.mxu0 %v1623
      %v1738 = vpop.f32.mrf.mxu0
      %v1739 = vadd.f32 0.0, %v1738
      %1740 = vmatmul.f32.gmra.mxu0 %v1626
      %v1741 = vpop.f32.mrf.mxu0
      %v1742 = vadd.f32 0.0, %v1741
      %1743 = vmatmul.f32.gmra.mxu0 %v1629
      %v1744 = vpop.f32.mrf.mxu0
      %v1745 = vadd.f32 0.0, %v1744
      %1746 = vmatmul.f32.gmra.mxu0 %v1632
      %v1747 = vpop.f32.mrf.mxu0
      %v1748 = vadd.f32 0.0, %v1747
      %1749 = vmatmul.f32.gmra.mxu0 %v1635
      %v1750 = vpop.f32.mrf.mxu0
      %v1751 = vadd.f32 0.0, %v1750
      %1752 = vmatmul.f32.gmra.mxu0 %v1638
      %v1753 = vpop.f32.mrf.mxu0
      %v1754 = vadd.f32 0.0, %v1753
      %1755 = vmatmul.f32.gmra.mxu0 %v1641
      %v1756 = vpop.f32.mrf.mxu0
      %v1757 = vadd.f32 0.0, %v1756
      %1758 = vmatmul.f32.gmra.mxu0 %v1644
      %v1759 = vpop.f32.mrf.mxu0
      %v1760 = vadd.f32 0.0, %v1759
      %1761 = vmatmul.f32.gmra.mxu0 %v1647
      %v1762 = vpop.f32.mrf.mxu0
      %v1763 = vadd.f32 0.0, %v1762
      %1764 = vmatmul.f32.gmra.mxu0 %v1650
      %v1765 = vpop.f32.mrf.mxu0
      %v1766 = vadd.f32 0.0, %v1765
      %1767 = vmatmul.f32.gmra.mxu0 %v1653
      %v1768 = vpop.f32.mrf.mxu0
      %v1769 = vadd.f32 0.0, %v1768
      %1770 = vmatmul.f32.gmra.mxu0 %v1656
      %v1771 = vpop.f32.mrf.mxu0
      %v1772 = vadd.f32 0.0, %v1771
      %1773 = vmatmul.f32.gmra.mxu0 %v1659
      %v1774 = vpop.f32.mrf.mxu0
      %v1775 = vadd.f32 0.0, %v1774
      %1776 = vmatmul.f32.gmra.mxu0 %v1662
      %v1777 = vpop.f32.mrf.mxu0
      %v1778 = vadd.f32 0.0, %v1777
      %1779 = vmatmul.f32.gmra.mxu0 %v1665
      %v1780 = vpop.f32.mrf.mxu0
      %v1781 = vadd.f32 0.0, %v1780
      %1782 = vmatmul.f32.gmra.mxu0 %v1668
      %v1783 = vpop.f32.mrf.mxu0
      %v1784 = vadd.f32 0.0, %v1783
      %1785 = vmatmul.f32.gmra.mxu0 %v1671
      %v1786 = vpop.f32.mrf.mxu0
      %v1787 = vadd.f32 0.0, %v1786
      %1788 = vmatmul.f32.gmra.mxu0 %v1674
      %v1789 = vpop.f32.mrf.mxu0
      %v1790 = vadd.f32 0.0, %v1789
      %1791 = vmatmul.f32.gmra.mxu0 %v1677
      %v1792 = vpop.f32.mrf.mxu0
      %v1793 = vadd.f32 0.0, %v1792
      %1794 = vmatmul.f32.gmra.mxu0 %v1680
      %v1795 = vpop.f32.mrf.mxu0
      %v1796 = vadd.f32 0.0, %v1795
      %1797 = vmatmul.f32.gmra.mxu0 %v1683
      %v1798 = vpop.f32.mrf.mxu0
      %v1799 = vadd.f32 0.0, %v1798
      %1800 = vmatmul.f32.gmra.mxu0 %v1686
      %v1801 = vpop.f32.mrf.mxu0
      %v1802 = vadd.f32 0.0, %v1801
      %1803 = vmatmul.f32.gmra.mxu0 %v1689
      %v1804 = vpop.f32.mrf.mxu0
      %v1805 = vadd.f32 0.0, %v1804
      %1806 = vmatmul.f32.gmra.mxu0 %v1692
      %v1807 = vpop.f32.mrf.mxu0
      %v1808 = vadd.f32 0.0, %v1807
      %1809 = vmatmul.f32.gmra.mxu0 %v1695
      %v1810 = vpop.f32.mrf.mxu0
      %v1811 = vadd.f32 0.0, %v1810
      %1812 = vmatmul.f32.gmra.mxu0 %v1698
      %v1813 = vpop.f32.mrf.mxu0
      %v1814 = vadd.f32 0.0, %v1813
      %1815 = vmatmul.f32.gmra.mxu0 %v1701
      %v1816 = vpop.f32.mrf.mxu0
      %v1817 = vadd.f32 0.0, %v1816
      %1818 = vmatmul.f32.gmra.mxu0 %v1704
      %v1819 = vpop.f32.mrf.mxu0
      %v1820 = vadd.f32 0.0, %v1819
      %1821 = vdwg.mxu0
      %v1822 = vadd.f32 %v1545, %v1727
      %v1823 = vadd.f32 %v1546, %v1730
      %v1824 = vadd.f32 %v1547, %v1733
      %v1825 = vadd.f32 %v1548, %v1736
      %v1826 = vadd.f32 %v1549, %v1739
      %v1827 = vadd.f32 %v1550, %v1742
      %v1828 = vadd.f32 %v1551, %v1745
      %v1829 = vadd.f32 %v1552, %v1748
      %v1830 = vadd.f32 %v1553, %v1751
      %v1831 = vadd.f32 %v1554, %v1754
      %v1832 = vadd.f32 %v1555, %v1757
      %v1833 = vadd.f32 %v1556, %v1760
      %v1834 = vadd.f32 %v1557, %v1763
      %v1835 = vadd.f32 %v1558, %v1766
      %v1836 = vadd.f32 %v1559, %v1769
      %v1837 = vadd.f32 %v1560, %v1772
      %v1838 = vadd.f32 %v1561, %v1775
      %v1839 = vadd.f32 %v1562, %v1778
      %v1840 = vadd.f32 %v1563, %v1781
      %v1841 = vadd.f32 %v1564, %v1784
      %v1842 = vadd.f32 %v1565, %v1787
      %v1843 = vadd.f32 %v1566, %v1790
      %v1844 = vadd.f32 %v1567, %v1793
      %v1845 = vadd.f32 %v1568, %v1796
      %v1846 = vadd.f32 %v1569, %v1799
      %v1847 = vadd.f32 %v1570, %v1802
      %v1848 = vadd.f32 %v1571, %v1805
      %v1849 = vadd.f32 %v1572, %v1808
      %v1850 = vadd.f32 %v1573, %v1811
      %v1851 = vadd.f32 %v1574, %v1814
      %v1852 = vadd.f32 %v1575, %v1817
      %v1853 = vadd.f32 %v1576, %v1820
      %s1854 = sadd.s32 %s247, 8
      %s1855 = smul.u32 %s1854, 32
      %s1856 = scalar_lea.vmem %s237, %s1855
      %v1857 = vld [vmem:[%s1856 + $0x2] sm:$0xff]
      %v1858 = vld [vmem:[%s1856 + $0xa] sm:$0xff]
      %v1859 = vld [vmem:[%s1856 + $0x22] sm:$0xff]
      %v1860 = vld [vmem:[%s1856 + $0x2a] sm:$0xff]
      %v1861 = vld [vmem:[%s1856 + $0x42] sm:$0xff]
      %v1862 = vld [vmem:[%s1856 + $0x4a] sm:$0xff]
      %v1863 = vld [vmem:[%s1856 + $0x62] sm:$0xff]
      %v1864 = vld [vmem:[%s1856 + $0x6a] sm:$0xff]
      %v1865 = vld [vmem:[%s1856 + $0x82] sm:$0xff]
      %v1866 = vld [vmem:[%s1856 + $0x8a] sm:$0xff]
      %v1867 = vld [vmem:[%s1856 + $0xa2] sm:$0xff]
      %v1868 = vld [vmem:[%s1856 + $0xaa] sm:$0xff]
      %v1869 = vld [vmem:[%s1856 + $0xc2] sm:$0xff]
      %v1870 = vld [vmem:[%s1856 + $0xca] sm:$0xff]
      %v1871 = vld [vmem:[%s1856 + $0xe2] sm:$0xff]
      %v1872 = vld [vmem:[%s1856 + $0xea] sm:$0xff]
      %v1873 = vld [vmem:[%s1856 + $0x102] sm:$0xff]
      %v1874 = vld [vmem:[%s1856 + $0x10a] sm:$0xff]
      %v1875 = vld [vmem:[%s1856 + $0x122] sm:$0xff]
      %v1876 = vld [vmem:[%s1856 + $0x12a] sm:$0xff]
      %v1877 = vld [vmem:[%s1856 + $0x142] sm:$0xff]
      %v1878 = vld [vmem:[%s1856 + $0x14a] sm:$0xff]
      %v1879 = vld [vmem:[%s1856 + $0x162] sm:$0xff]
      %v1880 = vld [vmem:[%s1856 + $0x16a] sm:$0xff]
      %v1881 = vld [vmem:[%s1856 + $0x182] sm:$0xff]
      %v1882 = vld [vmem:[%s1856 + $0x18a] sm:$0xff]
      %v1883 = vld [vmem:[%s1856 + $0x1a2] sm:$0xff]
      %v1884 = vld [vmem:[%s1856 + $0x1aa] sm:$0xff]
      %v1885 = vld [vmem:[%s1856 + $0x1c2] sm:$0xff]
      %v1886 = vld [vmem:[%s1856 + $0x1ca] sm:$0xff]
      %v1887 = vld [vmem:[%s1856 + $0x1e2] sm:$0xff]
      %v1888 = vld [vmem:[%s1856 + $0x1ea] sm:$0xff]
      %v1889 = vld [vmem:[%s1 + $0x18] sm:$0xf]
      %v1891 = vsel %vm317, %v1857, 0
      %v1894 = vsel %vm317, %v1858, 0
      %v1897 = vsel %vm317, %v1859, 0
      %v1900 = vsel %vm317, %v1860, 0
      %v1903 = vsel %vm317, %v1861, 0
      %v1906 = vsel %vm317, %v1862, 0
      %v1909 = vsel %vm317, %v1863, 0
      %v1912 = vsel %vm317, %v1864, 0
      %v1915 = vsel %vm317, %v1865, 0
      %v1918 = vsel %vm317, %v1866, 0
      %v1921 = vsel %vm317, %v1867, 0
      %v1924 = vsel %vm317, %v1868, 0
      %v1927 = vsel %vm317, %v1869, 0
      %v1930 = vsel %vm317, %v1870, 0
      %v1933 = vsel %vm317, %v1871, 0
      %v1936 = vsel %vm317, %v1872, 0
      %v1939 = vsel %vm317, %v1873, 0
      %v1942 = vsel %vm317, %v1874, 0
      %v1945 = vsel %vm317, %v1875, 0
      %v1948 = vsel %vm317, %v1876, 0
      %v1951 = vsel %vm317, %v1877, 0
      %v1954 = vsel %vm317, %v1878, 0
      %v1957 = vsel %vm317, %v1879, 0
      %v1960 = vsel %vm317, %v1880, 0
      %v1963 = vsel %vm317, %v1881, 0
      %v1966 = vsel %vm317, %v1882, 0
      %v1969 = vsel %vm317, %v1883, 0
      %v1972 = vsel %vm317, %v1884, 0
      %v1975 = vsel %vm317, %v1885, 0
      %v1978 = vsel %vm317, %v1886, 0
      %v1981 = vsel %vm317, %v1887, 0
      %v1984 = vsel %vm317, %v1888, 0
      %v1987 = vsel %vm414, %v1889, 0
      %1989 = vmatpush.msra.mxu0 0.0
      %1990 = vmatpush.msra.mxu0 0.0
      %1991 = vmatpush.msra.mxu0 0.0
      %1992 = vmatpush.msra.mxu0 0.0
      %1993 = vmatpush.msra.mxu0 0.0
      %1994 = vmatpush.msra.mxu0 0.0
      %1995 = vmatpush.msra.mxu0 0.0
      %1996 = vmatpush.msra.mxu0 0.0
      %1997 = vmatpush.msra.mxu0 0.0
      %1998 = vmatpush.msra.mxu0 0.0
      %1999 = vmatpush.msra.mxu0 0.0
      %2000 = vmatpush.msra.mxu0 0.0
      %2001 = vmatpush.msra.mxu0 0.0
      %2002 = vmatpush.msra.mxu0 0.0
      %2003 = vmatpush.msra.mxu0 0.0
      %2004 = vmatpush.msra.mxu0 %v1987
      %2005 = vmatmul.f32.gmra.mxu0 %v1891
      %v2006 = vpop.f32.mrf.mxu0
      %v2007 = vadd.f32 0.0, %v2006
      %2008 = vmatmul.f32.gmra.mxu0 %v1894
      %v2009 = vpop.f32.mrf.mxu0
      %v2010 = vadd.f32 0.0, %v2009
      %2011 = vmatmul.f32.gmra.mxu0 %v1897
      %v2012 = vpop.f32.mrf.mxu0
      %v2013 = vadd.f32 0.0, %v2012
      %2014 = vmatmul.f32.gmra.mxu0 %v1900
      %v2015 = vpop.f32.mrf.mxu0
      %v2016 = vadd.f32 0.0, %v2015
      %2017 = vmatmul.f32.gmra.mxu0 %v1903
      %v2018 = vpop.f32.mrf.mxu0
      %v2019 = vadd.f32 0.0, %v2018
      %2020 = vmatmul.f32.gmra.mxu0 %v1906
      %v2021 = vpop.f32.mrf.mxu0
      %v2022 = vadd.f32 0.0, %v2021
      %2023 = vmatmul.f32.gmra.mxu0 %v1909
      %v2024 = vpop.f32.mrf.mxu0
      %v2025 = vadd.f32 0.0, %v2024
      %2026 = vmatmul.f32.gmra.mxu0 %v1912
      %v2027 = vpop.f32.mrf.mxu0
      %v2028 = vadd.f32 0.0, %v2027
      %2029 = vmatmul.f32.gmra.mxu0 %v1915
      %v2030 = vpop.f32.mrf.mxu0
      %v2031 = vadd.f32 0.0, %v2030
      %2032 = vmatmul.f32.gmra.mxu0 %v1918
      %v2033 = vpop.f32.mrf.mxu0
      %v2034 = vadd.f32 0.0, %v2033
      %2035 = vmatmul.f32.gmra.mxu0 %v1921
      %v2036 = vpop.f32.mrf.mxu0
      %v2037 = vadd.f32 0.0, %v2036
      %2038 = vmatmul.f32.gmra.mxu0 %v1924
      %v2039 = vpop.f32.mrf.mxu0
      %v2040 = vadd.f32 0.0, %v2039
      %2041 = vmatmul.f32.gmra.mxu0 %v1927
      %v2042 = vpop.f32.mrf.mxu0
      %v2043 = vadd.f32 0.0, %v2042
      %2044 = vmatmul.f32.gmra.mxu0 %v1930
      %v2045 = vpop.f32.mrf.mxu0
      %v2046 = vadd.f32 0.0, %v2045
      %2047 = vmatmul.f32.gmra.mxu0 %v1933
      %v2048 = vpop.f32.mrf.mxu0
      %v2049 = vadd.f32 0.0, %v2048
      %2050 = vmatmul.f32.gmra.mxu0 %v1936
      %v2051 = vpop.f32.mrf.mxu0
      %v2052 = vadd.f32 0.0, %v2051
      %2053 = vmatmul.f32.gmra.mxu0 %v1939
      %v2054 = vpop.f32.mrf.mxu0
      %v2055 = vadd.f32 0.0, %v2054
      %2056 = vmatmul.f32.gmra.mxu0 %v1942
      %v2057 = vpop.f32.mrf.mxu0
      %v2058 = vadd.f32 0.0, %v2057
      %2059 = vmatmul.f32.gmra.mxu0 %v1945
      %v2060 = vpop.f32.mrf.mxu0
      %v2061 = vadd.f32 0.0, %v2060
      %2062 = vmatmul.f32.gmra.mxu0 %v1948
      %v2063 = vpop.f32.mrf.mxu0
      %v2064 = vadd.f32 0.0, %v2063
      %2065 = vmatmul.f32.gmra.mxu0 %v1951
      %v2066 = vpop.f32.mrf.mxu0
      %v2067 = vadd.f32 0.0, %v2066
      %2068 = vmatmul.f32.gmra.mxu0 %v1954
      %v2069 = vpop.f32.mrf.mxu0
      %v2070 = vadd.f32 0.0, %v2069
      %2071 = vmatmul.f32.gmra.mxu0 %v1957
      %v2072 = vpop.f32.mrf.mxu0
      %v2073 = vadd.f32 0.0, %v2072
      %2074 = vmatmul.f32.gmra.mxu0 %v1960
      %v2075 = vpop.f32.mrf.mxu0
      %v2076 = vadd.f32 0.0, %v2075
      %2077 = vmatmul.f32.gmra.mxu0 %v1963
      %v2078 = vpop.f32.mrf.mxu0
      %v2079 = vadd.f32 0.0, %v2078
      %2080 = vmatmul.f32.gmra.mxu0 %v1966
      %v2081 = vpop.f32.mrf.mxu0
      %v2082 = vadd.f32 0.0, %v2081
      %2083 = vmatmul.f32.gmra.mxu0 %v1969
      %v2084 = vpop.f32.mrf.mxu0
      %v2085 = vadd.f32 0.0, %v2084
      %2086 = vmatmul.f32.gmra.mxu0 %v1972
      %v2087 = vpop.f32.mrf.mxu0
      %v2088 = vadd.f32 0.0, %v2087
      %2089 = vmatmul.f32.gmra.mxu0 %v1975
      %v2090 = vpop.f32.mrf.mxu0
      %v2091 = vadd.f32 0.0, %v2090
      %2092 = vmatmul.f32.gmra.mxu0 %v1978
      %v2093 = vpop.f32.mrf.mxu0
      %v2094 = vadd.f32 0.0, %v2093
      %2095 = vmatmul.f32.gmra.mxu0 %v1981
      %v2096 = vpop.f32.mrf.mxu0
      %v2097 = vadd.f32 0.0, %v2096
      %2098 = vmatmul.f32.gmra.mxu0 %v1984
      %v2099 = vpop.f32.mrf.mxu0
      %v2100 = vadd.f32 0.0, %v2099
      %2101 = vdwg.mxu0
      %v2102 = vadd.f32 %v1822, %v2007
      %v2103 = vadd.f32 %v1823, %v2010
      %v2104 = vadd.f32 %v1824, %v2013
      %v2105 = vadd.f32 %v1825, %v2016
      %v2106 = vadd.f32 %v1826, %v2019
      %v2107 = vadd.f32 %v1827, %v2022
      %v2108 = vadd.f32 %v1828, %v2025
      %v2109 = vadd.f32 %v1829, %v2028
      %v2110 = vadd.f32 %v1830, %v2031
      %v2111 = vadd.f32 %v1831, %v2034
      %v2112 = vadd.f32 %v1832, %v2037
      %v2113 = vadd.f32 %v1833, %v2040
      %v2114 = vadd.f32 %v1834, %v2043
      %v2115 = vadd.f32 %v1835, %v2046
      %v2116 = vadd.f32 %v1836, %v2049
      %v2117 = vadd.f32 %v1837, %v2052
      %v2118 = vadd.f32 %v1838, %v2055
      %v2119 = vadd.f32 %v1839, %v2058
      %v2120 = vadd.f32 %v1840, %v2061
      %v2121 = vadd.f32 %v1841, %v2064
      %v2122 = vadd.f32 %v1842, %v2067
      %v2123 = vadd.f32 %v1843, %v2070
      %v2124 = vadd.f32 %v1844, %v2073
      %v2125 = vadd.f32 %v1845, %v2076
      %v2126 = vadd.f32 %v1846, %v2079
      %v2127 = vadd.f32 %v1847, %v2082
      %v2128 = vadd.f32 %v1848, %v2085
      %v2129 = vadd.f32 %v1849, %v2088
      %v2130 = vadd.f32 %v1850, %v2091
      %v2131 = vadd.f32 %v1851, %v2094
      %v2132 = vadd.f32 %v1852, %v2097
      %v2133 = vadd.f32 %v1853, %v2100
      %v2134 = vld [vmem:[%s1856 + $0x5] sm:$0xff]
      %v2135 = vld [vmem:[%s1856 + $0xd] sm:$0xff]
      %v2136 = vld [vmem:[%s1856 + $0x25] sm:$0xff]
      %v2137 = vld [vmem:[%s1856 + $0x2d] sm:$0xff]
      %v2138 = vld [vmem:[%s1856 + $0x45] sm:$0xff]
      %v2139 = vld [vmem:[%s1856 + $0x4d] sm:$0xff]
      %v2140 = vld [vmem:[%s1856 + $0x65] sm:$0xff]
      %v2141 = vld [vmem:[%s1856 + $0x6d] sm:$0xff]
      %v2142 = vld [vmem:[%s1856 + $0x85] sm:$0xff]
      %v2143 = vld [vmem:[%s1856 + $0x8d] sm:$0xff]
      %v2144 = vld [vmem:[%s1856 + $0xa5] sm:$0xff]
      %v2145 = vld [vmem:[%s1856 + $0xad] sm:$0xff]
      %v2146 = vld [vmem:[%s1856 + $0xc5] sm:$0xff]
      %v2147 = vld [vmem:[%s1856 + $0xcd] sm:$0xff]
      %v2148 = vld [vmem:[%s1856 + $0xe5] sm:$0xff]
      %v2149 = vld [vmem:[%s1856 + $0xed] sm:$0xff]
      %v2150 = vld [vmem:[%s1856 + $0x105] sm:$0xff]
      %v2151 = vld [vmem:[%s1856 + $0x10d] sm:$0xff]
      %v2152 = vld [vmem:[%s1856 + $0x125] sm:$0xff]
      %v2153 = vld [vmem:[%s1856 + $0x12d] sm:$0xff]
      %v2154 = vld [vmem:[%s1856 + $0x145] sm:$0xff]
      %v2155 = vld [vmem:[%s1856 + $0x14d] sm:$0xff]
      %v2156 = vld [vmem:[%s1856 + $0x165] sm:$0xff]
      %v2157 = vld [vmem:[%s1856 + $0x16d] sm:$0xff]
      %v2158 = vld [vmem:[%s1856 + $0x185] sm:$0xff]
      %v2159 = vld [vmem:[%s1856 + $0x18d] sm:$0xff]
      %v2160 = vld [vmem:[%s1856 + $0x1a5] sm:$0xff]
      %v2161 = vld [vmem:[%s1856 + $0x1ad] sm:$0xff]
      %v2162 = vld [vmem:[%s1856 + $0x1c5] sm:$0xff]
      %v2163 = vld [vmem:[%s1856 + $0x1cd] sm:$0xff]
      %v2164 = vld [vmem:[%s1856 + $0x1e5] sm:$0xff]
      %v2165 = vld [vmem:[%s1856 + $0x1ed] sm:$0xff]
      %v2166 = vld [vmem:[%s1 + $0x1c] sm:$0xf]
      %v2168 = vsel %vm317, %v2134, 0
      %v2171 = vsel %vm317, %v2135, 0
      %v2174 = vsel %vm317, %v2136, 0
      %v2177 = vsel %vm317, %v2137, 0
      %v2180 = vsel %vm317, %v2138, 0
      %v2183 = vsel %vm317, %v2139, 0
      %v2186 = vsel %vm317, %v2140, 0
      %v2189 = vsel %vm317, %v2141, 0
      %v2192 = vsel %vm317, %v2142, 0
      %v2195 = vsel %vm317, %v2143, 0
      %v2198 = vsel %vm317, %v2144, 0
      %v2201 = vsel %vm317, %v2145, 0
      %v2204 = vsel %vm317, %v2146, 0
      %v2207 = vsel %vm317, %v2147, 0
      %v2210 = vsel %vm317, %v2148, 0
      %v2213 = vsel %vm317, %v2149, 0
      %v2216 = vsel %vm317, %v2150, 0
      %v2219 = vsel %vm317, %v2151, 0
      %v2222 = vsel %vm317, %v2152, 0
      %v2225 = vsel %vm317, %v2153, 0
      %v2228 = vsel %vm317, %v2154, 0
      %v2231 = vsel %vm317, %v2155, 0
      %v2234 = vsel %vm317, %v2156, 0
      %v2237 = vsel %vm317, %v2157, 0
      %v2240 = vsel %vm317, %v2158, 0
      %v2243 = vsel %vm317, %v2159, 0
      %v2246 = vsel %vm317, %v2160, 0
      %v2249 = vsel %vm317, %v2161, 0
      %v2252 = vsel %vm317, %v2162, 0
      %v2255 = vsel %vm317, %v2163, 0
      %v2258 = vsel %vm317, %v2164, 0
      %v2261 = vsel %vm317, %v2165, 0
      %v2264 = vsel %vm414, %v2166, 0
      %2266 = vmatpush.msra.mxu0 0.0
      %2267 = vmatpush.msra.mxu0 0.0
      %2268 = vmatpush.msra.mxu0 0.0
      %2269 = vmatpush.msra.mxu0 0.0
      %2270 = vmatpush.msra.mxu0 0.0
      %2271 = vmatpush.msra.mxu0 0.0
      %2272 = vmatpush.msra.mxu0 0.0
      %2273 = vmatpush.msra.mxu0 0.0
      %2274 = vmatpush.msra.mxu0 0.0
      %2275 = vmatpush.msra.mxu0 0.0
      %2276 = vmatpush.msra.mxu0 0.0
      %2277 = vmatpush.msra.mxu0 0.0
      %2278 = vmatpush.msra.mxu0 0.0
      %2279 = vmatpush.msra.mxu0 0.0
      %2280 = vmatpush.msra.mxu0 0.0
      %2281 = vmatpush.msra.mxu0 %v2264
      %2282 = vmatmul.f32.gmra.mxu0 %v2168
      %v2283 = vpop.f32.mrf.mxu0
      %v2284 = vadd.f32 0.0, %v2283
      %2285 = vmatmul.f32.gmra.mxu0 %v2171
      %v2286 = vpop.f32.mrf.mxu0
      %v2287 = vadd.f32 0.0, %v2286
      %2288 = vmatmul.f32.gmra.mxu0 %v2174
      %v2289 = vpop.f32.mrf.mxu0
      %v2290 = vadd.f32 0.0, %v2289
      %2291 = vmatmul.f32.gmra.mxu0 %v2177
      %v2292 = vpop.f32.mrf.mxu0
      %v2293 = vadd.f32 0.0, %v2292
      %2294 = vmatmul.f32.gmra.mxu0 %v2180
      %v2295 = vpop.f32.mrf.mxu0
      %v2296 = vadd.f32 0.0, %v2295
      %2297 = vmatmul.f32.gmra.mxu0 %v2183
      %v2298 = vpop.f32.mrf.mxu0
      %v2299 = vadd.f32 0.0, %v2298
      %2300 = vmatmul.f32.gmra.mxu0 %v2186
      %v2301 = vpop.f32.mrf.mxu0
      %v2302 = vadd.f32 0.0, %v2301
      %2303 = vmatmul.f32.gmra.mxu0 %v2189
      %v2304 = vpop.f32.mrf.mxu0
      %v2305 = vadd.f32 0.0, %v2304
      %2306 = vmatmul.f32.gmra.mxu0 %v2192
      %v2307 = vpop.f32.mrf.mxu0
      %v2308 = vadd.f32 0.0, %v2307
      %2309 = vmatmul.f32.gmra.mxu0 %v2195
      %v2310 = vpop.f32.mrf.mxu0
      %v2311 = vadd.f32 0.0, %v2310
      %2312 = vmatmul.f32.gmra.mxu0 %v2198
      %v2313 = vpop.f32.mrf.mxu0
      %v2314 = vadd.f32 0.0, %v2313
      %2315 = vmatmul.f32.gmra.mxu0 %v2201
      %v2316 = vpop.f32.mrf.mxu0
      %v2317 = vadd.f32 0.0, %v2316
      %2318 = vmatmul.f32.gmra.mxu0 %v2204
      %v2319 = vpop.f32.mrf.mxu0
      %v2320 = vadd.f32 0.0, %v2319
      %2321 = vmatmul.f32.gmra.mxu0 %v2207
      %v2322 = vpop.f32.mrf.mxu0
      %v2323 = vadd.f32 0.0, %v2322
      %2324 = vmatmul.f32.gmra.mxu0 %v2210
      %v2325 = vpop.f32.mrf.mxu0
      %v2326 = vadd.f32 0.0, %v2325
      %2327 = vmatmul.f32.gmra.mxu0 %v2213
      %v2328 = vpop.f32.mrf.mxu0
      %v2329 = vadd.f32 0.0, %v2328
      %2330 = vmatmul.f32.gmra.mxu0 %v2216
      %v2331 = vpop.f32.mrf.mxu0
      %v2332 = vadd.f32 0.0, %v2331
      %2333 = vmatmul.f32.gmra.mxu0 %v2219
      %v2334 = vpop.f32.mrf.mxu0
      %v2335 = vadd.f32 0.0, %v2334
      %2336 = vmatmul.f32.gmra.mxu0 %v2222
      %v2337 = vpop.f32.mrf.mxu0
      %v2338 = vadd.f32 0.0, %v2337
      %2339 = vmatmul.f32.gmra.mxu0 %v2225
      %v2340 = vpop.f32.mrf.mxu0
      %v2341 = vadd.f32 0.0, %v2340
      %2342 = vmatmul.f32.gmra.mxu0 %v2228
      %v2343 = vpop.f32.mrf.mxu0
      %v2344 = vadd.f32 0.0, %v2343
      %2345 = vmatmul.f32.gmra.mxu0 %v2231
      %v2346 = vpop.f32.mrf.mxu0
      %v2347 = vadd.f32 0.0, %v2346
      %2348 = vmatmul.f32.gmra.mxu0 %v2234
      %v2349 = vpop.f32.mrf.mxu0
      %v2350 = vadd.f32 0.0, %v2349
      %2351 = vmatmul.f32.gmra.mxu0 %v2237
      %v2352 = vpop.f32.mrf.mxu0
      %v2353 = vadd.f32 0.0, %v2352
      %2354 = vmatmul.f32.gmra.mxu0 %v2240
      %v2355 = vpop.f32.mrf.mxu0
      %v2356 = vadd.f32 0.0, %v2355
      %2357 = vmatmul.f32.gmra.mxu0 %v2243
      %v2358 = vpop.f32.mrf.mxu0
      %v2359 = vadd.f32 0.0, %v2358
      %2360 = vmatmul.f32.gmra.mxu0 %v2246
      %v2361 = vpop.f32.mrf.mxu0
      %v2362 = vadd.f32 0.0, %v2361
      %2363 = vmatmul.f32.gmra.mxu0 %v2249
      %v2364 = vpop.f32.mrf.mxu0
      %v2365 = vadd.f32 0.0, %v2364
      %2366 = vmatmul.f32.gmra.mxu0 %v2252
      %v2367 = vpop.f32.mrf.mxu0
      %v2368 = vadd.f32 0.0, %v2367
      %2369 = vmatmul.f32.gmra.mxu0 %v2255
      %v2370 = vpop.f32.mrf.mxu0
      %v2371 = vadd.f32 0.0, %v2370
      %2372 = vmatmul.f32.gmra.mxu0 %v2258
      %v2373 = vpop.f32.mrf.mxu0
      %v2374 = vadd.f32 0.0, %v2373
      %2375 = vmatmul.f32.gmra.mxu0 %v2261
      %v2376 = vpop.f32.mrf.mxu0
      %v2377 = vadd.f32 0.0, %v2376
      %2378 = vdwg.mxu0
      %v2379 = vadd.f32 %v2102, %v2284
      %v2380 = vadd.f32 %v2103, %v2287
      %v2381 = vadd.f32 %v2104, %v2290
      %v2382 = vadd.f32 %v2105, %v2293
      %v2383 = vadd.f32 %v2106, %v2296
      %v2384 = vadd.f32 %v2107, %v2299
      %v2385 = vadd.f32 %v2108, %v2302
      %v2386 = vadd.f32 %v2109, %v2305
      %v2387 = vadd.f32 %v2110, %v2308
      %v2388 = vadd.f32 %v2111, %v2311
      %v2389 = vadd.f32 %v2112, %v2314
      %v2390 = vadd.f32 %v2113, %v2317
      %v2391 = vadd.f32 %v2114, %v2320
      %v2392 = vadd.f32 %v2115, %v2323
      %v2393 = vadd.f32 %v2116, %v2326
      %v2394 = vadd.f32 %v2117, %v2329
      %v2395 = vadd.f32 %v2118, %v2332
      %v2396 = vadd.f32 %v2119, %v2335
      %v2397 = vadd.f32 %v2120, %v2338
      %v2398 = vadd.f32 %v2121, %v2341
      %v2399 = vadd.f32 %v2122, %v2344
      %v2400 = vadd.f32 %v2123, %v2347
      %v2401 = vadd.f32 %v2124, %v2350
      %v2402 = vadd.f32 %v2125, %v2353
      %v2403 = vadd.f32 %v2126, %v2356
      %v2404 = vadd.f32 %v2127, %v2359
      %v2405 = vadd.f32 %v2128, %v2362
      %v2406 = vadd.f32 %v2129, %v2365
      %v2407 = vadd.f32 %v2130, %v2368
      %v2408 = vadd.f32 %v2131, %v2371
      %v2409 = vadd.f32 %v2132, %v2374
      %v2410 = vadd.f32 %v2133, %v2377
      %v2411 = vld [vmem:[%s1856 + $0x8] sm:$0xff]
      %v2412 = vld [vmem:[%s1856 + $0x10] sm:$0xff]
      %v2413 = vld [vmem:[%s1856 + $0x28] sm:$0xff]
      %v2414 = vld [vmem:[%s1856 + $0x30] sm:$0xff]
      %v2415 = vld [vmem:[%s1856 + $0x48] sm:$0xff]
      %v2416 = vld [vmem:[%s1856 + $0x50] sm:$0xff]
      %v2417 = vld [vmem:[%s1856 + $0x68] sm:$0xff]
      %v2418 = vld [vmem:[%s1856 + $0x70] sm:$0xff]
      %v2419 = vld [vmem:[%s1856 + $0x88] sm:$0xff]
      %v2420 = vld [vmem:[%s1856 + $0x90] sm:$0xff]
      %v2421 = vld [vmem:[%s1856 + $0xa8] sm:$0xff]
      %v2422 = vld [vmem:[%s1856 + $0xb0] sm:$0xff]
      %v2423 = vld [vmem:[%s1856 + $0xc8] sm:$0xff]
      %v2424 = vld [vmem:[%s1856 + $0xd0] sm:$0xff]
      %v2425 = vld [vmem:[%s1856 + $0xe8] sm:$0xff]
      %v2426 = vld [vmem:[%s1856 + $0xf0] sm:$0xff]
      %v2427 = vld [vmem:[%s1856 + $0x108] sm:$0xff]
      %v2428 = vld [vmem:[%s1856 + $0x110] sm:$0xff]
      %v2429 = vld [vmem:[%s1856 + $0x128] sm:$0xff]
      %v2430 = vld [vmem:[%s1856 + $0x130] sm:$0xff]
      %v2431 = vld [vmem:[%s1856 + $0x148] sm:$0xff]
      %v2432 = vld [vmem:[%s1856 + $0x150] sm:$0xff]
      %v2433 = vld [vmem:[%s1856 + $0x168] sm:$0xff]
      %v2434 = vld [vmem:[%s1856 + $0x170] sm:$0xff]
      %v2435 = vld [vmem:[%s1856 + $0x188] sm:$0xff]
      %v2436 = vld [vmem:[%s1856 + $0x190] sm:$0xff]
      %v2437 = vld [vmem:[%s1856 + $0x1a8] sm:$0xff]
      %v2438 = vld [vmem:[%s1856 + $0x1b0] sm:$0xff]
      %v2439 = vld [vmem:[%s1856 + $0x1c8] sm:$0xff]
      %v2440 = vld [vmem:[%s1856 + $0x1d0] sm:$0xff]
      %v2441 = vld [vmem:[%s1856 + $0x1e8] sm:$0xff]
      %v2442 = vld [vmem:[%s1856 + $0x1f0] sm:$0xff]
      %v2443 = vld [vmem:[%s1 + $0x20] sm:$0xf]
      %v2445 = vsel %vm317, %v2411, 0
      %v2448 = vsel %vm317, %v2412, 0
      %v2451 = vsel %vm317, %v2413, 0
      %v2454 = vsel %vm317, %v2414, 0
      %v2457 = vsel %vm317, %v2415, 0
      %v2460 = vsel %vm317, %v2416, 0
      %v2463 = vsel %vm317, %v2417, 0
      %v2466 = vsel %vm317, %v2418, 0
      %v2469 = vsel %vm317, %v2419, 0
      %v2472 = vsel %vm317, %v2420, 0
      %v2475 = vsel %vm317, %v2421, 0
      %v2478 = vsel %vm317, %v2422, 0
      %v2481 = vsel %vm317, %v2423, 0
      %v2484 = vsel %vm317, %v2424, 0
      %v2487 = vsel %vm317, %v2425, 0
      %v2490 = vsel %vm317, %v2426, 0
      %v2493 = vsel %vm317, %v2427, 0
      %v2496 = vsel %vm317, %v2428, 0
      %v2499 = vsel %vm317, %v2429, 0
      %v2502 = vsel %vm317, %v2430, 0
      %v2505 = vsel %vm317, %v2431, 0
      %v2508 = vsel %vm317, %v2432, 0
      %v2511 = vsel %vm317, %v2433, 0
      %v2514 = vsel %vm317, %v2434, 0
      %v2517 = vsel %vm317, %v2435, 0
      %v2520 = vsel %vm317, %v2436, 0
      %v2523 = vsel %vm317, %v2437, 0
      %v2526 = vsel %vm317, %v2438, 0
      %v2529 = vsel %vm317, %v2439, 0
      %v2532 = vsel %vm317, %v2440, 0
      %v2535 = vsel %vm317, %v2441, 0
      %v2538 = vsel %vm317, %v2442, 0
      %v2541 = vsel %vm414, %v2443, 0
      %2543 = vmatpush.msra.mxu0 0.0
      %2544 = vmatpush.msra.mxu0 0.0
      %2545 = vmatpush.msra.mxu0 0.0
      %2546 = vmatpush.msra.mxu0 0.0
      %2547 = vmatpush.msra.mxu0 0.0
      %2548 = vmatpush.msra.mxu0 0.0
      %2549 = vmatpush.msra.mxu0 0.0
      %2550 = vmatpush.msra.mxu0 0.0
      %2551 = vmatpush.msra.mxu0 0.0
      %2552 = vmatpush.msra.mxu0 0.0
      %2553 = vmatpush.msra.mxu0 0.0
      %2554 = vmatpush.msra.mxu0 0.0
      %2555 = vmatpush.msra.mxu0 0.0
      %2556 = vmatpush.msra.mxu0 0.0
      %2557 = vmatpush.msra.mxu0 0.0
      %2558 = vmatpush.msra.mxu0 %v2541
      %2559 = vmatmul.f32.gmra.mxu0 %v2445
      %v2560 = vpop.f32.mrf.mxu0
      %v2561 = vadd.f32 0.0, %v2560
      %2562 = vmatmul.f32.gmra.mxu0 %v2448
      %v2563 = vpop.f32.mrf.mxu0
      %v2564 = vadd.f32 0.0, %v2563
      %2565 = vmatmul.f32.gmra.mxu0 %v2451
      %v2566 = vpop.f32.mrf.mxu0
      %v2567 = vadd.f32 0.0, %v2566
      %2568 = vmatmul.f32.gmra.mxu0 %v2454
      %v2569 = vpop.f32.mrf.mxu0
      %v2570 = vadd.f32 0.0, %v2569
      %2571 = vmatmul.f32.gmra.mxu0 %v2457
      %v2572 = vpop.f32.mrf.mxu0
      %v2573 = vadd.f32 0.0, %v2572
      %2574 = vmatmul.f32.gmra.mxu0 %v2460
      %v2575 = vpop.f32.mrf.mxu0
      %v2576 = vadd.f32 0.0, %v2575
      %2577 = vmatmul.f32.gmra.mxu0 %v2463
      %v2578 = vpop.f32.mrf.mxu0
      %v2579 = vadd.f32 0.0, %v2578
      %2580 = vmatmul.f32.gmra.mxu0 %v2466
      %v2581 = vpop.f32.mrf.mxu0
      %v2582 = vadd.f32 0.0, %v2581
      %2583 = vmatmul.f32.gmra.mxu0 %v2469
      %v2584 = vpop.f32.mrf.mxu0
      %v2585 = vadd.f32 0.0, %v2584
      %2586 = vmatmul.f32.gmra.mxu0 %v2472
      %v2587 = vpop.f32.mrf.mxu0
      %v2588 = vadd.f32 0.0, %v2587
      %2589 = vmatmul.f32.gmra.mxu0 %v2475
      %v2590 = vpop.f32.mrf.mxu0
      %v2591 = vadd.f32 0.0, %v2590
      %2592 = vmatmul.f32.gmra.mxu0 %v2478
      %v2593 = vpop.f32.mrf.mxu0
      %v2594 = vadd.f32 0.0, %v2593
      %2595 = vmatmul.f32.gmra.mxu0 %v2481
      %v2596 = vpop.f32.mrf.mxu0
      %v2597 = vadd.f32 0.0, %v2596
      %2598 = vmatmul.f32.gmra.mxu0 %v2484
      %v2599 = vpop.f32.mrf.mxu0
      %v2600 = vadd.f32 0.0, %v2599
      %2601 = vmatmul.f32.gmra.mxu0 %v2487
      %v2602 = vpop.f32.mrf.mxu0
      %v2603 = vadd.f32 0.0, %v2602
      %2604 = vmatmul.f32.gmra.mxu0 %v2490
      %v2605 = vpop.f32.mrf.mxu0
      %v2606 = vadd.f32 0.0, %v2605
      %2607 = vmatmul.f32.gmra.mxu0 %v2493
      %v2608 = vpop.f32.mrf.mxu0
      %v2609 = vadd.f32 0.0, %v2608
      %2610 = vmatmul.f32.gmra.mxu0 %v2496
      %v2611 = vpop.f32.mrf.mxu0
      %v2612 = vadd.f32 0.0, %v2611
      %2613 = vmatmul.f32.gmra.mxu0 %v2499
      %v2614 = vpop.f32.mrf.mxu0
      %v2615 = vadd.f32 0.0, %v2614
      %2616 = vmatmul.f32.gmra.mxu0 %v2502
      %v2617 = vpop.f32.mrf.mxu0
      %v2618 = vadd.f32 0.0, %v2617
      %2619 = vmatmul.f32.gmra.mxu0 %v2505
      %v2620 = vpop.f32.mrf.mxu0
      %v2621 = vadd.f32 0.0, %v2620
      %2622 = vmatmul.f32.gmra.mxu0 %v2508
      %v2623 = vpop.f32.mrf.mxu0
      %v2624 = vadd.f32 0.0, %v2623
      %2625 = vmatmul.f32.gmra.mxu0 %v2511
      %v2626 = vpop.f32.mrf.mxu0
      %v2627 = vadd.f32 0.0, %v2626
      %2628 = vmatmul.f32.gmra.mxu0 %v2514
      %v2629 = vpop.f32.mrf.mxu0
      %v2630 = vadd.f32 0.0, %v2629
      %2631 = vmatmul.f32.gmra.mxu0 %v2517
      %v2632 = vpop.f32.mrf.mxu0
      %v2633 = vadd.f32 0.0, %v2632
      %2634 = vmatmul.f32.gmra.mxu0 %v2520
      %v2635 = vpop.f32.mrf.mxu0
      %v2636 = vadd.f32 0.0, %v2635
      %2637 = vmatmul.f32.gmra.mxu0 %v2523
      %v2638 = vpop.f32.mrf.mxu0
      %v2639 = vadd.f32 0.0, %v2638
      %2640 = vmatmul.f32.gmra.mxu0 %v2526
      %v2641 = vpop.f32.mrf.mxu0
      %v2642 = vadd.f32 0.0, %v2641
      %2643 = vmatmul.f32.gmra.mxu0 %v2529
      %v2644 = vpop.f32.mrf.mxu0
      %v2645 = vadd.f32 0.0, %v2644
      %2646 = vmatmul.f32.gmra.mxu0 %v2532
      %v2647 = vpop.f32.mrf.mxu0
      %v2648 = vadd.f32 0.0, %v2647
      %2649 = vmatmul.f32.gmra.mxu0 %v2535
      %v2650 = vpop.f32.mrf.mxu0
      %v2651 = vadd.f32 0.0, %v2650
      %2652 = vmatmul.f32.gmra.mxu0 %v2538
      %v2653 = vpop.f32.mrf.mxu0
      %v2654 = vadd.f32 0.0, %v2653
      %2655 = vdwg.mxu0
      %v2656 = vadd.f32 %v2379, %v2561
      %v2657 = vadd.f32 %v2380, %v2564
      %v2658 = vadd.f32 %v2381, %v2567
      %v2659 = vadd.f32 %v2382, %v2570
      %v2660 = vadd.f32 %v2383, %v2573
      %v2661 = vadd.f32 %v2384, %v2576
      %v2662 = vadd.f32 %v2385, %v2579
      %v2663 = vadd.f32 %v2386, %v2582
      %v2664 = vadd.f32 %v2387, %v2585
      %v2665 = vadd.f32 %v2388, %v2588
      %v2666 = vadd.f32 %v2389, %v2591
      %v2667 = vadd.f32 %v2390, %v2594
      %v2668 = vadd.f32 %v2391, %v2597
      %v2669 = vadd.f32 %v2392, %v2600
      %v2670 = vadd.f32 %v2393, %v2603
      %v2671 = vadd.f32 %v2394, %v2606
      %v2672 = vadd.f32 %v2395, %v2609
      %v2673 = vadd.f32 %v2396, %v2612
      %v2674 = vadd.f32 %v2397, %v2615
      %v2675 = vadd.f32 %v2398, %v2618
      %v2676 = vadd.f32 %v2399, %v2621
      %v2677 = vadd.f32 %v2400, %v2624
      %v2678 = vadd.f32 %v2401, %v2627
      %v2679 = vadd.f32 %v2402, %v2630
      %v2680 = vadd.f32 %v2403, %v2633
      %v2681 = vadd.f32 %v2404, %v2636
      %v2682 = vadd.f32 %v2405, %v2639
      %v2683 = vadd.f32 %v2406, %v2642
      %v2684 = vadd.f32 %v2407, %v2645
      %v2685 = vadd.f32 %v2408, %v2648
      %v2686 = vadd.f32 %v2409, %v2651
      %v2687 = vadd.f32 %v2410, %v2654
      %v2688 = vld [vmem:[%s4] sm:$0x1]
      %v2689 = vperm.slane %v2688, 0
      %v2690 = vadd.f32 %v2656, %v2689
      %v2691 = vadd.f32 %v2657, %v2689
      %v2692 = vadd.f32 %v2658, %v2689
      %v2693 = vadd.f32 %v2659, %v2689
      %v2694 = vadd.f32 %v2660, %v2689
      %v2695 = vadd.f32 %v2661, %v2689
      %v2696 = vadd.f32 %v2662, %v2689
      %v2697 = vadd.f32 %v2663, %v2689
      %v2698 = vadd.f32 %v2664, %v2689
      %v2699 = vadd.f32 %v2665, %v2689
      %v2700 = vadd.f32 %v2666, %v2689
      %v2701 = vadd.f32 %v2667, %v2689
      %v2702 = vadd.f32 %v2668, %v2689
      %v2703 = vadd.f32 %v2669, %v2689
      %v2704 = vadd.f32 %v2670, %v2689
      %v2705 = vadd.f32 %v2671, %v2689
      %v2706 = vadd.f32 %v2672, %v2689
      %v2707 = vadd.f32 %v2673, %v2689
      %v2708 = vadd.f32 %v2674, %v2689
      %v2709 = vadd.f32 %v2675, %v2689
      %v2710 = vadd.f32 %v2676, %v2689
      %v2711 = vadd.f32 %v2677, %v2689
      %v2712 = vadd.f32 %v2678, %v2689
      %v2713 = vadd.f32 %v2679, %v2689
      %v2714 = vadd.f32 %v2680, %v2689
      %v2715 = vadd.f32 %v2681, %v2689
      %v2716 = vadd.f32 %v2682, %v2689
      %v2717 = vadd.f32 %v2683, %v2689
      %v2718 = vadd.f32 %v2684, %v2689
      %v2719 = vadd.f32 %v2685, %v2689
      %v2720 = vadd.f32 %v2686, %v2689
      %v2721 = vadd.f32 %v2687, %v2689
      %v2722 = vmax.f32 %v2690, 0.0
      %v2723 = vmax.f32 %v2691, 0.0
      %v2724 = vmax.f32 %v2692, 0.0
      %v2725 = vmax.f32 %v2693, 0.0
      %v2726 = vmax.f32 %v2694, 0.0
      %v2727 = vmax.f32 %v2695, 0.0
      %v2728 = vmax.f32 %v2696, 0.0
      %v2729 = vmax.f32 %v2697, 0.0
      %v2730 = vmax.f32 %v2698, 0.0
      %v2731 = vmax.f32 %v2699, 0.0
      %v2732 = vmax.f32 %v2700, 0.0
      %v2733 = vmax.f32 %v2701, 0.0
      %v2734 = vmax.f32 %v2702, 0.0
      %v2735 = vmax.f32 %v2703, 0.0
      %v2736 = vmax.f32 %v2704, 0.0
      %v2737 = vmax.f32 %v2705, 0.0
      %v2738 = vmax.f32 %v2706, 0.0
      %v2739 = vmax.f32 %v2707, 0.0
      %v2740 = vmax.f32 %v2708, 0.0
      %v2741 = vmax.f32 %v2709, 0.0
      %v2742 = vmax.f32 %v2710, 0.0
      %v2743 = vmax.f32 %v2711, 0.0
      %v2744 = vmax.f32 %v2712, 0.0
      %v2745 = vmax.f32 %v2713, 0.0
      %v2746 = vmax.f32 %v2714, 0.0
      %v2747 = vmax.f32 %v2715, 0.0
      %v2748 = vmax.f32 %v2716, 0.0
      %v2749 = vmax.f32 %v2717, 0.0
      %v2750 = vmax.f32 %v2718, 0.0
      %v2751 = vmax.f32 %v2719, 0.0
      %v2752 = vmax.f32 %v2720, 0.0
      %v2753 = vmax.f32 %v2721, 0.0
      %s2754 = smul.u32 %s247, 32
      %s2755 = scalar_lea.vmem %s237, %s2754
      %v2756 = vld [vmem:[%s2755] sm:$0xff]
      %v2757 = vld [vmem:[%s2755 + $0x8] sm:$0xff]
      %v2758 = vld [vmem:[%s2755 + $0x20] sm:$0xff]
      %v2759 = vld [vmem:[%s2755 + $0x28] sm:$0xff]
      %v2760 = vld [vmem:[%s2755 + $0x40] sm:$0xff]
      %v2761 = vld [vmem:[%s2755 + $0x48] sm:$0xff]
      %v2762 = vld [vmem:[%s2755 + $0x60] sm:$0xff]
      %v2763 = vld [vmem:[%s2755 + $0x68] sm:$0xff]
      %v2764 = vld [vmem:[%s2755 + $0x80] sm:$0xff]
      %v2765 = vld [vmem:[%s2755 + $0x88] sm:$0xff]
      %v2766 = vld [vmem:[%s2755 + $0xa0] sm:$0xff]
      %v2767 = vld [vmem:[%s2755 + $0xa8] sm:$0xff]
      %v2768 = vld [vmem:[%s2755 + $0xc0] sm:$0xff]
      %v2769 = vld [vmem:[%s2755 + $0xc8] sm:$0xff]
      %v2770 = vld [vmem:[%s2755 + $0xe0] sm:$0xff]
      %v2771 = vld [vmem:[%s2755 + $0xe8] sm:$0xff]
      %v2772 = vld [vmem:[%s2755 + $0x100] sm:$0xff]
      %v2773 = vld [vmem:[%s2755 + $0x108] sm:$0xff]
      %v2774 = vld [vmem:[%s2755 + $0x120] sm:$0xff]
      %v2775 = vld [vmem:[%s2755 + $0x128] sm:$0xff]
      %v2776 = vld [vmem:[%s2755 + $0x140] sm:$0xff]
      %v2777 = vld [vmem:[%s2755 + $0x148] sm:$0xff]
      %v2778 = vld [vmem:[%s2755 + $0x160] sm:$0xff]
      %v2779 = vld [vmem:[%s2755 + $0x168] sm:$0xff]
      %v2780 = vld [vmem:[%s2755 + $0x180] sm:$0xff]
      %v2781 = vld [vmem:[%s2755 + $0x188] sm:$0xff]
      %v2782 = vld [vmem:[%s2755 + $0x1a0] sm:$0xff]
      %v2783 = vld [vmem:[%s2755 + $0x1a8] sm:$0xff]
      %v2784 = vld [vmem:[%s2755 + $0x1c0] sm:$0xff]
      %v2785 = vld [vmem:[%s2755 + $0x1c8] sm:$0xff]
      %v2786 = vld [vmem:[%s2755 + $0x1e0] sm:$0xff]
      %v2787 = vld [vmem:[%s2755 + $0x1e8] sm:$0xff]
      %v2788 = vld [vmem:[%s2] sm:$0xf]
      %v2789 = vld [vmem:[%s2755 + $0x5] sm:$0xff]
      %v2790 = vld [vmem:[%s2755 + $0xd] sm:$0xff]
      %v2791 = vld [vmem:[%s2755 + $0x25] sm:$0xff]
      %v2792 = vld [vmem:[%s2755 + $0x2d] sm:$0xff]
      %v2793 = vld [vmem:[%s2755 + $0x45] sm:$0xff]
      %v2794 = vld [vmem:[%s2755 + $0x4d] sm:$0xff]
      %v2795 = vld [vmem:[%s2755 + $0x65] sm:$0xff]
      %v2796 = vld [vmem:[%s2755 + $0x6d] sm:$0xff]
      %v2797 = vld [vmem:[%s2755 + $0x85] sm:$0xff]
      %v2798 = vld [vmem:[%s2755 + $0x8d] sm:$0xff]
      %v2799 = vld [vmem:[%s2755 + $0xa5] sm:$0xff]
      %v2800 = vld [vmem:[%s2755 + $0xad] sm:$0xff]
      %v2801 = vld [vmem:[%s2755 + $0xc5] sm:$0xff]
      %v2802 = vld [vmem:[%s2755 + $0xcd] sm:$0xff]
      %v2803 = vld [vmem:[%s2755 + $0xe5] sm:$0xff]
      %v2804 = vld [vmem:[%s2755 + $0xed] sm:$0xff]
      %v2805 = vld [vmem:[%s2755 + $0x105] sm:$0xff]
      %v2806 = vld [vmem:[%s2755 + $0x10d] sm:$0xff]
      %v2807 = vld [vmem:[%s2755 + $0x125] sm:$0xff]
      %v2808 = vld [vmem:[%s2755 + $0x12d] sm:$0xff]
      %v2809 = vld [vmem:[%s2755 + $0x145] sm:$0xff]
      %v2810 = vld [vmem:[%s2755 + $0x14d] sm:$0xff]
      %v2811 = vld [vmem:[%s2755 + $0x165] sm:$0xff]
      %v2812 = vld [vmem:[%s2755 + $0x16d] sm:$0xff]
      %v2813 = vld [vmem:[%s2755 + $0x185] sm:$0xff]
      %v2814 = vld [vmem:[%s2755 + $0x18d] sm:$0xff]
      %v2815 = vld [vmem:[%s2755 + $0x1a5] sm:$0xff]
      %v2816 = vld [vmem:[%s2755 + $0x1ad] sm:$0xff]
      %v2817 = vld [vmem:[%s2755 + $0x1c5] sm:$0xff]
      %v2818 = vld [vmem:[%s2755 + $0x1cd] sm:$0xff]
      %v2819 = vld [vmem:[%s2755 + $0x1e5] sm:$0xff]
      %v2820 = vld [vmem:[%s2755 + $0x1ed] sm:$0xff]
      %v2821 = vld [vmem:[%s2 + $0x4] sm:$0xf]
      %v2823 = vsel %vm317, %v2789, 0
      %v2826 = vsel %vm317, %v2790, 0
      %v2829 = vsel %vm317, %v2791, 0
      %v2832 = vsel %vm317, %v2792, 0
      %v2835 = vsel %vm317, %v2793, 0
      %v2838 = vsel %vm317, %v2794, 0
      %v2841 = vsel %vm317, %v2795, 0
      %v2844 = vsel %vm317, %v2796, 0
      %v2847 = vsel %vm317, %v2797, 0
      %v2850 = vsel %vm317, %v2798, 0
      %v2853 = vsel %vm317, %v2799, 0
      %v2856 = vsel %vm317, %v2800, 0
      %v2859 = vsel %vm317, %v2801, 0
      %v2862 = vsel %vm317, %v2802, 0
      %v2865 = vsel %vm317, %v2803, 0
      %v2868 = vsel %vm317, %v2804, 0
      %v2871 = vsel %vm317, %v2805, 0
      %v2874 = vsel %vm317, %v2806, 0
      %v2877 = vsel %vm317, %v2807, 0
      %v2880 = vsel %vm317, %v2808, 0
      %v2883 = vsel %vm317, %v2809, 0
      %v2886 = vsel %vm317, %v2810, 0
      %v2889 = vsel %vm317, %v2811, 0
      %v2892 = vsel %vm317, %v2812, 0
      %v2895 = vsel %vm317, %v2813, 0
      %v2898 = vsel %vm317, %v2814, 0
      %v2901 = vsel %vm317, %v2815, 0
      %v2904 = vsel %vm317, %v2816, 0
      %v2907 = vsel %vm317, %v2817, 0
      %v2910 = vsel %vm317, %v2818, 0
      %v2913 = vsel %vm317, %v2819, 0
      %v2916 = vsel %vm317, %v2820, 0
      %v2919 = vsel %vm414, %v2821, 0
      %2921 = vmatpush.msra.mxu0 0.0
      %2922 = vmatpush.msra.mxu0 0.0
      %2923 = vmatpush.msra.mxu0 0.0
      %2924 = vmatpush.msra.mxu0 0.0
      %2925 = vmatpush.msra.mxu0 0.0
      %2926 = vmatpush.msra.mxu0 0.0
      %2927 = vmatpush.msra.mxu0 0.0
      %2928 = vmatpush.msra.mxu0 0.0
      %2929 = vmatpush.msra.mxu0 0.0
      %2930 = vmatpush.msra.mxu0 0.0
      %2931 = vmatpush.msra.mxu0 0.0
      %2932 = vmatpush.msra.mxu0 0.0
      %2933 = vmatpush.msra.mxu0 0.0
      %2934 = vmatpush.msra.mxu0 0.0
      %2935 = vmatpush.msra.mxu0 0.0
      %2936 = vmatpush.msra.mxu0 %v2919
      %2937 = vmatmul.f32.gmra.mxu0 %v2823
      %v2938 = vpop.f32.mrf.mxu0
      %v2939 = vadd.f32 0.0, %v2938
      %2940 = vmatmul.f32.gmra.mxu0 %v2826
      %v2941 = vpop.f32.mrf.mxu0
      %v2942 = vadd.f32 0.0, %v2941
      %2943 = vmatmul.f32.gmra.mxu0 %v2829
      %v2944 = vpop.f32.mrf.mxu0
      %v2945 = vadd.f32 0.0, %v2944
      %2946 = vmatmul.f32.gmra.mxu0 %v2832
      %v2947 = vpop.f32.mrf.mxu0
      %v2948 = vadd.f32 0.0, %v2947
      %2949 = vmatmul.f32.gmra.mxu0 %v2835
      %v2950 = vpop.f32.mrf.mxu0
      %v2951 = vadd.f32 0.0, %v2950
      %2952 = vmatmul.f32.gmra.mxu0 %v2838
      %v2953 = vpop.f32.mrf.mxu0
      %v2954 = vadd.f32 0.0, %v2953
      %2955 = vmatmul.f32.gmra.mxu0 %v2841
      %v2956 = vpop.f32.mrf.mxu0
      %v2957 = vadd.f32 0.0, %v2956
      %2958 = vmatmul.f32.gmra.mxu0 %v2844
      %v2959 = vpop.f32.mrf.mxu0
      %v2960 = vadd.f32 0.0, %v2959
      %2961 = vmatmul.f32.gmra.mxu0 %v2847
      %v2962 = vpop.f32.mrf.mxu0
      %v2963 = vadd.f32 0.0, %v2962
      %2964 = vmatmul.f32.gmra.mxu0 %v2850
      %v2965 = vpop.f32.mrf.mxu0
      %v2966 = vadd.f32 0.0, %v2965
      %2967 = vmatmul.f32.gmra.mxu0 %v2853
      %v2968 = vpop.f32.mrf.mxu0
      %v2969 = vadd.f32 0.0, %v2968
      %2970 = vmatmul.f32.gmra.mxu0 %v2856
      %v2971 = vpop.f32.mrf.mxu0
      %v2972 = vadd.f32 0.0, %v2971
      %2973 = vmatmul.f32.gmra.mxu0 %v2859
      %v2974 = vpop.f32.mrf.mxu0
      %v2975 = vadd.f32 0.0, %v2974
      %2976 = vmatmul.f32.gmra.mxu0 %v2862
      %v2977 = vpop.f32.mrf.mxu0
      %v2978 = vadd.f32 0.0, %v2977
      %2979 = vmatmul.f32.gmra.mxu0 %v2865
      %v2980 = vpop.f32.mrf.mxu0
      %v2981 = vadd.f32 0.0, %v2980
      %2982 = vmatmul.f32.gmra.mxu0 %v2868
      %v2983 = vpop.f32.mrf.mxu0
      %v2984 = vadd.f32 0.0, %v2983
      %2985 = vmatmul.f32.gmra.mxu0 %v2871
      %v2986 = vpop.f32.mrf.mxu0
      %v2987 = vadd.f32 0.0, %v2986
      %2988 = vmatmul.f32.gmra.mxu0 %v2874
      %v2989 = vpop.f32.mrf.mxu0
      %v2990 = vadd.f32 0.0, %v2989
      %2991 = vmatmul.f32.gmra.mxu0 %v2877
      %v2992 = vpop.f32.mrf.mxu0
      %v2993 = vadd.f32 0.0, %v2992
      %2994 = vmatmul.f32.gmra.mxu0 %v2880
      %v2995 = vpop.f32.mrf.mxu0
      %v2996 = vadd.f32 0.0, %v2995
      %2997 = vmatmul.f32.gmra.mxu0 %v2883
      %v2998 = vpop.f32.mrf.mxu0
      %v2999 = vadd.f32 0.0, %v2998
      %3000 = vmatmul.f32.gmra.mxu0 %v2886
      %v3001 = vpop.f32.mrf.mxu0
      %v3002 = vadd.f32 0.0, %v3001
      %3003 = vmatmul.f32.gmra.mxu0 %v2889
      %v3004 = vpop.f32.mrf.mxu0
      %v3005 = vadd.f32 0.0, %v3004
      %3006 = vmatmul.f32.gmra.mxu0 %v2892
      %v3007 = vpop.f32.mrf.mxu0
      %v3008 = vadd.f32 0.0, %v3007
      %3009 = vmatmul.f32.gmra.mxu0 %v2895
      %v3010 = vpop.f32.mrf.mxu0
      %v3011 = vadd.f32 0.0, %v3010
      %3012 = vmatmul.f32.gmra.mxu0 %v2898
      %v3013 = vpop.f32.mrf.mxu0
      %v3014 = vadd.f32 0.0, %v3013
      %3015 = vmatmul.f32.gmra.mxu0 %v2901
      %v3016 = vpop.f32.mrf.mxu0
      %v3017 = vadd.f32 0.0, %v3016
      %3018 = vmatmul.f32.gmra.mxu0 %v2904
      %v3019 = vpop.f32.mrf.mxu0
      %v3020 = vadd.f32 0.0, %v3019
      %3021 = vmatmul.f32.gmra.mxu0 %v2907
      %v3022 = vpop.f32.mrf.mxu0
      %v3023 = vadd.f32 0.0, %v3022
      %3024 = vmatmul.f32.gmra.mxu0 %v2910
      %v3025 = vpop.f32.mrf.mxu0
      %v3026 = vadd.f32 0.0, %v3025
      %3027 = vmatmul.f32.gmra.mxu0 %v2913
      %v3028 = vpop.f32.mrf.mxu0
      %v3029 = vadd.f32 0.0, %v3028
      %3030 = vmatmul.f32.gmra.mxu0 %v2916
      %v3031 = vpop.f32.mrf.mxu0
      %v3032 = vadd.f32 0.0, %v3031
      %3033 = vdwg.mxu0
      %v3035 = vsel %vm317, %v2756, 0
      %v3038 = vsel %vm317, %v2757, 0
      %v3041 = vsel %vm317, %v2758, 0
      %v3044 = vsel %vm317, %v2759, 0
      %v3047 = vsel %vm317, %v2760, 0
      %v3050 = vsel %vm317, %v2761, 0
      %v3053 = vsel %vm317, %v2762, 0
      %v3056 = vsel %vm317, %v2763, 0
      %v3059 = vsel %vm317, %v2764, 0
      %v3062 = vsel %vm317, %v2765, 0
      %v3065 = vsel %vm317, %v2766, 0
      %v3068 = vsel %vm317, %v2767, 0
      %v3071 = vsel %vm317, %v2768, 0
      %v3074 = vsel %vm317, %v2769, 0
      %v3077 = vsel %vm317, %v2770, 0
      %v3080 = vsel %vm317, %v2771, 0
      %v3083 = vsel %vm317, %v2772, 0
      %v3086 = vsel %vm317, %v2773, 0
      %v3089 = vsel %vm317, %v2774, 0
      %v3092 = vsel %vm317, %v2775, 0
      %v3095 = vsel %vm317, %v2776, 0
      %v3098 = vsel %vm317, %v2777, 0
      %v3101 = vsel %vm317, %v2778, 0
      %v3104 = vsel %vm317, %v2779, 0
      %v3107 = vsel %vm317, %v2780, 0
      %v3110 = vsel %vm317, %v2781, 0
      %v3113 = vsel %vm317, %v2782, 0
      %v3116 = vsel %vm317, %v2783, 0
      %v3119 = vsel %vm317, %v2784, 0
      %v3122 = vsel %vm317, %v2785, 0
      %v3125 = vsel %vm317, %v2786, 0
      %v3128 = vsel %vm317, %v2787, 0
      %v3131 = vsel %vm414, %v2788, 0
      %3133 = vmatpush.msra.mxu0 0.0
      %3134 = vmatpush.msra.mxu0 0.0
      %3135 = vmatpush.msra.mxu0 0.0
      %3136 = vmatpush.msra.mxu0 0.0
      %3137 = vmatpush.msra.mxu0 0.0
      %3138 = vmatpush.msra.mxu0 0.0
      %3139 = vmatpush.msra.mxu0 0.0
      %3140 = vmatpush.msra.mxu0 0.0
      %3141 = vmatpush.msra.mxu0 0.0
      %3142 = vmatpush.msra.mxu0 0.0
      %3143 = vmatpush.msra.mxu0 0.0
      %3144 = vmatpush.msra.mxu0 0.0
      %3145 = vmatpush.msra.mxu0 0.0
      %3146 = vmatpush.msra.mxu0 0.0
      %3147 = vmatpush.msra.mxu0 0.0
      %3148 = vmatpush.msra.mxu0 %v3131
      %3149 = vmatmul.f32.gmra.mxu0 %v3035
      %v3150 = vpop.f32.mrf.mxu0
      %v3151 = vadd.f32 %v2939, %v3150
      %3152 = vmatmul.f32.gmra.mxu0 %v3038
      %v3153 = vpop.f32.mrf.mxu0
      %v3154 = vadd.f32 %v2942, %v3153
      %3155 = vmatmul.f32.gmra.mxu0 %v3041
      %v3156 = vpop.f32.mrf.mxu0
      %v3157 = vadd.f32 %v2945, %v3156
      %3158 = vmatmul.f32.gmra.mxu0 %v3044
      %v3159 = vpop.f32.mrf.mxu0
      %v3160 = vadd.f32 %v2948, %v3159
      %3161 = vmatmul.f32.gmra.mxu0 %v3047
      %v3162 = vpop.f32.mrf.mxu0
      %v3163 = vadd.f32 %v2951, %v3162
      %3164 = vmatmul.f32.gmra.mxu0 %v3050
      %v3165 = vpop.f32.mrf.mxu0
      %v3166 = vadd.f32 %v2954, %v3165
      %3167 = vmatmul.f32.gmra.mxu0 %v3053
      %v3168 = vpop.f32.mrf.mxu0
      %v3169 = vadd.f32 %v2957, %v3168
      %3170 = vmatmul.f32.gmra.mxu0 %v3056
      %v3171 = vpop.f32.mrf.mxu0
      %v3172 = vadd.f32 %v2960, %v3171
      %3173 = vmatmul.f32.gmra.mxu0 %v3059
      %v3174 = vpop.f32.mrf.mxu0
      %v3175 = vadd.f32 %v2963, %v3174
      %3176 = vmatmul.f32.gmra.mxu0 %v3062
      %v3177 = vpop.f32.mrf.mxu0
      %v3178 = vadd.f32 %v2966, %v3177
      %3179 = vmatmul.f32.gmra.mxu0 %v3065
      %v3180 = vpop.f32.mrf.mxu0
      %v3181 = vadd.f32 %v2969, %v3180
      %3182 = vmatmul.f32.gmra.mxu0 %v3068
      %v3183 = vpop.f32.mrf.mxu0
      %v3184 = vadd.f32 %v2972, %v3183
      %3185 = vmatmul.f32.gmra.mxu0 %v3071
      %v3186 = vpop.f32.mrf.mxu0
      %v3187 = vadd.f32 %v2975, %v3186
      %3188 = vmatmul.f32.gmra.mxu0 %v3074
      %v3189 = vpop.f32.mrf.mxu0
      %v3190 = vadd.f32 %v2978, %v3189
      %3191 = vmatmul.f32.gmra.mxu0 %v3077
      %v3192 = vpop.f32.mrf.mxu0
      %v3193 = vadd.f32 %v2981, %v3192
      %3194 = vmatmul.f32.gmra.mxu0 %v3080
      %v3195 = vpop.f32.mrf.mxu0
      %v3196 = vadd.f32 %v2984, %v3195
      %3197 = vmatmul.f32.gmra.mxu0 %v3083
      %v3198 = vpop.f32.mrf.mxu0
      %v3199 = vadd.f32 %v2987, %v3198
      %3200 = vmatmul.f32.gmra.mxu0 %v3086
      %v3201 = vpop.f32.mrf.mxu0
      %v3202 = vadd.f32 %v2990, %v3201
      %3203 = vmatmul.f32.gmra.mxu0 %v3089
      %v3204 = vpop.f32.mrf.mxu0
      %v3205 = vadd.f32 %v2993, %v3204
      %3206 = vmatmul.f32.gmra.mxu0 %v3092
      %v3207 = vpop.f32.mrf.mxu0
      %v3208 = vadd.f32 %v2996, %v3207
      %3209 = vmatmul.f32.gmra.mxu0 %v3095
      %v3210 = vpop.f32.mrf.mxu0
      %v3211 = vadd.f32 %v2999, %v3210
      %3212 = vmatmul.f32.gmra.mxu0 %v3098
      %v3213 = vpop.f32.mrf.mxu0
      %v3214 = vadd.f32 %v3002, %v3213
      %3215 = vmatmul.f32.gmra.mxu0 %v3101
      %v3216 = vpop.f32.mrf.mxu0
      %v3217 = vadd.f32 %v3005, %v3216
      %3218 = vmatmul.f32.gmra.mxu0 %v3104
      %v3219 = vpop.f32.mrf.mxu0
      %v3220 = vadd.f32 %v3008, %v3219
      %3221 = vmatmul.f32.gmra.mxu0 %v3107
      %v3222 = vpop.f32.mrf.mxu0
      %v3223 = vadd.f32 %v3011, %v3222
      %3224 = vmatmul.f32.gmra.mxu0 %v3110
      %v3225 = vpop.f32.mrf.mxu0
      %v3226 = vadd.f32 %v3014, %v3225
      %3227 = vmatmul.f32.gmra.mxu0 %v3113
      %v3228 = vpop.f32.mrf.mxu0
      %v3229 = vadd.f32 %v3017, %v3228
      %3230 = vmatmul.f32.gmra.mxu0 %v3116
      %v3231 = vpop.f32.mrf.mxu0
      %v3232 = vadd.f32 %v3020, %v3231
      %3233 = vmatmul.f32.gmra.mxu0 %v3119
      %v3234 = vpop.f32.mrf.mxu0
      %v3235 = vadd.f32 %v3023, %v3234
      %3236 = vmatmul.f32.gmra.mxu0 %v3122
      %v3237 = vpop.f32.mrf.mxu0
      %v3238 = vadd.f32 %v3026, %v3237
      %3239 = vmatmul.f32.gmra.mxu0 %v3125
      %v3240 = vpop.f32.mrf.mxu0
      %v3241 = vadd.f32 %v3029, %v3240
      %3242 = vmatmul.f32.gmra.mxu0 %v3128
      %v3243 = vpop.f32.mrf.mxu0
      %v3244 = vadd.f32 %v3032, %v3243
      %3245 = vdwg.mxu0
      %v3246 = vld [vmem:[%s2755 + $0xa] sm:$0xff]
      %v3247 = vld [vmem:[%s2755 + $0x12] sm:$0xff]
      %v3248 = vld [vmem:[%s2755 + $0x2a] sm:$0xff]
      %v3249 = vld [vmem:[%s2755 + $0x32] sm:$0xff]
      %v3250 = vld [vmem:[%s2755 + $0x4a] sm:$0xff]
      %v3251 = vld [vmem:[%s2755 + $0x52] sm:$0xff]
      %v3252 = vld [vmem:[%s2755 + $0x6a] sm:$0xff]
      %v3253 = vld [vmem:[%s2755 + $0x72] sm:$0xff]
      %v3254 = vld [vmem:[%s2755 + $0x8a] sm:$0xff]
      %v3255 = vld [vmem:[%s2755 + $0x92] sm:$0xff]
      %v3256 = vld [vmem:[%s2755 + $0xaa] sm:$0xff]
      %v3257 = vld [vmem:[%s2755 + $0xb2] sm:$0xff]
      %v3258 = vld [vmem:[%s2755 + $0xca] sm:$0xff]
      %v3259 = vld [vmem:[%s2755 + $0xd2] sm:$0xff]
      %v3260 = vld [vmem:[%s2755 + $0xea] sm:$0xff]
      %v3261 = vld [vmem:[%s2755 + $0xf2] sm:$0xff]
      %v3262 = vld [vmem:[%s2755 + $0x10a] sm:$0xff]
      %v3263 = vld [vmem:[%s2755 + $0x112] sm:$0xff]
      %v3264 = vld [vmem:[%s2755 + $0x12a] sm:$0xff]
      %v3265 = vld [vmem:[%s2755 + $0x132] sm:$0xff]
      %v3266 = vld [vmem:[%s2755 + $0x14a] sm:$0xff]
      %v3267 = vld [vmem:[%s2755 + $0x152] sm:$0xff]
      %v3268 = vld [vmem:[%s2755 + $0x16a] sm:$0xff]
      %v3269 = vld [vmem:[%s2755 + $0x172] sm:$0xff]
      %v3270 = vld [vmem:[%s2755 + $0x18a] sm:$0xff]
      %v3271 = vld [vmem:[%s2755 + $0x192] sm:$0xff]
      %v3272 = vld [vmem:[%s2755 + $0x1aa] sm:$0xff]
      %v3273 = vld [vmem:[%s2755 + $0x1b2] sm:$0xff]
      %v3274 = vld [vmem:[%s2755 + $0x1ca] sm:$0xff]
      %v3275 = vld [vmem:[%s2755 + $0x1d2] sm:$0xff]
      %v3276 = vld [vmem:[%s2755 + $0x1ea] sm:$0xff]
      %v3277 = vld [vmem:[%s2755 + $0x1f2] sm:$0xff]
      %v3278 = vld [vmem:[%s2 + $0x8] sm:$0xf]
      %v3280 = vsel %vm317, %v3246, 0
      %v3283 = vsel %vm317, %v3247, 0
      %v3286 = vsel %vm317, %v3248, 0
      %v3289 = vsel %vm317, %v3249, 0
      %v3292 = vsel %vm317, %v3250, 0
      %v3295 = vsel %vm317, %v3251, 0
      %v3298 = vsel %vm317, %v3252, 0
      %v3301 = vsel %vm317, %v3253, 0
      %v3304 = vsel %vm317, %v3254, 0
      %v3307 = vsel %vm317, %v3255, 0
      %v3310 = vsel %vm317, %v3256, 0
      %v3313 = vsel %vm317, %v3257, 0
      %v3316 = vsel %vm317, %v3258, 0
      %v3319 = vsel %vm317, %v3259, 0
      %v3322 = vsel %vm317, %v3260, 0
      %v3325 = vsel %vm317, %v3261, 0
      %v3328 = vsel %vm317, %v3262, 0
      %v3331 = vsel %vm317, %v3263, 0
      %v3334 = vsel %vm317, %v3264, 0
      %v3337 = vsel %vm317, %v3265, 0
      %v3340 = vsel %vm317, %v3266, 0
      %v3343 = vsel %vm317, %v3267, 0
      %v3346 = vsel %vm317, %v3268, 0
      %v3349 = vsel %vm317, %v3269, 0
      %v3352 = vsel %vm317, %v3270, 0
      %v3355 = vsel %vm317, %v3271, 0
      %v3358 = vsel %vm317, %v3272, 0
      %v3361 = vsel %vm317, %v3273, 0
      %v3364 = vsel %vm317, %v3274, 0
      %v3367 = vsel %vm317, %v3275, 0
      %v3370 = vsel %vm317, %v3276, 0
      %v3373 = vsel %vm317, %v3277, 0
      %v3376 = vsel %vm414, %v3278, 0
      %3378 = vmatpush.msra.mxu0 0.0
      %3379 = vmatpush.msra.mxu0 0.0
      %3380 = vmatpush.msra.mxu0 0.0
      %3381 = vmatpush.msra.mxu0 0.0
      %3382 = vmatpush.msra.mxu0 0.0
      %3383 = vmatpush.msra.mxu0 0.0
      %3384 = vmatpush.msra.mxu0 0.0
      %3385 = vmatpush.msra.mxu0 0.0
      %3386 = vmatpush.msra.mxu0 0.0
      %3387 = vmatpush.msra.mxu0 0.0
      %3388 = vmatpush.msra.mxu0 0.0
      %3389 = vmatpush.msra.mxu0 0.0
      %3390 = vmatpush.msra.mxu0 0.0
      %3391 = vmatpush.msra.mxu0 0.0
      %3392 = vmatpush.msra.mxu0 0.0
      %3393 = vmatpush.msra.mxu0 %v3376
      %3394 = vmatmul.f32.gmra.mxu0 %v3280
      %v3395 = vpop.f32.mrf.mxu0
      %v3396 = vadd.f32 0.0, %v3395
      %3397 = vmatmul.f32.gmra.mxu0 %v3283
      %v3398 = vpop.f32.mrf.mxu0
      %v3399 = vadd.f32 0.0, %v3398
      %3400 = vmatmul.f32.gmra.mxu0 %v3286
      %v3401 = vpop.f32.mrf.mxu0
      %v3402 = vadd.f32 0.0, %v3401
      %3403 = vmatmul.f32.gmra.mxu0 %v3289
      %v3404 = vpop.f32.mrf.mxu0
      %v3405 = vadd.f32 0.0, %v3404
      %3406 = vmatmul.f32.gmra.mxu0 %v3292
      %v3407 = vpop.f32.mrf.mxu0
      %v3408 = vadd.f32 0.0, %v3407
      %3409 = vmatmul.f32.gmra.mxu0 %v3295
      %v3410 = vpop.f32.mrf.mxu0
      %v3411 = vadd.f32 0.0, %v3410
      %3412 = vmatmul.f32.gmra.mxu0 %v3298
      %v3413 = vpop.f32.mrf.mxu0
      %v3414 = vadd.f32 0.0, %v3413
      %3415 = vmatmul.f32.gmra.mxu0 %v3301
      %v3416 = vpop.f32.mrf.mxu0
      %v3417 = vadd.f32 0.0, %v3416
      %3418 = vmatmul.f32.gmra.mxu0 %v3304
      %v3419 = vpop.f32.mrf.mxu0
      %v3420 = vadd.f32 0.0, %v3419
      %3421 = vmatmul.f32.gmra.mxu0 %v3307
      %v3422 = vpop.f32.mrf.mxu0
      %v3423 = vadd.f32 0.0, %v3422
      %3424 = vmatmul.f32.gmra.mxu0 %v3310
      %v3425 = vpop.f32.mrf.mxu0
      %v3426 = vadd.f32 0.0, %v3425
      %3427 = vmatmul.f32.gmra.mxu0 %v3313
      %v3428 = vpop.f32.mrf.mxu0
      %v3429 = vadd.f32 0.0, %v3428
      %3430 = vmatmul.f32.gmra.mxu0 %v3316
      %v3431 = vpop.f32.mrf.mxu0
      %v3432 = vadd.f32 0.0, %v3431
      %3433 = vmatmul.f32.gmra.mxu0 %v3319
      %v3434 = vpop.f32.mrf.mxu0
      %v3435 = vadd.f32 0.0, %v3434
      %3436 = vmatmul.f32.gmra.mxu0 %v3322
      %v3437 = vpop.f32.mrf.mxu0
      %v3438 = vadd.f32 0.0, %v3437
      %3439 = vmatmul.f32.gmra.mxu0 %v3325
      %v3440 = vpop.f32.mrf.mxu0
      %v3441 = vadd.f32 0.0, %v3440
      %3442 = vmatmul.f32.gmra.mxu0 %v3328
      %v3443 = vpop.f32.mrf.mxu0
      %v3444 = vadd.f32 0.0, %v3443
      %3445 = vmatmul.f32.gmra.mxu0 %v3331
      %v3446 = vpop.f32.mrf.mxu0
      %v3447 = vadd.f32 0.0, %v3446
      %3448 = vmatmul.f32.gmra.mxu0 %v3334
      %v3449 = vpop.f32.mrf.mxu0
      %v3450 = vadd.f32 0.0, %v3449
      %3451 = vmatmul.f32.gmra.mxu0 %v3337
      %v3452 = vpop.f32.mrf.mxu0
      %v3453 = vadd.f32 0.0, %v3452
      %3454 = vmatmul.f32.gmra.mxu0 %v3340
      %v3455 = vpop.f32.mrf.mxu0
      %v3456 = vadd.f32 0.0, %v3455
      %3457 = vmatmul.f32.gmra.mxu0 %v3343
      %v3458 = vpop.f32.mrf.mxu0
      %v3459 = vadd.f32 0.0, %v3458
      %3460 = vmatmul.f32.gmra.mxu0 %v3346
      %v3461 = vpop.f32.mrf.mxu0
      %v3462 = vadd.f32 0.0, %v3461
      %3463 = vmatmul.f32.gmra.mxu0 %v3349
      %v3464 = vpop.f32.mrf.mxu0
      %v3465 = vadd.f32 0.0, %v3464
      %3466 = vmatmul.f32.gmra.mxu0 %v3352
      %v3467 = vpop.f32.mrf.mxu0
      %v3468 = vadd.f32 0.0, %v3467
      %3469 = vmatmul.f32.gmra.mxu0 %v3355
      %v3470 = vpop.f32.mrf.mxu0
      %v3471 = vadd.f32 0.0, %v3470
      %3472 = vmatmul.f32.gmra.mxu0 %v3358
      %v3473 = vpop.f32.mrf.mxu0
      %v3474 = vadd.f32 0.0, %v3473
      %3475 = vmatmul.f32.gmra.mxu0 %v3361
      %v3476 = vpop.f32.mrf.mxu0
      %v3477 = vadd.f32 0.0, %v3476
      %3478 = vmatmul.f32.gmra.mxu0 %v3364
      %v3479 = vpop.f32.mrf.mxu0
      %v3480 = vadd.f32 0.0, %v3479
      %3481 = vmatmul.f32.gmra.mxu0 %v3367
      %v3482 = vpop.f32.mrf.mxu0
      %v3483 = vadd.f32 0.0, %v3482
      %3484 = vmatmul.f32.gmra.mxu0 %v3370
      %v3485 = vpop.f32.mrf.mxu0
      %v3486 = vadd.f32 0.0, %v3485
      %3487 = vmatmul.f32.gmra.mxu0 %v3373
      %v3488 = vpop.f32.mrf.mxu0
      %v3489 = vadd.f32 0.0, %v3488
      %3490 = vdwg.mxu0
      %v3491 = vadd.f32 %v3151, %v3396
      %v3492 = vadd.f32 %v3154, %v3399
      %v3493 = vadd.f32 %v3157, %v3402
      %v3494 = vadd.f32 %v3160, %v3405
      %v3495 = vadd.f32 %v3163, %v3408
      %v3496 = vadd.f32 %v3166, %v3411
      %v3497 = vadd.f32 %v3169, %v3414
      %v3498 = vadd.f32 %v3172, %v3417
      %v3499 = vadd.f32 %v3175, %v3420
      %v3500 = vadd.f32 %v3178, %v3423
      %v3501 = vadd.f32 %v3181, %v3426
      %v3502 = vadd.f32 %v3184, %v3429
      %v3503 = vadd.f32 %v3187, %v3432
      %v3504 = vadd.f32 %v3190, %v3435
      %v3505 = vadd.f32 %v3193, %v3438
      %v3506 = vadd.f32 %v3196, %v3441
      %v3507 = vadd.f32 %v3199, %v3444
      %v3508 = vadd.f32 %v3202, %v3447
      %v3509 = vadd.f32 %v3205, %v3450
      %v3510 = vadd.f32 %v3208, %v3453
      %v3511 = vadd.f32 %v3211, %v3456
      %v3512 = vadd.f32 %v3214, %v3459
      %v3513 = vadd.f32 %v3217, %v3462
      %v3514 = vadd.f32 %v3220, %v3465
      %v3515 = vadd.f32 %v3223, %v3468
      %v3516 = vadd.f32 %v3226, %v3471
      %v3517 = vadd.f32 %v3229, %v3474
      %v3518 = vadd.f32 %v3232, %v3477
      %v3519 = vadd.f32 %v3235, %v3480
      %v3520 = vadd.f32 %v3238, %v3483
      %v3521 = vadd.f32 %v3241, %v3486
      %v3522 = vadd.f32 %v3244, %v3489
      %v3523 = vld [vmem:[%s1022] sm:$0xff]
      %v3524 = vld [vmem:[%s1022 + $0x8] sm:$0xff]
      %v3525 = vld [vmem:[%s1022 + $0x20] sm:$0xff]
      %v3526 = vld [vmem:[%s1022 + $0x28] sm:$0xff]
      %v3527 = vld [vmem:[%s1022 + $0x40] sm:$0xff]
      %v3528 = vld [vmem:[%s1022 + $0x48] sm:$0xff]
      %v3529 = vld [vmem:[%s1022 + $0x60] sm:$0xff]
      %v3530 = vld [vmem:[%s1022 + $0x68] sm:$0xff]
      %v3531 = vld [vmem:[%s1022 + $0x80] sm:$0xff]
      %v3532 = vld [vmem:[%s1022 + $0x88] sm:$0xff]
      %v3533 = vld [vmem:[%s1022 + $0xa0] sm:$0xff]
      %v3534 = vld [vmem:[%s1022 + $0xa8] sm:$0xff]
      %v3535 = vld [vmem:[%s1022 + $0xc0] sm:$0xff]
      %v3536 = vld [vmem:[%s1022 + $0xc8] sm:$0xff]
      %v3537 = vld [vmem:[%s1022 + $0xe0] sm:$0xff]
      %v3538 = vld [vmem:[%s1022 + $0xe8] sm:$0xff]
      %v3539 = vld [vmem:[%s1022 + $0x100] sm:$0xff]
      %v3540 = vld [vmem:[%s1022 + $0x108] sm:$0xff]
      %v3541 = vld [vmem:[%s1022 + $0x120] sm:$0xff]
      %v3542 = vld [vmem:[%s1022 + $0x128] sm:$0xff]
      %v3543 = vld [vmem:[%s1022 + $0x140] sm:$0xff]
      %v3544 = vld [vmem:[%s1022 + $0x148] sm:$0xff]
      %v3545 = vld [vmem:[%s1022 + $0x160] sm:$0xff]
      %v3546 = vld [vmem:[%s1022 + $0x168] sm:$0xff]
      %v3547 = vld [vmem:[%s1022 + $0x180] sm:$0xff]
      %v3548 = vld [vmem:[%s1022 + $0x188] sm:$0xff]
      %v3549 = vld [vmem:[%s1022 + $0x1a0] sm:$0xff]
      %v3550 = vld [vmem:[%s1022 + $0x1a8] sm:$0xff]
      %v3551 = vld [vmem:[%s1022 + $0x1c0] sm:$0xff]
      %v3552 = vld [vmem:[%s1022 + $0x1c8] sm:$0xff]
      %v3553 = vld [vmem:[%s1022 + $0x1e0] sm:$0xff]
      %v3554 = vld [vmem:[%s1022 + $0x1e8] sm:$0xff]
      %v3555 = vld [vmem:[%s2 + $0xc] sm:$0xf]
      %v3557 = vsel %vm317, %v3523, 0
      %v3560 = vsel %vm317, %v3524, 0
      %v3563 = vsel %vm317, %v3525, 0
      %v3566 = vsel %vm317, %v3526, 0
      %v3569 = vsel %vm317, %v3527, 0
      %v3572 = vsel %vm317, %v3528, 0
      %v3575 = vsel %vm317, %v3529, 0
      %v3578 = vsel %vm317, %v3530, 0
      %v3581 = vsel %vm317, %v3531, 0
      %v3584 = vsel %vm317, %v3532, 0
      %v3587 = vsel %vm317, %v3533, 0
      %v3590 = vsel %vm317, %v3534, 0
      %v3593 = vsel %vm317, %v3535, 0
      %v3596 = vsel %vm317, %v3536, 0
      %v3599 = vsel %vm317, %v3537, 0
      %v3602 = vsel %vm317, %v3538, 0
      %v3605 = vsel %vm317, %v3539, 0
      %v3608 = vsel %vm317, %v3540, 0
      %v3611 = vsel %vm317, %v3541, 0
      %v3614 = vsel %vm317, %v3542, 0
      %v3617 = vsel %vm317, %v3543, 0
      %v3620 = vsel %vm317, %v3544, 0
      %v3623 = vsel %vm317, %v3545, 0
      %v3626 = vsel %vm317, %v3546, 0
      %v3629 = vsel %vm317, %v3547, 0
      %v3632 = vsel %vm317, %v3548, 0
      %v3635 = vsel %vm317, %v3549, 0
      %v3638 = vsel %vm317, %v3550, 0
      %v3641 = vsel %vm317, %v3551, 0
      %v3644 = vsel %vm317, %v3552, 0
      %v3647 = vsel %vm317, %v3553, 0
      %v3650 = vsel %vm317, %v3554, 0
      %v3653 = vsel %vm414, %v3555, 0
      %3655 = vmatpush.msra.mxu0 0.0
      %3656 = vmatpush.msra.mxu0 0.0
      %3657 = vmatpush.msra.mxu0 0.0
      %3658 = vmatpush.msra.mxu0 0.0
      %3659 = vmatpush.msra.mxu0 0.0
      %3660 = vmatpush.msra.mxu0 0.0
      %3661 = vmatpush.msra.mxu0 0.0
      %3662 = vmatpush.msra.mxu0 0.0
      %3663 = vmatpush.msra.mxu0 0.0
      %3664 = vmatpush.msra.mxu0 0.0
      %3665 = vmatpush.msra.mxu0 0.0
      %3666 = vmatpush.msra.mxu0 0.0
      %3667 = vmatpush.msra.mxu0 0.0
      %3668 = vmatpush.msra.mxu0 0.0
      %3669 = vmatpush.msra.mxu0 0.0
      %3670 = vmatpush.msra.mxu0 %v3653
      %3671 = vmatmul.f32.gmra.mxu0 %v3557
      %v3672 = vpop.f32.mrf.mxu0
      %v3673 = vadd.f32 0.0, %v3672
      %3674 = vmatmul.f32.gmra.mxu0 %v3560
      %v3675 = vpop.f32.mrf.mxu0
      %v3676 = vadd.f32 0.0, %v3675
      %3677 = vmatmul.f32.gmra.mxu0 %v3563
      %v3678 = vpop.f32.mrf.mxu0
      %v3679 = vadd.f32 0.0, %v3678
      %3680 = vmatmul.f32.gmra.mxu0 %v3566
      %v3681 = vpop.f32.mrf.mxu0
      %v3682 = vadd.f32 0.0, %v3681
      %3683 = vmatmul.f32.gmra.mxu0 %v3569
      %v3684 = vpop.f32.mrf.mxu0
      %v3685 = vadd.f32 0.0, %v3684
      %3686 = vmatmul.f32.gmra.mxu0 %v3572
      %v3687 = vpop.f32.mrf.mxu0
      %v3688 = vadd.f32 0.0, %v3687
      %3689 = vmatmul.f32.gmra.mxu0 %v3575
      %v3690 = vpop.f32.mrf.mxu0
      %v3691 = vadd.f32 0.0, %v3690
      %3692 = vmatmul.f32.gmra.mxu0 %v3578
      %v3693 = vpop.f32.mrf.mxu0
      %v3694 = vadd.f32 0.0, %v3693
      %3695 = vmatmul.f32.gmra.mxu0 %v3581
      %v3696 = vpop.f32.mrf.mxu0
      %v3697 = vadd.f32 0.0, %v3696
      %3698 = vmatmul.f32.gmra.mxu0 %v3584
      %v3699 = vpop.f32.mrf.mxu0
      %v3700 = vadd.f32 0.0, %v3699
      %3701 = vmatmul.f32.gmra.mxu0 %v3587
      %v3702 = vpop.f32.mrf.mxu0
      %v3703 = vadd.f32 0.0, %v3702
      %3704 = vmatmul.f32.gmra.mxu0 %v3590
      %v3705 = vpop.f32.mrf.mxu0
      %v3706 = vadd.f32 0.0, %v3705
      %3707 = vmatmul.f32.gmra.mxu0 %v3593
      %v3708 = vpop.f32.mrf.mxu0
      %v3709 = vadd.f32 0.0, %v3708
      %3710 = vmatmul.f32.gmra.mxu0 %v3596
      %v3711 = vpop.f32.mrf.mxu0
      %v3712 = vadd.f32 0.0, %v3711
      %3713 = vmatmul.f32.gmra.mxu0 %v3599
      %v3714 = vpop.f32.mrf.mxu0
      %v3715 = vadd.f32 0.0, %v3714
      %3716 = vmatmul.f32.gmra.mxu0 %v3602
      %v3717 = vpop.f32.mrf.mxu0
      %v3718 = vadd.f32 0.0, %v3717
      %3719 = vmatmul.f32.gmra.mxu0 %v3605
      %v3720 = vpop.f32.mrf.mxu0
      %v3721 = vadd.f32 0.0, %v3720
      %3722 = vmatmul.f32.gmra.mxu0 %v3608
      %v3723 = vpop.f32.mrf.mxu0
      %v3724 = vadd.f32 0.0, %v3723
      %3725 = vmatmul.f32.gmra.mxu0 %v3611
      %v3726 = vpop.f32.mrf.mxu0
      %v3727 = vadd.f32 0.0, %v3726
      %3728 = vmatmul.f32.gmra.mxu0 %v3614
      %v3729 = vpop.f32.mrf.mxu0
      %v3730 = vadd.f32 0.0, %v3729
      %3731 = vmatmul.f32.gmra.mxu0 %v3617
      %v3732 = vpop.f32.mrf.mxu0
      %v3733 = vadd.f32 0.0, %v3732
      %3734 = vmatmul.f32.gmra.mxu0 %v3620
      %v3735 = vpop.f32.mrf.mxu0
      %v3736 = vadd.f32 0.0, %v3735
      %3737 = vmatmul.f32.gmra.mxu0 %v3623
      %v3738 = vpop.f32.mrf.mxu0
      %v3739 = vadd.f32 0.0, %v3738
      %3740 = vmatmul.f32.gmra.mxu0 %v3626
      %v3741 = vpop.f32.mrf.mxu0
      %v3742 = vadd.f32 0.0, %v3741
      %3743 = vmatmul.f32.gmra.mxu0 %v3629
      %v3744 = vpop.f32.mrf.mxu0
      %v3745 = vadd.f32 0.0, %v3744
      %3746 = vmatmul.f32.gmra.mxu0 %v3632
      %v3747 = vpop.f32.mrf.mxu0
      %v3748 = vadd.f32 0.0, %v3747
      %3749 = vmatmul.f32.gmra.mxu0 %v3635
      %v3750 = vpop.f32.mrf.mxu0
      %v3751 = vadd.f32 0.0, %v3750
      %3752 = vmatmul.f32.gmra.mxu0 %v3638
      %v3753 = vpop.f32.mrf.mxu0
      %v3754 = vadd.f32 0.0, %v3753
      %3755 = vmatmul.f32.gmra.mxu0 %v3641
      %v3756 = vpop.f32.mrf.mxu0
      %v3757 = vadd.f32 0.0, %v3756
      %3758 = vmatmul.f32.gmra.mxu0 %v3644
      %v3759 = vpop.f32.mrf.mxu0
      %v3760 = vadd.f32 0.0, %v3759
      %3761 = vmatmul.f32.gmra.mxu0 %v3647
      %v3762 = vpop.f32.mrf.mxu0
      %v3763 = vadd.f32 0.0, %v3762
      %3764 = vmatmul.f32.gmra.mxu0 %v3650
      %v3765 = vpop.f32.mrf.mxu0
      %v3766 = vadd.f32 0.0, %v3765
      %3767 = vdwg.mxu0
      %v3768 = vadd.f32 %v3491, %v3673
      %v3769 = vadd.f32 %v3492, %v3676
      %v3770 = vadd.f32 %v3493, %v3679
      %v3771 = vadd.f32 %v3494, %v3682
      %v3772 = vadd.f32 %v3495, %v3685
      %v3773 = vadd.f32 %v3496, %v3688
      %v3774 = vadd.f32 %v3497, %v3691
      %v3775 = vadd.f32 %v3498, %v3694
      %v3776 = vadd.f32 %v3499, %v3697
      %v3777 = vadd.f32 %v3500, %v3700
      %v3778 = vadd.f32 %v3501, %v3703
      %v3779 = vadd.f32 %v3502, %v3706
      %v3780 = vadd.f32 %v3503, %v3709
      %v3781 = vadd.f32 %v3504, %v3712
      %v3782 = vadd.f32 %v3505, %v3715
      %v3783 = vadd.f32 %v3506, %v3718
      %v3784 = vadd.f32 %v3507, %v3721
      %v3785 = vadd.f32 %v3508, %v3724
      %v3786 = vadd.f32 %v3509, %v3727
      %v3787 = vadd.f32 %v3510, %v3730
      %v3788 = vadd.f32 %v3511, %v3733
      %v3789 = vadd.f32 %v3512, %v3736
      %v3790 = vadd.f32 %v3513, %v3739
      %v3791 = vadd.f32 %v3514, %v3742
      %v3792 = vadd.f32 %v3515, %v3745
      %v3793 = vadd.f32 %v3516, %v3748
      %v3794 = vadd.f32 %v3517, %v3751
      %v3795 = vadd.f32 %v3518, %v3754
      %v3796 = vadd.f32 %v3519, %v3757
      %v3797 = vadd.f32 %v3520, %v3760
      %v3798 = vadd.f32 %v3521, %v3763
      %v3799 = vadd.f32 %v3522, %v3766
      %v3800 = vld [vmem:[%s2 + $0x10] sm:$0xf]
      %v3802 = vsel %vm414, %v3800, 0
      %3804 = vmatpush.msra.mxu0 0.0
      %3805 = vmatpush.msra.mxu0 0.0
      %3806 = vmatpush.msra.mxu0 0.0
      %3807 = vmatpush.msra.mxu0 0.0
      %3808 = vmatpush.msra.mxu0 0.0
      %3809 = vmatpush.msra.mxu0 0.0
      %3810 = vmatpush.msra.mxu0 0.0
      %3811 = vmatpush.msra.mxu0 0.0
      %3812 = vmatpush.msra.mxu0 0.0
      %3813 = vmatpush.msra.mxu0 0.0
      %3814 = vmatpush.msra.mxu0 0.0
      %3815 = vmatpush.msra.mxu0 0.0
      %3816 = vmatpush.msra.mxu0 0.0
      %3817 = vmatpush.msra.mxu0 0.0
      %3818 = vmatpush.msra.mxu0 0.0
      %3819 = vmatpush.msra.mxu0 %v3802
      %3820 = vmatmul.f32.gmra.mxu0 %v1334
      %v3821 = vpop.f32.mrf.mxu0
      %v3822 = vadd.f32 0.0, %v3821
      %3823 = vmatmul.f32.gmra.mxu0 %v1337
      %v3824 = vpop.f32.mrf.mxu0
      %v3825 = vadd.f32 0.0, %v3824
      %3826 = vmatmul.f32.gmra.mxu0 %v1340
      %v3827 = vpop.f32.mrf.mxu0
      %v3828 = vadd.f32 0.0, %v3827
      %3829 = vmatmul.f32.gmra.mxu0 %v1343
      %v3830 = vpop.f32.mrf.mxu0
      %v3831 = vadd.f32 0.0, %v3830
      %3832 = vmatmul.f32.gmra.mxu0 %v1346
      %v3833 = vpop.f32.mrf.mxu0
      %v3834 = vadd.f32 0.0, %v3833
      %3835 = vmatmul.f32.gmra.mxu0 %v1349
      %v3836 = vpop.f32.mrf.mxu0
      %v3837 = vadd.f32 0.0, %v3836
      %3838 = vmatmul.f32.gmra.mxu0 %v1352
      %v3839 = vpop.f32.mrf.mxu0
      %v3840 = vadd.f32 0.0, %v3839
      %3841 = vmatmul.f32.gmra.mxu0 %v1355
      %v3842 = vpop.f32.mrf.mxu0
      %v3843 = vadd.f32 0.0, %v3842
      %3844 = vmatmul.f32.gmra.mxu0 %v1358
      %v3845 = vpop.f32.mrf.mxu0
      %v3846 = vadd.f32 0.0, %v3845
      %3847 = vmatmul.f32.gmra.mxu0 %v1361
      %v3848 = vpop.f32.mrf.mxu0
      %v3849 = vadd.f32 0.0, %v3848
      %3850 = vmatmul.f32.gmra.mxu0 %v1364
      %v3851 = vpop.f32.mrf.mxu0
      %v3852 = vadd.f32 0.0, %v3851
      %3853 = vmatmul.f32.gmra.mxu0 %v1367
      %v3854 = vpop.f32.mrf.mxu0
      %v3855 = vadd.f32 0.0, %v3854
      %3856 = vmatmul.f32.gmra.mxu0 %v1370
      %v3857 = vpop.f32.mrf.mxu0
      %v3858 = vadd.f32 0.0, %v3857
      %3859 = vmatmul.f32.gmra.mxu0 %v1373
      %v3860 = vpop.f32.mrf.mxu0
      %v3861 = vadd.f32 0.0, %v3860
      %3862 = vmatmul.f32.gmra.mxu0 %v1376
      %v3863 = vpop.f32.mrf.mxu0
      %v3864 = vadd.f32 0.0, %v3863
      %3865 = vmatmul.f32.gmra.mxu0 %v1379
      %v3866 = vpop.f32.mrf.mxu0
      %v3867 = vadd.f32 0.0, %v3866
      %3868 = vmatmul.f32.gmra.mxu0 %v1382
      %v3869 = vpop.f32.mrf.mxu0
      %v3870 = vadd.f32 0.0, %v3869
      %3871 = vmatmul.f32.gmra.mxu0 %v1385
      %v3872 = vpop.f32.mrf.mxu0
      %v3873 = vadd.f32 0.0, %v3872
      %3874 = vmatmul.f32.gmra.mxu0 %v1388
      %v3875 = vpop.f32.mrf.mxu0
      %v3876 = vadd.f32 0.0, %v3875
      %3877 = vmatmul.f32.gmra.mxu0 %v1391
      %v3878 = vpop.f32.mrf.mxu0
      %v3879 = vadd.f32 0.0, %v3878
      %3880 = vmatmul.f32.gmra.mxu0 %v1394
      %v3881 = vpop.f32.mrf.mxu0
      %v3882 = vadd.f32 0.0, %v3881
      %3883 = vmatmul.f32.gmra.mxu0 %v1397
      %v3884 = vpop.f32.mrf.mxu0
      %v3885 = vadd.f32 0.0, %v3884
      %3886 = vmatmul.f32.gmra.mxu0 %v1400
      %v3887 = vpop.f32.mrf.mxu0
      %v3888 = vadd.f32 0.0, %v3887
      %3889 = vmatmul.f32.gmra.mxu0 %v1403
      %v3890 = vpop.f32.mrf.mxu0
      %v3891 = vadd.f32 0.0, %v3890
      %3892 = vmatmul.f32.gmra.mxu0 %v1406
      %v3893 = vpop.f32.mrf.mxu0
      %v3894 = vadd.f32 0.0, %v3893
      %3895 = vmatmul.f32.gmra.mxu0 %v1409
      %v3896 = vpop.f32.mrf.mxu0
      %v3897 = vadd.f32 0.0, %v3896
      %3898 = vmatmul.f32.gmra.mxu0 %v1412
      %v3899 = vpop.f32.mrf.mxu0
      %v3900 = vadd.f32 0.0, %v3899
      %3901 = vmatmul.f32.gmra.mxu0 %v1415
      %v3902 = vpop.f32.mrf.mxu0
      %v3903 = vadd.f32 0.0, %v3902
      %3904 = vmatmul.f32.gmra.mxu0 %v1418
      %v3905 = vpop.f32.mrf.mxu0
      %v3906 = vadd.f32 0.0, %v3905
      %3907 = vmatmul.f32.gmra.mxu0 %v1421
      %v3908 = vpop.f32.mrf.mxu0
      %v3909 = vadd.f32 0.0, %v3908
      %3910 = vmatmul.f32.gmra.mxu0 %v1424
      %v3911 = vpop.f32.mrf.mxu0
      %v3912 = vadd.f32 0.0, %v3911
      %3913 = vmatmul.f32.gmra.mxu0 %v1427
      %v3914 = vpop.f32.mrf.mxu0
      %v3915 = vadd.f32 0.0, %v3914
      %3916 = vdwg.mxu0
      %v3917 = vadd.f32 %v3768, %v3822
      %v3918 = vadd.f32 %v3769, %v3825
      %v3919 = vadd.f32 %v3770, %v3828
      %v3920 = vadd.f32 %v3771, %v3831
      %v3921 = vadd.f32 %v3772, %v3834
      %v3922 = vadd.f32 %v3773, %v3837
      %v3923 = vadd.f32 %v3774, %v3840
      %v3924 = vadd.f32 %v3775, %v3843
      %v3925 = vadd.f32 %v3776, %v3846
      %v3926 = vadd.f32 %v3777, %v3849
      %v3927 = vadd.f32 %v3778, %v3852
      %v3928 = vadd.f32 %v3779, %v3855
      %v3929 = vadd.f32 %v3780, %v3858
      %v3930 = vadd.f32 %v3781, %v3861
      %v3931 = vadd.f32 %v3782, %v3864
      %v3932 = vadd.f32 %v3783, %v3867
      %v3933 = vadd.f32 %v3784, %v3870
      %v3934 = vadd.f32 %v3785, %v3873
      %v3935 = vadd.f32 %v3786, %v3876
      %v3936 = vadd.f32 %v3787, %v3879
      %v3937 = vadd.f32 %v3788, %v3882
      %v3938 = vadd.f32 %v3789, %v3885
      %v3939 = vadd.f32 %v3790, %v3888
      %v3940 = vadd.f32 %v3791, %v3891
      %v3941 = vadd.f32 %v3792, %v3894
      %v3942 = vadd.f32 %v3793, %v3897
      %v3943 = vadd.f32 %v3794, %v3900
      %v3944 = vadd.f32 %v3795, %v3903
      %v3945 = vadd.f32 %v3796, %v3906
      %v3946 = vadd.f32 %v3797, %v3909
      %v3947 = vadd.f32 %v3798, %v3912
      %v3948 = vadd.f32 %v3799, %v3915
      %v3949 = vld [vmem:[%s1022 + $0xa] sm:$0xff]
      %v3950 = vld [vmem:[%s1022 + $0x12] sm:$0xff]
      %v3951 = vld [vmem:[%s1022 + $0x2a] sm:$0xff]
      %v3952 = vld [vmem:[%s1022 + $0x32] sm:$0xff]
      %v3953 = vld [vmem:[%s1022 + $0x4a] sm:$0xff]
      %v3954 = vld [vmem:[%s1022 + $0x52] sm:$0xff]
      %v3955 = vld [vmem:[%s1022 + $0x6a] sm:$0xff]
      %v3956 = vld [vmem:[%s1022 + $0x72] sm:$0xff]
      %v3957 = vld [vmem:[%s1022 + $0x8a] sm:$0xff]
      %v3958 = vld [vmem:[%s1022 + $0x92] sm:$0xff]
      %v3959 = vld [vmem:[%s1022 + $0xaa] sm:$0xff]
      %v3960 = vld [vmem:[%s1022 + $0xb2] sm:$0xff]
      %v3961 = vld [vmem:[%s1022 + $0xca] sm:$0xff]
      %v3962 = vld [vmem:[%s1022 + $0xd2] sm:$0xff]
      %v3963 = vld [vmem:[%s1022 + $0xea] sm:$0xff]
      %v3964 = vld [vmem:[%s1022 + $0xf2] sm:$0xff]
      %v3965 = vld [vmem:[%s1022 + $0x10a] sm:$0xff]
      %v3966 = vld [vmem:[%s1022 + $0x112] sm:$0xff]
      %v3967 = vld [vmem:[%s1022 + $0x12a] sm:$0xff]
      %v3968 = vld [vmem:[%s1022 + $0x132] sm:$0xff]
      %v3969 = vld [vmem:[%s1022 + $0x14a] sm:$0xff]
      %v3970 = vld [vmem:[%s1022 + $0x152] sm:$0xff]
      %v3971 = vld [vmem:[%s1022 + $0x16a] sm:$0xff]
      %v3972 = vld [vmem:[%s1022 + $0x172] sm:$0xff]
      %v3973 = vld [vmem:[%s1022 + $0x18a] sm:$0xff]
      %v3974 = vld [vmem:[%s1022 + $0x192] sm:$0xff]
      %v3975 = vld [vmem:[%s1022 + $0x1aa] sm:$0xff]
      %v3976 = vld [vmem:[%s1022 + $0x1b2] sm:$0xff]
      %v3977 = vld [vmem:[%s1022 + $0x1ca] sm:$0xff]
      %v3978 = vld [vmem:[%s1022 + $0x1d2] sm:$0xff]
      %v3979 = vld [vmem:[%s1022 + $0x1ea] sm:$0xff]
      %v3980 = vld [vmem:[%s1022 + $0x1f2] sm:$0xff]
      %v3981 = vld [vmem:[%s2 + $0x14] sm:$0xf]
      %v3983 = vsel %vm317, %v3949, 0
      %v3986 = vsel %vm317, %v3950, 0
      %v3989 = vsel %vm317, %v3951, 0
      %v3992 = vsel %vm317, %v3952, 0
      %v3995 = vsel %vm317, %v3953, 0
      %v3998 = vsel %vm317, %v3954, 0
      %v4001 = vsel %vm317, %v3955, 0
      %v4004 = vsel %vm317, %v3956, 0
      %v4007 = vsel %vm317, %v3957, 0
      %v4010 = vsel %vm317, %v3958, 0
      %v4013 = vsel %vm317, %v3959, 0
      %v4016 = vsel %vm317, %v3960, 0
      %v4019 = vsel %vm317, %v3961, 0
      %v4022 = vsel %vm317, %v3962, 0
      %v4025 = vsel %vm317, %v3963, 0
      %v4028 = vsel %vm317, %v3964, 0
      %v4031 = vsel %vm317, %v3965, 0
      %v4034 = vsel %vm317, %v3966, 0
      %v4037 = vsel %vm317, %v3967, 0
      %v4040 = vsel %vm317, %v3968, 0
      %v4043 = vsel %vm317, %v3969, 0
      %v4046 = vsel %vm317, %v3970, 0
      %v4049 = vsel %vm317, %v3971, 0
      %v4052 = vsel %vm317, %v3972, 0
      %v4055 = vsel %vm317, %v3973, 0
      %v4058 = vsel %vm317, %v3974, 0
      %v4061 = vsel %vm317, %v3975, 0
      %v4064 = vsel %vm317, %v3976, 0
      %v4067 = vsel %vm317, %v3977, 0
      %v4070 = vsel %vm317, %v3978, 0
      %v4073 = vsel %vm317, %v3979, 0
      %v4076 = vsel %vm317, %v3980, 0
      %v4079 = vsel %vm414, %v3981, 0
      %4081 = vmatpush.msra.mxu0 0.0
      %4082 = vmatpush.msra.mxu0 0.0
      %4083 = vmatpush.msra.mxu0 0.0
      %4084 = vmatpush.msra.mxu0 0.0
      %4085 = vmatpush.msra.mxu0 0.0
      %4086 = vmatpush.msra.mxu0 0.0
      %4087 = vmatpush.msra.mxu0 0.0
      %4088 = vmatpush.msra.mxu0 0.0
      %4089 = vmatpush.msra.mxu0 0.0
      %4090 = vmatpush.msra.mxu0 0.0
      %4091 = vmatpush.msra.mxu0 0.0
      %4092 = vmatpush.msra.mxu0 0.0
      %4093 = vmatpush.msra.mxu0 0.0
      %4094 = vmatpush.msra.mxu0 0.0
      %4095 = vmatpush.msra.mxu0 0.0
      %4096 = vmatpush.msra.mxu0 %v4079
      %4097 = vmatmul.f32.gmra.mxu0 %v3983
      %v4098 = vpop.f32.mrf.mxu0
      %v4099 = vadd.f32 0.0, %v4098
      %4100 = vmatmul.f32.gmra.mxu0 %v3986
      %v4101 = vpop.f32.mrf.mxu0
      %v4102 = vadd.f32 0.0, %v4101
      %4103 = vmatmul.f32.gmra.mxu0 %v3989
      %v4104 = vpop.f32.mrf.mxu0
      %v4105 = vadd.f32 0.0, %v4104
      %4106 = vmatmul.f32.gmra.mxu0 %v3992
      %v4107 = vpop.f32.mrf.mxu0
      %v4108 = vadd.f32 0.0, %v4107
      %4109 = vmatmul.f32.gmra.mxu0 %v3995
      %v4110 = vpop.f32.mrf.mxu0
      %v4111 = vadd.f32 0.0, %v4110
      %4112 = vmatmul.f32.gmra.mxu0 %v3998
      %v4113 = vpop.f32.mrf.mxu0
      %v4114 = vadd.f32 0.0, %v4113
      %4115 = vmatmul.f32.gmra.mxu0 %v4001
      %v4116 = vpop.f32.mrf.mxu0
      %v4117 = vadd.f32 0.0, %v4116
      %4118 = vmatmul.f32.gmra.mxu0 %v4004
      %v4119 = vpop.f32.mrf.mxu0
      %v4120 = vadd.f32 0.0, %v4119
      %4121 = vmatmul.f32.gmra.mxu0 %v4007
      %v4122 = vpop.f32.mrf.mxu0
      %v4123 = vadd.f32 0.0, %v4122
      %4124 = vmatmul.f32.gmra.mxu0 %v4010
      %v4125 = vpop.f32.mrf.mxu0
      %v4126 = vadd.f32 0.0, %v4125
      %4127 = vmatmul.f32.gmra.mxu0 %v4013
      %v4128 = vpop.f32.mrf.mxu0
      %v4129 = vadd.f32 0.0, %v4128
      %4130 = vmatmul.f32.gmra.mxu0 %v4016
      %v4131 = vpop.f32.mrf.mxu0
      %v4132 = vadd.f32 0.0, %v4131
      %4133 = vmatmul.f32.gmra.mxu0 %v4019
      %v4134 = vpop.f32.mrf.mxu0
      %v4135 = vadd.f32 0.0, %v4134
      %4136 = vmatmul.f32.gmra.mxu0 %v4022
      %v4137 = vpop.f32.mrf.mxu0
      %v4138 = vadd.f32 0.0, %v4137
      %4139 = vmatmul.f32.gmra.mxu0 %v4025
      %v4140 = vpop.f32.mrf.mxu0
      %v4141 = vadd.f32 0.0, %v4140
      %4142 = vmatmul.f32.gmra.mxu0 %v4028
      %v4143 = vpop.f32.mrf.mxu0
      %v4144 = vadd.f32 0.0, %v4143
      %4145 = vmatmul.f32.gmra.mxu0 %v4031
      %v4146 = vpop.f32.mrf.mxu0
      %v4147 = vadd.f32 0.0, %v4146
      %4148 = vmatmul.f32.gmra.mxu0 %v4034
      %v4149 = vpop.f32.mrf.mxu0
      %v4150 = vadd.f32 0.0, %v4149
      %4151 = vmatmul.f32.gmra.mxu0 %v4037
      %v4152 = vpop.f32.mrf.mxu0
      %v4153 = vadd.f32 0.0, %v4152
      %4154 = vmatmul.f32.gmra.mxu0 %v4040
      %v4155 = vpop.f32.mrf.mxu0
      %v4156 = vadd.f32 0.0, %v4155
      %4157 = vmatmul.f32.gmra.mxu0 %v4043
      %v4158 = vpop.f32.mrf.mxu0
      %v4159 = vadd.f32 0.0, %v4158
      %4160 = vmatmul.f32.gmra.mxu0 %v4046
      %v4161 = vpop.f32.mrf.mxu0
      %v4162 = vadd.f32 0.0, %v4161
      %4163 = vmatmul.f32.gmra.mxu0 %v4049
      %v4164 = vpop.f32.mrf.mxu0
      %v4165 = vadd.f32 0.0, %v4164
      %4166 = vmatmul.f32.gmra.mxu0 %v4052
      %v4167 = vpop.f32.mrf.mxu0
      %v4168 = vadd.f32 0.0, %v4167
      %4169 = vmatmul.f32.gmra.mxu0 %v4055
      %v4170 = vpop.f32.mrf.mxu0
      %v4171 = vadd.f32 0.0, %v4170
      %4172 = vmatmul.f32.gmra.mxu0 %v4058
      %v4173 = vpop.f32.mrf.mxu0
      %v4174 = vadd.f32 0.0, %v4173
      %4175 = vmatmul.f32.gmra.mxu0 %v4061
      %v4176 = vpop.f32.mrf.mxu0
      %v4177 = vadd.f32 0.0, %v4176
      %4178 = vmatmul.f32.gmra.mxu0 %v4064
      %v4179 = vpop.f32.mrf.mxu0
      %v4180 = vadd.f32 0.0, %v4179
      %4181 = vmatmul.f32.gmra.mxu0 %v4067
      %v4182 = vpop.f32.mrf.mxu0
      %v4183 = vadd.f32 0.0, %v4182
      %4184 = vmatmul.f32.gmra.mxu0 %v4070
      %v4185 = vpop.f32.mrf.mxu0
      %v4186 = vadd.f32 0.0, %v4185
      %4187 = vmatmul.f32.gmra.mxu0 %v4073
      %v4188 = vpop.f32.mrf.mxu0
      %v4189 = vadd.f32 0.0, %v4188
      %4190 = vmatmul.f32.gmra.mxu0 %v4076
      %v4191 = vpop.f32.mrf.mxu0
      %v4192 = vadd.f32 0.0, %v4191
      %4193 = vdwg.mxu0
      %v4194 = vadd.f32 %v3917, %v4099
      %v4195 = vadd.f32 %v3918, %v4102
      %v4196 = vadd.f32 %v3919, %v4105
      %v4197 = vadd.f32 %v3920, %v4108
      %v4198 = vadd.f32 %v3921, %v4111
      %v4199 = vadd.f32 %v3922, %v4114
      %v4200 = vadd.f32 %v3923, %v4117
      %v4201 = vadd.f32 %v3924, %v4120
      %v4202 = vadd.f32 %v3925, %v4123
      %v4203 = vadd.f32 %v3926, %v4126
      %v4204 = vadd.f32 %v3927, %v4129
      %v4205 = vadd.f32 %v3928, %v4132
      %v4206 = vadd.f32 %v3929, %v4135
      %v4207 = vadd.f32 %v3930, %v4138
      %v4208 = vadd.f32 %v3931, %v4141
      %v4209 = vadd.f32 %v3932, %v4144
      %v4210 = vadd.f32 %v3933, %v4147
      %v4211 = vadd.f32 %v3934, %v4150
      %v4212 = vadd.f32 %v3935, %v4153
      %v4213 = vadd.f32 %v3936, %v4156
      %v4214 = vadd.f32 %v3937, %v4159
      %v4215 = vadd.f32 %v3938, %v4162
      %v4216 = vadd.f32 %v3939, %v4165
      %v4217 = vadd.f32 %v3940, %v4168
      %v4218 = vadd.f32 %v3941, %v4171
      %v4219 = vadd.f32 %v3942, %v4174
      %v4220 = vadd.f32 %v3943, %v4177
      %v4221 = vadd.f32 %v3944, %v4180
      %v4222 = vadd.f32 %v3945, %v4183
      %v4223 = vadd.f32 %v3946, %v4186
      %v4224 = vadd.f32 %v3947, %v4189
      %v4225 = vadd.f32 %v3948, %v4192
      %s4226 = sadd.s32 %s247, 10
      %s4227 = smul.u32 %s4226, 32
      %s4228 = scalar_lea.vmem %s237, %s4227
      %v4229 = vld [vmem:[%s4228] sm:$0xff]
      %v4230 = vld [vmem:[%s4228 + $0x8] sm:$0xff]
      %v4231 = vld [vmem:[%s4228 + $0x20] sm:$0xff]
      %v4232 = vld [vmem:[%s4228 + $0x28] sm:$0xff]
      %v4233 = vld [vmem:[%s4228 + $0x40] sm:$0xff]
      %v4234 = vld [vmem:[%s4228 + $0x48] sm:$0xff]
      %v4235 = vld [vmem:[%s4228 + $0x60] sm:$0xff]
      %v4236 = vld [vmem:[%s4228 + $0x68] sm:$0xff]
      %v4237 = vld [vmem:[%s4228 + $0x80] sm:$0xff]
      %v4238 = vld [vmem:[%s4228 + $0x88] sm:$0xff]
      %v4239 = vld [vmem:[%s4228 + $0xa0] sm:$0xff]
      %v4240 = vld [vmem:[%s4228 + $0xa8] sm:$0xff]
      %v4241 = vld [vmem:[%s4228 + $0xc0] sm:$0xff]
      %v4242 = vld [vmem:[%s4228 + $0xc8] sm:$0xff]
      %v4243 = vld [vmem:[%s4228 + $0xe0] sm:$0xff]
      %v4244 = vld [vmem:[%s4228 + $0xe8] sm:$0xff]
      %v4245 = vld [vmem:[%s4228 + $0x100] sm:$0xff]
      %v4246 = vld [vmem:[%s4228 + $0x108] sm:$0xff]
      %v4247 = vld [vmem:[%s4228 + $0x120] sm:$0xff]
      %v4248 = vld [vmem:[%s4228 + $0x128] sm:$0xff]
      %v4249 = vld [vmem:[%s4228 + $0x140] sm:$0xff]
      %v4250 = vld [vmem:[%s4228 + $0x148] sm:$0xff]
      %v4251 = vld [vmem:[%s4228 + $0x160] sm:$0xff]
      %v4252 = vld [vmem:[%s4228 + $0x168] sm:$0xff]
      %v4253 = vld [vmem:[%s4228 + $0x180] sm:$0xff]
      %v4254 = vld [vmem:[%s4228 + $0x188] sm:$0xff]
      %v4255 = vld [vmem:[%s4228 + $0x1a0] sm:$0xff]
      %v4256 = vld [vmem:[%s4228 + $0x1a8] sm:$0xff]
      %v4257 = vld [vmem:[%s4228 + $0x1c0] sm:$0xff]
      %v4258 = vld [vmem:[%s4228 + $0x1c8] sm:$0xff]
      %v4259 = vld [vmem:[%s4228 + $0x1e0] sm:$0xff]
      %v4260 = vld [vmem:[%s4228 + $0x1e8] sm:$0xff]
      %v4261 = vld [vmem:[%s2 + $0x18] sm:$0xf]
      %v4263 = vsel %vm317, %v4229, 0
      %v4266 = vsel %vm317, %v4230, 0
      %v4269 = vsel %vm317, %v4231, 0
      %v4272 = vsel %vm317, %v4232, 0
      %v4275 = vsel %vm317, %v4233, 0
      %v4278 = vsel %vm317, %v4234, 0
      %v4281 = vsel %vm317, %v4235, 0
      %v4284 = vsel %vm317, %v4236, 0
      %v4287 = vsel %vm317, %v4237, 0
      %v4290 = vsel %vm317, %v4238, 0
      %v4293 = vsel %vm317, %v4239, 0
      %v4296 = vsel %vm317, %v4240, 0
      %v4299 = vsel %vm317, %v4241, 0
      %v4302 = vsel %vm317, %v4242, 0
      %v4305 = vsel %vm317, %v4243, 0
      %v4308 = vsel %vm317, %v4244, 0
      %v4311 = vsel %vm317, %v4245, 0
      %v4314 = vsel %vm317, %v4246, 0
      %v4317 = vsel %vm317, %v4247, 0
      %v4320 = vsel %vm317, %v4248, 0
      %v4323 = vsel %vm317, %v4249, 0
      %v4326 = vsel %vm317, %v4250, 0
      %v4329 = vsel %vm317, %v4251, 0
      %v4332 = vsel %vm317, %v4252, 0
      %v4335 = vsel %vm317, %v4253, 0
      %v4338 = vsel %vm317, %v4254, 0
      %v4341 = vsel %vm317, %v4255, 0
      %v4344 = vsel %vm317, %v4256, 0
      %v4347 = vsel %vm317, %v4257, 0
      %v4350 = vsel %vm317, %v4258, 0
      %v4353 = vsel %vm317, %v4259, 0
      %v4356 = vsel %vm317, %v4260, 0
      %v4359 = vsel %vm414, %v4261, 0
      %4361 = vmatpush.msra.mxu0 0.0
      %4362 = vmatpush.msra.mxu0 0.0
      %4363 = vmatpush.msra.mxu0 0.0
      %4364 = vmatpush.msra.mxu0 0.0
      %4365 = vmatpush.msra.mxu0 0.0
      %4366 = vmatpush.msra.mxu0 0.0
      %4367 = vmatpush.msra.mxu0 0.0
      %4368 = vmatpush.msra.mxu0 0.0
      %4369 = vmatpush.msra.mxu0 0.0
      %4370 = vmatpush.msra.mxu0 0.0
      %4371 = vmatpush.msra.mxu0 0.0
      %4372 = vmatpush.msra.mxu0 0.0
      %4373 = vmatpush.msra.mxu0 0.0
      %4374 = vmatpush.msra.mxu0 0.0
      %4375 = vmatpush.msra.mxu0 0.0
      %4376 = vmatpush.msra.mxu0 %v4359
      %4377 = vmatmul.f32.gmra.mxu0 %v4263
      %v4378 = vpop.f32.mrf.mxu0
      %v4379 = vadd.f32 0.0, %v4378
      %4380 = vmatmul.f32.gmra.mxu0 %v4266
      %v4381 = vpop.f32.mrf.mxu0
      %v4382 = vadd.f32 0.0, %v4381
      %4383 = vmatmul.f32.gmra.mxu0 %v4269
      %v4384 = vpop.f32.mrf.mxu0
      %v4385 = vadd.f32 0.0, %v4384
      %4386 = vmatmul.f32.gmra.mxu0 %v4272
      %v4387 = vpop.f32.mrf.mxu0
      %v4388 = vadd.f32 0.0, %v4387
      %4389 = vmatmul.f32.gmra.mxu0 %v4275
      %v4390 = vpop.f32.mrf.mxu0
      %v4391 = vadd.f32 0.0, %v4390
      %4392 = vmatmul.f32.gmra.mxu0 %v4278
      %v4393 = vpop.f32.mrf.mxu0
      %v4394 = vadd.f32 0.0, %v4393
      %4395 = vmatmul.f32.gmra.mxu0 %v4281
      %v4396 = vpop.f32.mrf.mxu0
      %v4397 = vadd.f32 0.0, %v4396
      %4398 = vmatmul.f32.gmra.mxu0 %v4284
      %v4399 = vpop.f32.mrf.mxu0
      %v4400 = vadd.f32 0.0, %v4399
      %4401 = vmatmul.f32.gmra.mxu0 %v4287
      %v4402 = vpop.f32.mrf.mxu0
      %v4403 = vadd.f32 0.0, %v4402
      %4404 = vmatmul.f32.gmra.mxu0 %v4290
      %v4405 = vpop.f32.mrf.mxu0
      %v4406 = vadd.f32 0.0, %v4405
      %4407 = vmatmul.f32.gmra.mxu0 %v4293
      %v4408 = vpop.f32.mrf.mxu0
      %v4409 = vadd.f32 0.0, %v4408
      %4410 = vmatmul.f32.gmra.mxu0 %v4296
      %v4411 = vpop.f32.mrf.mxu0
      %v4412 = vadd.f32 0.0, %v4411
      %4413 = vmatmul.f32.gmra.mxu0 %v4299
      %v4414 = vpop.f32.mrf.mxu0
      %v4415 = vadd.f32 0.0, %v4414
      %4416 = vmatmul.f32.gmra.mxu0 %v4302
      %v4417 = vpop.f32.mrf.mxu0
      %v4418 = vadd.f32 0.0, %v4417
      %4419 = vmatmul.f32.gmra.mxu0 %v4305
      %v4420 = vpop.f32.mrf.mxu0
      %v4421 = vadd.f32 0.0, %v4420
      %4422 = vmatmul.f32.gmra.mxu0 %v4308
      %v4423 = vpop.f32.mrf.mxu0
      %v4424 = vadd.f32 0.0, %v4423
      %4425 = vmatmul.f32.gmra.mxu0 %v4311
      %v4426 = vpop.f32.mrf.mxu0
      %v4427 = vadd.f32 0.0, %v4426
      %4428 = vmatmul.f32.gmra.mxu0 %v4314
      %v4429 = vpop.f32.mrf.mxu0
      %v4430 = vadd.f32 0.0, %v4429
      %4431 = vmatmul.f32.gmra.mxu0 %v4317
      %v4432 = vpop.f32.mrf.mxu0
      %v4433 = vadd.f32 0.0, %v4432
      %4434 = vmatmul.f32.gmra.mxu0 %v4320
      %v4435 = vpop.f32.mrf.mxu0
      %v4436 = vadd.f32 0.0, %v4435
      %4437 = vmatmul.f32.gmra.mxu0 %v4323
      %v4438 = vpop.f32.mrf.mxu0
      %v4439 = vadd.f32 0.0, %v4438
      %4440 = vmatmul.f32.gmra.mxu0 %v4326
      %v4441 = vpop.f32.mrf.mxu0
      %v4442 = vadd.f32 0.0, %v4441
      %4443 = vmatmul.f32.gmra.mxu0 %v4329
      %v4444 = vpop.f32.mrf.mxu0
      %v4445 = vadd.f32 0.0, %v4444
      %4446 = vmatmul.f32.gmra.mxu0 %v4332
      %v4447 = vpop.f32.mrf.mxu0
      %v4448 = vadd.f32 0.0, %v4447
      %4449 = vmatmul.f32.gmra.mxu0 %v4335
      %v4450 = vpop.f32.mrf.mxu0
      %v4451 = vadd.f32 0.0, %v4450
      %4452 = vmatmul.f32.gmra.mxu0 %v4338
      %v4453 = vpop.f32.mrf.mxu0
      %v4454 = vadd.f32 0.0, %v4453
      %4455 = vmatmul.f32.gmra.mxu0 %v4341
      %v4456 = vpop.f32.mrf.mxu0
      %v4457 = vadd.f32 0.0, %v4456
      %4458 = vmatmul.f32.gmra.mxu0 %v4344
      %v4459 = vpop.f32.mrf.mxu0
      %v4460 = vadd.f32 0.0, %v4459
      %4461 = vmatmul.f32.gmra.mxu0 %v4347
      %v4462 = vpop.f32.mrf.mxu0
      %v4463 = vadd.f32 0.0, %v4462
      %4464 = vmatmul.f32.gmra.mxu0 %v4350
      %v4465 = vpop.f32.mrf.mxu0
      %v4466 = vadd.f32 0.0, %v4465
      %4467 = vmatmul.f32.gmra.mxu0 %v4353
      %v4468 = vpop.f32.mrf.mxu0
      %v4469 = vadd.f32 0.0, %v4468
      %4470 = vmatmul.f32.gmra.mxu0 %v4356
      %v4471 = vpop.f32.mrf.mxu0
      %v4472 = vadd.f32 0.0, %v4471
      %4473 = vdwg.mxu0
      %v4474 = vadd.f32 %v4194, %v4379
      %v4475 = vadd.f32 %v4195, %v4382
      %v4476 = vadd.f32 %v4196, %v4385
      %v4477 = vadd.f32 %v4197, %v4388
      %v4478 = vadd.f32 %v4198, %v4391
      %v4479 = vadd.f32 %v4199, %v4394
      %v4480 = vadd.f32 %v4200, %v4397
      %v4481 = vadd.f32 %v4201, %v4400
      %v4482 = vadd.f32 %v4202, %v4403
      %v4483 = vadd.f32 %v4203, %v4406
      %v4484 = vadd.f32 %v4204, %v4409
      %v4485 = vadd.f32 %v4205, %v4412
      %v4486 = vadd.f32 %v4206, %v4415
      %v4487 = vadd.f32 %v4207, %v4418
      %v4488 = vadd.f32 %v4208, %v4421
      %v4489 = vadd.f32 %v4209, %v4424
      %v4490 = vadd.f32 %v4210, %v4427
      %v4491 = vadd.f32 %v4211, %v4430
      %v4492 = vadd.f32 %v4212, %v4433
      %v4493 = vadd.f32 %v4213, %v4436
      %v4494 = vadd.f32 %v4214, %v4439
      %v4495 = vadd.f32 %v4215, %v4442
      %v4496 = vadd.f32 %v4216, %v4445
      %v4497 = vadd.f32 %v4217, %v4448
      %v4498 = vadd.f32 %v4218, %v4451
      %v4499 = vadd.f32 %v4219, %v4454
      %v4500 = vadd.f32 %v4220, %v4457
      %v4501 = vadd.f32 %v4221, %v4460
      %v4502 = vadd.f32 %v4222, %v4463
      %v4503 = vadd.f32 %v4223, %v4466
      %v4504 = vadd.f32 %v4224, %v4469
      %v4505 = vadd.f32 %v4225, %v4472
      %v4506 = vld [vmem:[%s4228 + $0x5] sm:$0xff]
      %v4507 = vld [vmem:[%s4228 + $0xd] sm:$0xff]
      %v4508 = vld [vmem:[%s4228 + $0x25] sm:$0xff]
      %v4509 = vld [vmem:[%s4228 + $0x2d] sm:$0xff]
      %v4510 = vld [vmem:[%s4228 + $0x45] sm:$0xff]
      %v4511 = vld [vmem:[%s4228 + $0x4d] sm:$0xff]
      %v4512 = vld [vmem:[%s4228 + $0x65] sm:$0xff]
      %v4513 = vld [vmem:[%s4228 + $0x6d] sm:$0xff]
      %v4514 = vld [vmem:[%s4228 + $0x85] sm:$0xff]
      %v4515 = vld [vmem:[%s4228 + $0x8d] sm:$0xff]
      %v4516 = vld [vmem:[%s4228 + $0xa5] sm:$0xff]
      %v4517 = vld [vmem:[%s4228 + $0xad] sm:$0xff]
      %v4518 = vld [vmem:[%s4228 + $0xc5] sm:$0xff]
      %v4519 = vld [vmem:[%s4228 + $0xcd] sm:$0xff]
      %v4520 = vld [vmem:[%s4228 + $0xe5] sm:$0xff]
      %v4521 = vld [vmem:[%s4228 + $0xed] sm:$0xff]
      %v4522 = vld [vmem:[%s4228 + $0x105] sm:$0xff]
      %v4523 = vld [vmem:[%s4228 + $0x10d] sm:$0xff]
      %v4524 = vld [vmem:[%s4228 + $0x125] sm:$0xff]
      %v4525 = vld [vmem:[%s4228 + $0x12d] sm:$0xff]
      %v4526 = vld [vmem:[%s4228 + $0x145] sm:$0xff]
      %v4527 = vld [vmem:[%s4228 + $0x14d] sm:$0xff]
      %v4528 = vld [vmem:[%s4228 + $0x165] sm:$0xff]
      %v4529 = vld [vmem:[%s4228 + $0x16d] sm:$0xff]
      %v4530 = vld [vmem:[%s4228 + $0x185] sm:$0xff]
      %v4531 = vld [vmem:[%s4228 + $0x18d] sm:$0xff]
      %v4532 = vld [vmem:[%s4228 + $0x1a5] sm:$0xff]
      %v4533 = vld [vmem:[%s4228 + $0x1ad] sm:$0xff]
      %v4534 = vld [vmem:[%s4228 + $0x1c5] sm:$0xff]
      %v4535 = vld [vmem:[%s4228 + $0x1cd] sm:$0xff]
      %v4536 = vld [vmem:[%s4228 + $0x1e5] sm:$0xff]
      %v4537 = vld [vmem:[%s4228 + $0x1ed] sm:$0xff]
      %v4538 = vld [vmem:[%s2 + $0x1c] sm:$0xf]
      %v4540 = vsel %vm317, %v4506, 0
      %v4543 = vsel %vm317, %v4507, 0
      %v4546 = vsel %vm317, %v4508, 0
      %v4549 = vsel %vm317, %v4509, 0
      %v4552 = vsel %vm317, %v4510, 0
      %v4555 = vsel %vm317, %v4511, 0
      %v4558 = vsel %vm317, %v4512, 0
      %v4561 = vsel %vm317, %v4513, 0
      %v4564 = vsel %vm317, %v4514, 0
      %v4567 = vsel %vm317, %v4515, 0
      %v4570 = vsel %vm317, %v4516, 0
      %v4573 = vsel %vm317, %v4517, 0
      %v4576 = vsel %vm317, %v4518, 0
      %v4579 = vsel %vm317, %v4519, 0
      %v4582 = vsel %vm317, %v4520, 0
      %v4585 = vsel %vm317, %v4521, 0
      %v4588 = vsel %vm317, %v4522, 0
      %v4591 = vsel %vm317, %v4523, 0
      %v4594 = vsel %vm317, %v4524, 0
      %v4597 = vsel %vm317, %v4525, 0
      %v4600 = vsel %vm317, %v4526, 0
      %v4603 = vsel %vm317, %v4527, 0
      %v4606 = vsel %vm317, %v4528, 0
      %v4609 = vsel %vm317, %v4529, 0
      %v4612 = vsel %vm317, %v4530, 0
      %v4615 = vsel %vm317, %v4531, 0
      %v4618 = vsel %vm317, %v4532, 0
      %v4621 = vsel %vm317, %v4533, 0
      %v4624 = vsel %vm317, %v4534, 0
      %v4627 = vsel %vm317, %v4535, 0
      %v4630 = vsel %vm317, %v4536, 0
      %v4633 = vsel %vm317, %v4537, 0
      %v4636 = vsel %vm414, %v4538, 0
      %4638 = vmatpush.msra.mxu0 0.0
      %4639 = vmatpush.msra.mxu0 0.0
      %4640 = vmatpush.msra.mxu0 0.0
      %4641 = vmatpush.msra.mxu0 0.0
      %4642 = vmatpush.msra.mxu0 0.0
      %4643 = vmatpush.msra.mxu0 0.0
      %4644 = vmatpush.msra.mxu0 0.0
      %4645 = vmatpush.msra.mxu0 0.0
      %4646 = vmatpush.msra.mxu0 0.0
      %4647 = vmatpush.msra.mxu0 0.0
      %4648 = vmatpush.msra.mxu0 0.0
      %4649 = vmatpush.msra.mxu0 0.0
      %4650 = vmatpush.msra.mxu0 0.0
      %4651 = vmatpush.msra.mxu0 0.0
      %4652 = vmatpush.msra.mxu0 0.0
      %4653 = vmatpush.msra.mxu0 %v4636
      %4654 = vmatmul.f32.gmra.mxu0 %v4540
      %v4655 = vpop.f32.mrf.mxu0
      %v4656 = vadd.f32 0.0, %v4655
      %4657 = vmatmul.f32.gmra.mxu0 %v4543
      %v4658 = vpop.f32.mrf.mxu0
      %v4659 = vadd.f32 0.0, %v4658
      %4660 = vmatmul.f32.gmra.mxu0 %v4546
      %v4661 = vpop.f32.mrf.mxu0
      %v4662 = vadd.f32 0.0, %v4661
      %4663 = vmatmul.f32.gmra.mxu0 %v4549
      %v4664 = vpop.f32.mrf.mxu0
      %v4665 = vadd.f32 0.0, %v4664
      %4666 = vmatmul.f32.gmra.mxu0 %v4552
      %v4667 = vpop.f32.mrf.mxu0
      %v4668 = vadd.f32 0.0, %v4667
      %4669 = vmatmul.f32.gmra.mxu0 %v4555
      %v4670 = vpop.f32.mrf.mxu0
      %v4671 = vadd.f32 0.0, %v4670
      %4672 = vmatmul.f32.gmra.mxu0 %v4558
      %v4673 = vpop.f32.mrf.mxu0
      %v4674 = vadd.f32 0.0, %v4673
      %4675 = vmatmul.f32.gmra.mxu0 %v4561
      %v4676 = vpop.f32.mrf.mxu0
      %v4677 = vadd.f32 0.0, %v4676
      %4678 = vmatmul.f32.gmra.mxu0 %v4564
      %v4679 = vpop.f32.mrf.mxu0
      %v4680 = vadd.f32 0.0, %v4679
      %4681 = vmatmul.f32.gmra.mxu0 %v4567
      %v4682 = vpop.f32.mrf.mxu0
      %v4683 = vadd.f32 0.0, %v4682
      %4684 = vmatmul.f32.gmra.mxu0 %v4570
      %v4685 = vpop.f32.mrf.mxu0
      %v4686 = vadd.f32 0.0, %v4685
      %4687 = vmatmul.f32.gmra.mxu0 %v4573
      %v4688 = vpop.f32.mrf.mxu0
      %v4689 = vadd.f32 0.0, %v4688
      %4690 = vmatmul.f32.gmra.mxu0 %v4576
      %v4691 = vpop.f32.mrf.mxu0
      %v4692 = vadd.f32 0.0, %v4691
      %4693 = vmatmul.f32.gmra.mxu0 %v4579
      %v4694 = vpop.f32.mrf.mxu0
      %v4695 = vadd.f32 0.0, %v4694
      %4696 = vmatmul.f32.gmra.mxu0 %v4582
      %v4697 = vpop.f32.mrf.mxu0
      %v4698 = vadd.f32 0.0, %v4697
      %4699 = vmatmul.f32.gmra.mxu0 %v4585
      %v4700 = vpop.f32.mrf.mxu0
      %v4701 = vadd.f32 0.0, %v4700
      %4702 = vmatmul.f32.gmra.mxu0 %v4588
      %v4703 = vpop.f32.mrf.mxu0
      %v4704 = vadd.f32 0.0, %v4703
      %4705 = vmatmul.f32.gmra.mxu0 %v4591
      %v4706 = vpop.f32.mrf.mxu0
      %v4707 = vadd.f32 0.0, %v4706
      %4708 = vmatmul.f32.gmra.mxu0 %v4594
      %v4709 = vpop.f32.mrf.mxu0
      %v4710 = vadd.f32 0.0, %v4709
      %4711 = vmatmul.f32.gmra.mxu0 %v4597
      %v4712 = vpop.f32.mrf.mxu0
      %v4713 = vadd.f32 0.0, %v4712
      %4714 = vmatmul.f32.gmra.mxu0 %v4600
      %v4715 = vpop.f32.mrf.mxu0
      %v4716 = vadd.f32 0.0, %v4715
      %4717 = vmatmul.f32.gmra.mxu0 %v4603
      %v4718 = vpop.f32.mrf.mxu0
      %v4719 = vadd.f32 0.0, %v4718
      %4720 = vmatmul.f32.gmra.mxu0 %v4606
      %v4721 = vpop.f32.mrf.mxu0
      %v4722 = vadd.f32 0.0, %v4721
      %4723 = vmatmul.f32.gmra.mxu0 %v4609
      %v4724 = vpop.f32.mrf.mxu0
      %v4725 = vadd.f32 0.0, %v4724
      %4726 = vmatmul.f32.gmra.mxu0 %v4612
      %v4727 = vpop.f32.mrf.mxu0
      %v4728 = vadd.f32 0.0, %v4727
      %4729 = vmatmul.f32.gmra.mxu0 %v4615
      %v4730 = vpop.f32.mrf.mxu0
      %v4731 = vadd.f32 0.0, %v4730
      %4732 = vmatmul.f32.gmra.mxu0 %v4618
      %v4733 = vpop.f32.mrf.mxu0
      %v4734 = vadd.f32 0.0, %v4733
      %4735 = vmatmul.f32.gmra.mxu0 %v4621
      %v4736 = vpop.f32.mrf.mxu0
      %v4737 = vadd.f32 0.0, %v4736
      %4738 = vmatmul.f32.gmra.mxu0 %v4624
      %v4739 = vpop.f32.mrf.mxu0
      %v4740 = vadd.f32 0.0, %v4739
      %4741 = vmatmul.f32.gmra.mxu0 %v4627
      %v4742 = vpop.f32.mrf.mxu0
      %v4743 = vadd.f32 0.0, %v4742
      %4744 = vmatmul.f32.gmra.mxu0 %v4630
      %v4745 = vpop.f32.mrf.mxu0
      %v4746 = vadd.f32 0.0, %v4745
      %4747 = vmatmul.f32.gmra.mxu0 %v4633
      %v4748 = vpop.f32.mrf.mxu0
      %v4749 = vadd.f32 0.0, %v4748
      %4750 = vdwg.mxu0
      %v4751 = vadd.f32 %v4474, %v4656
      %v4752 = vadd.f32 %v4475, %v4659
      %v4753 = vadd.f32 %v4476, %v4662
      %v4754 = vadd.f32 %v4477, %v4665
      %v4755 = vadd.f32 %v4478, %v4668
      %v4756 = vadd.f32 %v4479, %v4671
      %v4757 = vadd.f32 %v4480, %v4674
      %v4758 = vadd.f32 %v4481, %v4677
      %v4759 = vadd.f32 %v4482, %v4680
      %v4760 = vadd.f32 %v4483, %v4683
      %v4761 = vadd.f32 %v4484, %v4686
      %v4762 = vadd.f32 %v4485, %v4689
      %v4763 = vadd.f32 %v4486, %v4692
      %v4764 = vadd.f32 %v4487, %v4695
      %v4765 = vadd.f32 %v4488, %v4698
      %v4766 = vadd.f32 %v4489, %v4701
      %v4767 = vadd.f32 %v4490, %v4704
      %v4768 = vadd.f32 %v4491, %v4707
      %v4769 = vadd.f32 %v4492, %v4710
      %v4770 = vadd.f32 %v4493, %v4713
      %v4771 = vadd.f32 %v4494, %v4716
      %v4772 = vadd.f32 %v4495, %v4719
      %v4773 = vadd.f32 %v4496, %v4722
      %v4774 = vadd.f32 %v4497, %v4725
      %v4775 = vadd.f32 %v4498, %v4728
      %v4776 = vadd.f32 %v4499, %v4731
      %v4777 = vadd.f32 %v4500, %v4734
      %v4778 = vadd.f32 %v4501, %v4737
      %v4779 = vadd.f32 %v4502, %v4740
      %v4780 = vadd.f32 %v4503, %v4743
      %v4781 = vadd.f32 %v4504, %v4746
      %v4782 = vadd.f32 %v4505, %v4749
      %v4783 = vld [vmem:[%s4228 + $0xa] sm:$0xff]
      %v4784 = vld [vmem:[%s4228 + $0x12] sm:$0xff]
      %v4785 = vld [vmem:[%s4228 + $0x2a] sm:$0xff]
      %v4786 = vld [vmem:[%s4228 + $0x32] sm:$0xff]
      %v4787 = vld [vmem:[%s4228 + $0x4a] sm:$0xff]
      %v4788 = vld [vmem:[%s4228 + $0x52] sm:$0xff]
      %v4789 = vld [vmem:[%s4228 + $0x6a] sm:$0xff]
      %v4790 = vld [vmem:[%s4228 + $0x72] sm:$0xff]
      %v4791 = vld [vmem:[%s4228 + $0x8a] sm:$0xff]
      %v4792 = vld [vmem:[%s4228 + $0x92] sm:$0xff]
      %v4793 = vld [vmem:[%s4228 + $0xaa] sm:$0xff]
      %v4794 = vld [vmem:[%s4228 + $0xb2] sm:$0xff]
      %v4795 = vld [vmem:[%s4228 + $0xca] sm:$0xff]
      %v4796 = vld [vmem:[%s4228 + $0xd2] sm:$0xff]
      %v4797 = vld [vmem:[%s4228 + $0xea] sm:$0xff]
      %v4798 = vld [vmem:[%s4228 + $0xf2] sm:$0xff]
      %v4799 = vld [vmem:[%s4228 + $0x10a] sm:$0xff]
      %v4800 = vld [vmem:[%s4228 + $0x112] sm:$0xff]
      %v4801 = vld [vmem:[%s4228 + $0x12a] sm:$0xff]
      %v4802 = vld [vmem:[%s4228 + $0x132] sm:$0xff]
      %v4803 = vld [vmem:[%s4228 + $0x14a] sm:$0xff]
      %v4804 = vld [vmem:[%s4228 + $0x152] sm:$0xff]
      %v4805 = vld [vmem:[%s4228 + $0x16a] sm:$0xff]
      %v4806 = vld [vmem:[%s4228 + $0x172] sm:$0xff]
      %v4807 = vld [vmem:[%s4228 + $0x18a] sm:$0xff]
      %v4808 = vld [vmem:[%s4228 + $0x192] sm:$0xff]
      %v4809 = vld [vmem:[%s4228 + $0x1aa] sm:$0xff]
      %v4810 = vld [vmem:[%s4228 + $0x1b2] sm:$0xff]
      %v4811 = vld [vmem:[%s4228 + $0x1ca] sm:$0xff]
      %v4812 = vld [vmem:[%s4228 + $0x1d2] sm:$0xff]
      %v4813 = vld [vmem:[%s4228 + $0x1ea] sm:$0xff]
      %v4814 = vld [vmem:[%s4228 + $0x1f2] sm:$0xff]
      %v4815 = vld [vmem:[%s2 + $0x20] sm:$0xf]
      %v4817 = vsel %vm317, %v4783, 0
      %v4820 = vsel %vm317, %v4784, 0
      %v4823 = vsel %vm317, %v4785, 0
      %v4826 = vsel %vm317, %v4786, 0
      %v4829 = vsel %vm317, %v4787, 0
      %v4832 = vsel %vm317, %v4788, 0
      %v4835 = vsel %vm317, %v4789, 0
      %v4838 = vsel %vm317, %v4790, 0
      %v4841 = vsel %vm317, %v4791, 0
      %v4844 = vsel %vm317, %v4792, 0
      %v4847 = vsel %vm317, %v4793, 0
      %v4850 = vsel %vm317, %v4794, 0
      %v4853 = vsel %vm317, %v4795, 0
      %v4856 = vsel %vm317, %v4796, 0
      %v4859 = vsel %vm317, %v4797, 0
      %v4862 = vsel %vm317, %v4798, 0
      %v4865 = vsel %vm317, %v4799, 0
      %v4868 = vsel %vm317, %v4800, 0
      %v4871 = vsel %vm317, %v4801, 0
      %v4874 = vsel %vm317, %v4802, 0
      %v4877 = vsel %vm317, %v4803, 0
      %v4880 = vsel %vm317, %v4804, 0
      %v4883 = vsel %vm317, %v4805, 0
      %v4886 = vsel %vm317, %v4806, 0
      %v4889 = vsel %vm317, %v4807, 0
      %v4892 = vsel %vm317, %v4808, 0
      %v4895 = vsel %vm317, %v4809, 0
      %v4898 = vsel %vm317, %v4810, 0
      %v4901 = vsel %vm317, %v4811, 0
      %v4904 = vsel %vm317, %v4812, 0
      %v4907 = vsel %vm317, %v4813, 0
      %v4910 = vsel %vm317, %v4814, 0
      %v4913 = vsel %vm414, %v4815, 0
      %4915 = vmatpush.msra.mxu0 0.0
      %4916 = vmatpush.msra.mxu0 0.0
      %4917 = vmatpush.msra.mxu0 0.0
      %4918 = vmatpush.msra.mxu0 0.0
      %4919 = vmatpush.msra.mxu0 0.0
      %4920 = vmatpush.msra.mxu0 0.0
      %4921 = vmatpush.msra.mxu0 0.0
      %4922 = vmatpush.msra.mxu0 0.0
      %4923 = vmatpush.msra.mxu0 0.0
      %4924 = vmatpush.msra.mxu0 0.0
      %4925 = vmatpush.msra.mxu0 0.0
      %4926 = vmatpush.msra.mxu0 0.0
      %4927 = vmatpush.msra.mxu0 0.0
      %4928 = vmatpush.msra.mxu0 0.0
      %4929 = vmatpush.msra.mxu0 0.0
      %4930 = vmatpush.msra.mxu0 %v4913
      %4931 = vmatmul.f32.gmra.mxu0 %v4817
      %v4932 = vpop.f32.mrf.mxu0
      %v4933 = vadd.f32 0.0, %v4932
      %4934 = vmatmul.f32.gmra.mxu0 %v4820
      %v4935 = vpop.f32.mrf.mxu0
      %v4936 = vadd.f32 0.0, %v4935
      %4937 = vmatmul.f32.gmra.mxu0 %v4823
      %v4938 = vpop.f32.mrf.mxu0
      %v4939 = vadd.f32 0.0, %v4938
      %4940 = vmatmul.f32.gmra.mxu0 %v4826
      %v4941 = vpop.f32.mrf.mxu0
      %v4942 = vadd.f32 0.0, %v4941
      %4943 = vmatmul.f32.gmra.mxu0 %v4829
      %v4944 = vpop.f32.mrf.mxu0
      %v4945 = vadd.f32 0.0, %v4944
      %4946 = vmatmul.f32.gmra.mxu0 %v4832
      %v4947 = vpop.f32.mrf.mxu0
      %v4948 = vadd.f32 0.0, %v4947
      %4949 = vmatmul.f32.gmra.mxu0 %v4835
      %v4950 = vpop.f32.mrf.mxu0
      %v4951 = vadd.f32 0.0, %v4950
      %4952 = vmatmul.f32.gmra.mxu0 %v4838
      %v4953 = vpop.f32.mrf.mxu0
      %v4954 = vadd.f32 0.0, %v4953
      %4955 = vmatmul.f32.gmra.mxu0 %v4841
      %v4956 = vpop.f32.mrf.mxu0
      %v4957 = vadd.f32 0.0, %v4956
      %4958 = vmatmul.f32.gmra.mxu0 %v4844
      %v4959 = vpop.f32.mrf.mxu0
      %v4960 = vadd.f32 0.0, %v4959
      %4961 = vmatmul.f32.gmra.mxu0 %v4847
      %v4962 = vpop.f32.mrf.mxu0
      %v4963 = vadd.f32 0.0, %v4962
      %4964 = vmatmul.f32.gmra.mxu0 %v4850
      %v4965 = vpop.f32.mrf.mxu0
      %v4966 = vadd.f32 0.0, %v4965
      %4967 = vmatmul.f32.gmra.mxu0 %v4853
      %v4968 = vpop.f32.mrf.mxu0
      %v4969 = vadd.f32 0.0, %v4968
      %4970 = vmatmul.f32.gmra.mxu0 %v4856
      %v4971 = vpop.f32.mrf.mxu0
      %v4972 = vadd.f32 0.0, %v4971
      %4973 = vmatmul.f32.gmra.mxu0 %v4859
      %v4974 = vpop.f32.mrf.mxu0
      %v4975 = vadd.f32 0.0, %v4974
      %4976 = vmatmul.f32.gmra.mxu0 %v4862
      %v4977 = vpop.f32.mrf.mxu0
      %v4978 = vadd.f32 0.0, %v4977
      %4979 = vmatmul.f32.gmra.mxu0 %v4865
      %v4980 = vpop.f32.mrf.mxu0
      %v4981 = vadd.f32 0.0, %v4980
      %4982 = vmatmul.f32.gmra.mxu0 %v4868
      %v4983 = vpop.f32.mrf.mxu0
      %v4984 = vadd.f32 0.0, %v4983
      %4985 = vmatmul.f32.gmra.mxu0 %v4871
      %v4986 = vpop.f32.mrf.mxu0
      %v4987 = vadd.f32 0.0, %v4986
      %4988 = vmatmul.f32.gmra.mxu0 %v4874
      %v4989 = vpop.f32.mrf.mxu0
      %v4990 = vadd.f32 0.0, %v4989
      %4991 = vmatmul.f32.gmra.mxu0 %v4877
      %v4992 = vpop.f32.mrf.mxu0
      %v4993 = vadd.f32 0.0, %v4992
      %4994 = vmatmul.f32.gmra.mxu0 %v4880
      %v4995 = vpop.f32.mrf.mxu0
      %v4996 = vadd.f32 0.0, %v4995
      %4997 = vmatmul.f32.gmra.mxu0 %v4883
      %v4998 = vpop.f32.mrf.mxu0
      %v4999 = vadd.f32 0.0, %v4998
      %5000 = vmatmul.f32.gmra.mxu0 %v4886
      %v5001 = vpop.f32.mrf.mxu0
      %v5002 = vadd.f32 0.0, %v5001
      %5003 = vmatmul.f32.gmra.mxu0 %v4889
      %v5004 = vpop.f32.mrf.mxu0
      %v5005 = vadd.f32 0.0, %v5004
      %5006 = vmatmul.f32.gmra.mxu0 %v4892
      %v5007 = vpop.f32.mrf.mxu0
      %v5008 = vadd.f32 0.0, %v5007
      %5009 = vmatmul.f32.gmra.mxu0 %v4895
      %v5010 = vpop.f32.mrf.mxu0
      %v5011 = vadd.f32 0.0, %v5010
      %5012 = vmatmul.f32.gmra.mxu0 %v4898
      %v5013 = vpop.f32.mrf.mxu0
      %v5014 = vadd.f32 0.0, %v5013
      %5015 = vmatmul.f32.gmra.mxu0 %v4901
      %v5016 = vpop.f32.mrf.mxu0
      %v5017 = vadd.f32 0.0, %v5016
      %5018 = vmatmul.f32.gmra.mxu0 %v4904
      %v5019 = vpop.f32.mrf.mxu0
      %v5020 = vadd.f32 0.0, %v5019
      %5021 = vmatmul.f32.gmra.mxu0 %v4907
      %v5022 = vpop.f32.mrf.mxu0
      %v5023 = vadd.f32 0.0, %v5022
      %5024 = vmatmul.f32.gmra.mxu0 %v4910
      %v5025 = vpop.f32.mrf.mxu0
      %v5026 = vadd.f32 0.0, %v5025
      %5027 = vdwg.mxu0
      %v5028 = vadd.f32 %v4751, %v4933
      %v5029 = vadd.f32 %v4752, %v4936
      %v5030 = vadd.f32 %v4753, %v4939
      %v5031 = vadd.f32 %v4754, %v4942
      %v5032 = vadd.f32 %v4755, %v4945
      %v5033 = vadd.f32 %v4756, %v4948
      %v5034 = vadd.f32 %v4757, %v4951
      %v5035 = vadd.f32 %v4758, %v4954
      %v5036 = vadd.f32 %v4759, %v4957
      %v5037 = vadd.f32 %v4760, %v4960
      %v5038 = vadd.f32 %v4761, %v4963
      %v5039 = vadd.f32 %v4762, %v4966
      %v5040 = vadd.f32 %v4763, %v4969
      %v5041 = vadd.f32 %v4764, %v4972
      %v5042 = vadd.f32 %v4765, %v4975
      %v5043 = vadd.f32 %v4766, %v4978
      %v5044 = vadd.f32 %v4767, %v4981
      %v5045 = vadd.f32 %v4768, %v4984
      %v5046 = vadd.f32 %v4769, %v4987
      %v5047 = vadd.f32 %v4770, %v4990
      %v5048 = vadd.f32 %v4771, %v4993
      %v5049 = vadd.f32 %v4772, %v4996
      %v5050 = vadd.f32 %v4773, %v4999
      %v5051 = vadd.f32 %v4774, %v5002
      %v5052 = vadd.f32 %v4775, %v5005
      %v5053 = vadd.f32 %v4776, %v5008
      %v5054 = vadd.f32 %v4777, %v5011
      %v5055 = vadd.f32 %v4778, %v5014
      %v5056 = vadd.f32 %v4779, %v5017
      %v5057 = vadd.f32 %v4780, %v5020
      %v5058 = vadd.f32 %v4781, %v5023
      %v5059 = vadd.f32 %v4782, %v5026
      %v5060 = vld [vmem:[%s4 + $0x1] sm:$0x1]
      %v5061 = vperm.slane %v5060, 0
      %v5062 = vadd.f32 %v5028, %v5061
      %v5063 = vadd.f32 %v5029, %v5061
      %v5064 = vadd.f32 %v5030, %v5061
      %v5065 = vadd.f32 %v5031, %v5061
      %v5066 = vadd.f32 %v5032, %v5061
      %v5067 = vadd.f32 %v5033, %v5061
      %v5068 = vadd.f32 %v5034, %v5061
      %v5069 = vadd.f32 %v5035, %v5061
      %v5070 = vadd.f32 %v5036, %v5061
      %v5071 = vadd.f32 %v5037, %v5061
      %v5072 = vadd.f32 %v5038, %v5061
      %v5073 = vadd.f32 %v5039, %v5061
      %v5074 = vadd.f32 %v5040, %v5061
      %v5075 = vadd.f32 %v5041, %v5061
      %v5076 = vadd.f32 %v5042, %v5061
      %v5077 = vadd.f32 %v5043, %v5061
      %v5078 = vadd.f32 %v5044, %v5061
      %v5079 = vadd.f32 %v5045, %v5061
      %v5080 = vadd.f32 %v5046, %v5061
      %v5081 = vadd.f32 %v5047, %v5061
      %v5082 = vadd.f32 %v5048, %v5061
      %v5083 = vadd.f32 %v5049, %v5061
      %v5084 = vadd.f32 %v5050, %v5061
      %v5085 = vadd.f32 %v5051, %v5061
      %v5086 = vadd.f32 %v5052, %v5061
      %v5087 = vadd.f32 %v5053, %v5061
      %v5088 = vadd.f32 %v5054, %v5061
      %v5089 = vadd.f32 %v5055, %v5061
      %v5090 = vadd.f32 %v5056, %v5061
      %v5091 = vadd.f32 %v5057, %v5061
      %v5092 = vadd.f32 %v5058, %v5061
      %v5093 = vadd.f32 %v5059, %v5061
      %v5094 = vmax.f32 %v5062, 0.0
      %v5095 = vmax.f32 %v5063, 0.0
      %v5096 = vmax.f32 %v5064, 0.0
      %v5097 = vmax.f32 %v5065, 0.0
      %v5098 = vmax.f32 %v5066, 0.0
      %v5099 = vmax.f32 %v5067, 0.0
      %v5100 = vmax.f32 %v5068, 0.0
      %v5101 = vmax.f32 %v5069, 0.0
      %v5102 = vmax.f32 %v5070, 0.0
      %v5103 = vmax.f32 %v5071, 0.0
      %v5104 = vmax.f32 %v5072, 0.0
      %v5105 = vmax.f32 %v5073, 0.0
      %v5106 = vmax.f32 %v5074, 0.0
      %v5107 = vmax.f32 %v5075, 0.0
      %v5108 = vmax.f32 %v5076, 0.0
      %v5109 = vmax.f32 %v5077, 0.0
      %v5110 = vmax.f32 %v5078, 0.0
      %v5111 = vmax.f32 %v5079, 0.0
      %v5112 = vmax.f32 %v5080, 0.0
      %v5113 = vmax.f32 %v5081, 0.0
      %v5114 = vmax.f32 %v5082, 0.0
      %v5115 = vmax.f32 %v5083, 0.0
      %v5116 = vmax.f32 %v5084, 0.0
      %v5117 = vmax.f32 %v5085, 0.0
      %v5118 = vmax.f32 %v5086, 0.0
      %v5119 = vmax.f32 %v5087, 0.0
      %v5120 = vmax.f32 %v5088, 0.0
      %v5121 = vmax.f32 %v5089, 0.0
      %v5122 = vmax.f32 %v5090, 0.0
      %v5123 = vmax.f32 %v5091, 0.0
      %v5124 = vmax.f32 %v5092, 0.0
      %v5125 = vmax.f32 %v5093, 0.0
      %v5126 = vld [vmem:[%s3] sm:$0xf]
      %v5127 = vld [vmem:[%s3 + $0x4] sm:$0xf]
      %v5129 = vsel %vm317, %v5094, 0
      %v5132 = vsel %vm317, %v5095, 0
      %v5135 = vsel %vm317, %v5096, 0
      %v5138 = vsel %vm317, %v5097, 0
      %v5141 = vsel %vm317, %v5098, 0
      %v5144 = vsel %vm317, %v5099, 0
      %v5147 = vsel %vm317, %v5100, 0
      %v5150 = vsel %vm317, %v5101, 0
      %v5153 = vsel %vm317, %v5102, 0
      %v5156 = vsel %vm317, %v5103, 0
      %v5159 = vsel %vm317, %v5104, 0
      %v5162 = vsel %vm317, %v5105, 0
      %v5165 = vsel %vm317, %v5106, 0
      %v5168 = vsel %vm317, %v5107, 0
      %v5171 = vsel %vm317, %v5108, 0
      %v5174 = vsel %vm317, %v5109, 0
      %v5177 = vsel %vm317, %v5110, 0
      %v5180 = vsel %vm317, %v5111, 0
      %v5183 = vsel %vm317, %v5112, 0
      %v5186 = vsel %vm317, %v5113, 0
      %v5189 = vsel %vm317, %v5114, 0
      %v5192 = vsel %vm317, %v5115, 0
      %v5195 = vsel %vm317, %v5116, 0
      %v5198 = vsel %vm317, %v5117, 0
      %v5201 = vsel %vm317, %v5118, 0
      %v5204 = vsel %vm317, %v5119, 0
      %v5207 = vsel %vm317, %v5120, 0
      %v5210 = vsel %vm317, %v5121, 0
      %v5213 = vsel %vm317, %v5122, 0
      %v5216 = vsel %vm317, %v5123, 0
      %v5219 = vsel %vm317, %v5124, 0
      %v5222 = vsel %vm317, %v5125, 0
      %v5225 = vsel %vm414, %v5127, 0
      %5227 = vmatpush.msra.mxu0 0.0
      %5228 = vmatpush.msra.mxu0 0.0
      %5229 = vmatpush.msra.mxu0 0.0
      %5230 = vmatpush.msra.mxu0 0.0
      %5231 = vmatpush.msra.mxu0 0.0
      %5232 = vmatpush.msra.mxu0 0.0
      %5233 = vmatpush.msra.mxu0 0.0
      %5234 = vmatpush.msra.mxu0 0.0
      %5235 = vmatpush.msra.mxu0 0.0
      %5236 = vmatpush.msra.mxu0 0.0
      %5237 = vmatpush.msra.mxu0 0.0
      %5238 = vmatpush.msra.mxu0 0.0
      %5239 = vmatpush.msra.mxu0 0.0
      %5240 = vmatpush.msra.mxu0 0.0
      %5241 = vmatpush.msra.mxu0 0.0
      %5242 = vmatpush.msra.mxu0 %v5225
      %5243 = vmatmul.f32.gmra.mxu0 %v5129
      %v5244 = vpop.f32.mrf.mxu0
      %v5245 = vadd.f32 0.0, %v5244
      %5246 = vmatmul.f32.gmra.mxu0 %v5132
      %v5247 = vpop.f32.mrf.mxu0
      %v5248 = vadd.f32 0.0, %v5247
      %5249 = vmatmul.f32.gmra.mxu0 %v5135
      %v5250 = vpop.f32.mrf.mxu0
      %v5251 = vadd.f32 0.0, %v5250
      %5252 = vmatmul.f32.gmra.mxu0 %v5138
      %v5253 = vpop.f32.mrf.mxu0
      %v5254 = vadd.f32 0.0, %v5253
      %5255 = vmatmul.f32.gmra.mxu0 %v5141
      %v5256 = vpop.f32.mrf.mxu0
      %v5257 = vadd.f32 0.0, %v5256
      %5258 = vmatmul.f32.gmra.mxu0 %v5144
      %v5259 = vpop.f32.mrf.mxu0
      %v5260 = vadd.f32 0.0, %v5259
      %5261 = vmatmul.f32.gmra.mxu0 %v5147
      %v5262 = vpop.f32.mrf.mxu0
      %v5263 = vadd.f32 0.0, %v5262
      %5264 = vmatmul.f32.gmra.mxu0 %v5150
      %v5265 = vpop.f32.mrf.mxu0
      %v5266 = vadd.f32 0.0, %v5265
      %5267 = vmatmul.f32.gmra.mxu0 %v5153
      %v5268 = vpop.f32.mrf.mxu0
      %v5269 = vadd.f32 0.0, %v5268
      %5270 = vmatmul.f32.gmra.mxu0 %v5156
      %v5271 = vpop.f32.mrf.mxu0
      %v5272 = vadd.f32 0.0, %v5271
      %5273 = vmatmul.f32.gmra.mxu0 %v5159
      %v5274 = vpop.f32.mrf.mxu0
      %v5275 = vadd.f32 0.0, %v5274
      %5276 = vmatmul.f32.gmra.mxu0 %v5162
      %v5277 = vpop.f32.mrf.mxu0
      %v5278 = vadd.f32 0.0, %v5277
      %5279 = vmatmul.f32.gmra.mxu0 %v5165
      %v5280 = vpop.f32.mrf.mxu0
      %v5281 = vadd.f32 0.0, %v5280
      %5282 = vmatmul.f32.gmra.mxu0 %v5168
      %v5283 = vpop.f32.mrf.mxu0
      %v5284 = vadd.f32 0.0, %v5283
      %5285 = vmatmul.f32.gmra.mxu0 %v5171
      %v5286 = vpop.f32.mrf.mxu0
      %v5287 = vadd.f32 0.0, %v5286
      %5288 = vmatmul.f32.gmra.mxu0 %v5174
      %v5289 = vpop.f32.mrf.mxu0
      %v5290 = vadd.f32 0.0, %v5289
      %5291 = vmatmul.f32.gmra.mxu0 %v5177
      %v5292 = vpop.f32.mrf.mxu0
      %v5293 = vadd.f32 0.0, %v5292
      %5294 = vmatmul.f32.gmra.mxu0 %v5180
      %v5295 = vpop.f32.mrf.mxu0
      %v5296 = vadd.f32 0.0, %v5295
      %5297 = vmatmul.f32.gmra.mxu0 %v5183
      %v5298 = vpop.f32.mrf.mxu0
      %v5299 = vadd.f32 0.0, %v5298
      %5300 = vmatmul.f32.gmra.mxu0 %v5186
      %v5301 = vpop.f32.mrf.mxu0
      %v5302 = vadd.f32 0.0, %v5301
      %5303 = vmatmul.f32.gmra.mxu0 %v5189
      %v5304 = vpop.f32.mrf.mxu0
      %v5305 = vadd.f32 0.0, %v5304
      %5306 = vmatmul.f32.gmra.mxu0 %v5192
      %v5307 = vpop.f32.mrf.mxu0
      %v5308 = vadd.f32 0.0, %v5307
      %5309 = vmatmul.f32.gmra.mxu0 %v5195
      %v5310 = vpop.f32.mrf.mxu0
      %v5311 = vadd.f32 0.0, %v5310
      %5312 = vmatmul.f32.gmra.mxu0 %v5198
      %v5313 = vpop.f32.mrf.mxu0
      %v5314 = vadd.f32 0.0, %v5313
      %5315 = vmatmul.f32.gmra.mxu0 %v5201
      %v5316 = vpop.f32.mrf.mxu0
      %v5317 = vadd.f32 0.0, %v5316
      %5318 = vmatmul.f32.gmra.mxu0 %v5204
      %v5319 = vpop.f32.mrf.mxu0
      %v5320 = vadd.f32 0.0, %v5319
      %5321 = vmatmul.f32.gmra.mxu0 %v5207
      %v5322 = vpop.f32.mrf.mxu0
      %v5323 = vadd.f32 0.0, %v5322
      %5324 = vmatmul.f32.gmra.mxu0 %v5210
      %v5325 = vpop.f32.mrf.mxu0
      %v5326 = vadd.f32 0.0, %v5325
      %5327 = vmatmul.f32.gmra.mxu0 %v5213
      %v5328 = vpop.f32.mrf.mxu0
      %v5329 = vadd.f32 0.0, %v5328
      %5330 = vmatmul.f32.gmra.mxu0 %v5216
      %v5331 = vpop.f32.mrf.mxu0
      %v5332 = vadd.f32 0.0, %v5331
      %5333 = vmatmul.f32.gmra.mxu0 %v5219
      %v5334 = vpop.f32.mrf.mxu0
      %v5335 = vadd.f32 0.0, %v5334
      %5336 = vmatmul.f32.gmra.mxu0 %v5222
      %v5337 = vpop.f32.mrf.mxu0
      %v5338 = vadd.f32 0.0, %v5337
      %5339 = vdwg.mxu0
      %v5341 = vsel %vm317, %v2722, 0
      %v5344 = vsel %vm317, %v2723, 0
      %v5347 = vsel %vm317, %v2724, 0
      %v5350 = vsel %vm317, %v2725, 0
      %v5353 = vsel %vm317, %v2726, 0
      %v5356 = vsel %vm317, %v2727, 0
      %v5359 = vsel %vm317, %v2728, 0
      %v5362 = vsel %vm317, %v2729, 0
      %v5365 = vsel %vm317, %v2730, 0
      %v5368 = vsel %vm317, %v2731, 0
      %v5371 = vsel %vm317, %v2732, 0
      %v5374 = vsel %vm317, %v2733, 0
      %v5377 = vsel %vm317, %v2734, 0
      %v5380 = vsel %vm317, %v2735, 0
      %v5383 = vsel %vm317, %v2736, 0
      %v5386 = vsel %vm317, %v2737, 0
      %v5389 = vsel %vm317, %v2738, 0
      %v5392 = vsel %vm317, %v2739, 0
      %v5395 = vsel %vm317, %v2740, 0
      %v5398 = vsel %vm317, %v2741, 0
      %v5401 = vsel %vm317, %v2742, 0
      %v5404 = vsel %vm317, %v2743, 0
      %v5407 = vsel %vm317, %v2744, 0
      %v5410 = vsel %vm317, %v2745, 0
      %v5413 = vsel %vm317, %v2746, 0
      %v5416 = vsel %vm317, %v2747, 0
      %v5419 = vsel %vm317, %v2748, 0
      %v5422 = vsel %vm317, %v2749, 0
      %v5425 = vsel %vm317, %v2750, 0
      %v5428 = vsel %vm317, %v2751, 0
      %v5431 = vsel %vm317, %v2752, 0
      %v5434 = vsel %vm317, %v2753, 0
      %v5437 = vsel %vm414, %v5126, 0
      %5439 = vmatpush.msra.mxu0 0.0
      %5440 = vmatpush.msra.mxu0 0.0
      %5441 = vmatpush.msra.mxu0 0.0
      %5442 = vmatpush.msra.mxu0 0.0
      %5443 = vmatpush.msra.mxu0 0.0
      %5444 = vmatpush.msra.mxu0 0.0
      %5445 = vmatpush.msra.mxu0 0.0
      %5446 = vmatpush.msra.mxu0 0.0
      %5447 = vmatpush.msra.mxu0 0.0
      %5448 = vmatpush.msra.mxu0 0.0
      %5449 = vmatpush.msra.mxu0 0.0
      %5450 = vmatpush.msra.mxu0 0.0
      %5451 = vmatpush.msra.mxu0 0.0
      %5452 = vmatpush.msra.mxu0 0.0
      %5453 = vmatpush.msra.mxu0 0.0
      %5454 = vmatpush.msra.mxu0 %v5437
      %5455 = vmatmul.f32.gmra.mxu0 %v5341
      %v5456 = vpop.f32.mrf.mxu0
      %v5457 = vadd.f32 %v5245, %v5456
      %5458 = vmatmul.f32.gmra.mxu0 %v5344
      %v5459 = vpop.f32.mrf.mxu0
      %v5460 = vadd.f32 %v5248, %v5459
      %5461 = vmatmul.f32.gmra.mxu0 %v5347
      %v5462 = vpop.f32.mrf.mxu0
      %v5463 = vadd.f32 %v5251, %v5462
      %5464 = vmatmul.f32.gmra.mxu0 %v5350
      %v5465 = vpop.f32.mrf.mxu0
      %v5466 = vadd.f32 %v5254, %v5465
      %5467 = vmatmul.f32.gmra.mxu0 %v5353
      %v5468 = vpop.f32.mrf.mxu0
      %v5469 = vadd.f32 %v5257, %v5468
      %5470 = vmatmul.f32.gmra.mxu0 %v5356
      %v5471 = vpop.f32.mrf.mxu0
      %v5472 = vadd.f32 %v5260, %v5471
      %5473 = vmatmul.f32.gmra.mxu0 %v5359
      %v5474 = vpop.f32.mrf.mxu0
      %v5475 = vadd.f32 %v5263, %v5474
      %5476 = vmatmul.f32.gmra.mxu0 %v5362
      %v5477 = vpop.f32.mrf.mxu0
      %v5478 = vadd.f32 %v5266, %v5477
      %5479 = vmatmul.f32.gmra.mxu0 %v5365
      %v5480 = vpop.f32.mrf.mxu0
      %v5481 = vadd.f32 %v5269, %v5480
      %5482 = vmatmul.f32.gmra.mxu0 %v5368
      %v5483 = vpop.f32.mrf.mxu0
      %v5484 = vadd.f32 %v5272, %v5483
      %5485 = vmatmul.f32.gmra.mxu0 %v5371
      %v5486 = vpop.f32.mrf.mxu0
      %v5487 = vadd.f32 %v5275, %v5486
      %5488 = vmatmul.f32.gmra.mxu0 %v5374
      %v5489 = vpop.f32.mrf.mxu0
      %v5490 = vadd.f32 %v5278, %v5489
      %5491 = vmatmul.f32.gmra.mxu0 %v5377
      %v5492 = vpop.f32.mrf.mxu0
      %v5493 = vadd.f32 %v5281, %v5492
      %5494 = vmatmul.f32.gmra.mxu0 %v5380
      %v5495 = vpop.f32.mrf.mxu0
      %v5496 = vadd.f32 %v5284, %v5495
      %5497 = vmatmul.f32.gmra.mxu0 %v5383
      %v5498 = vpop.f32.mrf.mxu0
      %v5499 = vadd.f32 %v5287, %v5498
      %5500 = vmatmul.f32.gmra.mxu0 %v5386
      %v5501 = vpop.f32.mrf.mxu0
      %v5502 = vadd.f32 %v5290, %v5501
      %5503 = vmatmul.f32.gmra.mxu0 %v5389
      %v5504 = vpop.f32.mrf.mxu0
      %v5505 = vadd.f32 %v5293, %v5504
      %5506 = vmatmul.f32.gmra.mxu0 %v5392
      %v5507 = vpop.f32.mrf.mxu0
      %v5508 = vadd.f32 %v5296, %v5507
      %5509 = vmatmul.f32.gmra.mxu0 %v5395
      %v5510 = vpop.f32.mrf.mxu0
      %v5511 = vadd.f32 %v5299, %v5510
      %5512 = vmatmul.f32.gmra.mxu0 %v5398
      %v5513 = vpop.f32.mrf.mxu0
      %v5514 = vadd.f32 %v5302, %v5513
      %5515 = vmatmul.f32.gmra.mxu0 %v5401
      %v5516 = vpop.f32.mrf.mxu0
      %v5517 = vadd.f32 %v5305, %v5516
      %5518 = vmatmul.f32.gmra.mxu0 %v5404
      %v5519 = vpop.f32.mrf.mxu0
      %v5520 = vadd.f32 %v5308, %v5519
      %5521 = vmatmul.f32.gmra.mxu0 %v5407
      %v5522 = vpop.f32.mrf.mxu0
      %v5523 = vadd.f32 %v5311, %v5522
      %5524 = vmatmul.f32.gmra.mxu0 %v5410
      %v5525 = vpop.f32.mrf.mxu0
      %v5526 = vadd.f32 %v5314, %v5525
      %5527 = vmatmul.f32.gmra.mxu0 %v5413
      %v5528 = vpop.f32.mrf.mxu0
      %v5529 = vadd.f32 %v5317, %v5528
      %5530 = vmatmul.f32.gmra.mxu0 %v5416
      %v5531 = vpop.f32.mrf.mxu0
      %v5532 = vadd.f32 %v5320, %v5531
      %5533 = vmatmul.f32.gmra.mxu0 %v5419
      %v5534 = vpop.f32.mrf.mxu0
      %v5535 = vadd.f32 %v5323, %v5534
      %5536 = vmatmul.f32.gmra.mxu0 %v5422
      %v5537 = vpop.f32.mrf.mxu0
      %v5538 = vadd.f32 %v5326, %v5537
      %5539 = vmatmul.f32.gmra.mxu0 %v5425
      %v5540 = vpop.f32.mrf.mxu0
      %v5541 = vadd.f32 %v5329, %v5540
      %5542 = vmatmul.f32.gmra.mxu0 %v5428
      %v5543 = vpop.f32.mrf.mxu0
      %v5544 = vadd.f32 %v5332, %v5543
      %5545 = vmatmul.f32.gmra.mxu0 %v5431
      %v5546 = vpop.f32.mrf.mxu0
      %v5547 = vadd.f32 %v5335, %v5546
      %5548 = vmatmul.f32.gmra.mxu0 %v5434
      %v5549 = vpop.f32.mrf.mxu0
      %v5550 = vadd.f32 %v5338, %v5549
      %5551 = vdwg.mxu0
      %v5552 = vld [vmem:[%s4 + $0x2] sm:$0x1]
      %v5553 = vperm.slane %v5552, 0
      %v5554 = vadd.f32 %v5457, %v5553
      %v5555 = vadd.f32 %v5460, %v5553
      %v5556 = vadd.f32 %v5463, %v5553
      %v5557 = vadd.f32 %v5466, %v5553
      %v5558 = vadd.f32 %v5469, %v5553
      %v5559 = vadd.f32 %v5472, %v5553
      %v5560 = vadd.f32 %v5475, %v5553
      %v5561 = vadd.f32 %v5478, %v5553
      %v5562 = vadd.f32 %v5481, %v5553
      %v5563 = vadd.f32 %v5484, %v5553
      %v5564 = vadd.f32 %v5487, %v5553
      %v5565 = vadd.f32 %v5490, %v5553
      %v5566 = vadd.f32 %v5493, %v5553
      %v5567 = vadd.f32 %v5496, %v5553
      %v5568 = vadd.f32 %v5499, %v5553
      %v5569 = vadd.f32 %v5502, %v5553
      %v5570 = vadd.f32 %v5505, %v5553
      %v5571 = vadd.f32 %v5508, %v5553
      %v5572 = vadd.f32 %v5511, %v5553
      %v5573 = vadd.f32 %v5514, %v5553
      %v5574 = vadd.f32 %v5517, %v5553
      %v5575 = vadd.f32 %v5520, %v5553
      %v5576 = vadd.f32 %v5523, %v5553
      %v5577 = vadd.f32 %v5526, %v5553
      %v5578 = vadd.f32 %v5529, %v5553
      %v5579 = vadd.f32 %v5532, %v5553
      %v5580 = vadd.f32 %v5535, %v5553
      %v5581 = vadd.f32 %v5538, %v5553
      %v5582 = vadd.f32 %v5541, %v5553
      %v5583 = vadd.f32 %v5544, %v5553
      %v5584 = vadd.f32 %v5547, %v5553
      %v5585 = vadd.f32 %v5550, %v5553
      %v5586 = vmax.f32 %v5554, 0.0
      %v5587 = vmax.f32 %v5555, 0.0
      %v5588 = vmax.f32 %v5556, 0.0
      %v5589 = vmax.f32 %v5557, 0.0
      %v5590 = vmax.f32 %v5558, 0.0
      %v5591 = vmax.f32 %v5559, 0.0
      %v5592 = vmax.f32 %v5560, 0.0
      %v5593 = vmax.f32 %v5561, 0.0
      %v5594 = vmax.f32 %v5562, 0.0
      %v5595 = vmax.f32 %v5563, 0.0
      %v5596 = vmax.f32 %v5564, 0.0
      %v5597 = vmax.f32 %v5565, 0.0
      %v5598 = vmax.f32 %v5566, 0.0
      %v5599 = vmax.f32 %v5567, 0.0
      %v5600 = vmax.f32 %v5568, 0.0
      %v5601 = vmax.f32 %v5569, 0.0
      %v5602 = vmax.f32 %v5570, 0.0
      %v5603 = vmax.f32 %v5571, 0.0
      %v5604 = vmax.f32 %v5572, 0.0
      %v5605 = vmax.f32 %v5573, 0.0
      %v5606 = vmax.f32 %v5574, 0.0
      %v5607 = vmax.f32 %v5575, 0.0
      %v5608 = vmax.f32 %v5576, 0.0
      %v5609 = vmax.f32 %v5577, 0.0
      %v5610 = vmax.f32 %v5578, 0.0
      %v5611 = vmax.f32 %v5579, 0.0
      %v5612 = vmax.f32 %v5580, 0.0
      %v5613 = vmax.f32 %v5581, 0.0
      %v5614 = vmax.f32 %v5582, 0.0
      %v5615 = vmax.f32 %v5583, 0.0
      %v5616 = vmax.f32 %v5584, 0.0
      %v5617 = vmax.f32 %v5585, 0.0
      %5618 = vst.msk [vmem:[%s246] sm:$0xff] %vm317, %v5586
      %5619 = vst.msk [vmem:[%s246 + $0x8] sm:$0xff] %vm317, %v5587
      %5620 = vst.msk [vmem:[%s246 + $0x10] sm:$0xff] %vm317, %v5588
      %5621 = vst.msk [vmem:[%s246 + $0x18] sm:$0xff] %vm317, %v5589
      %5622 = vst.msk [vmem:[%s246 + $0x20] sm:$0xff] %vm317, %v5590
      %5623 = vst.msk [vmem:[%s246 + $0x28] sm:$0xff] %vm317, %v5591
      %5624 = vst.msk [vmem:[%s246 + $0x30] sm:$0xff] %vm317, %v5592
      %5625 = vst.msk [vmem:[%s246 + $0x38] sm:$0xff] %vm317, %v5593
      %5626 = vst.msk [vmem:[%s246 + $0x40] sm:$0xff] %vm317, %v5594
      %5627 = vst.msk [vmem:[%s246 + $0x48] sm:$0xff] %vm317, %v5595
      %5628 = vst.msk [vmem:[%s246 + $0x50] sm:$0xff] %vm317, %v5596
      %5629 = vst.msk [vmem:[%s246 + $0x58] sm:$0xff] %vm317, %v5597
      %5630 = vst.msk [vmem:[%s246 + $0x60] sm:$0xff] %vm317, %v5598
      %5631 = vst.msk [vmem:[%s246 + $0x68] sm:$0xff] %vm317, %v5599
      %5632 = vst.msk [vmem:[%s246 + $0x70] sm:$0xff] %vm317, %v5600
      %5633 = vst.msk [vmem:[%s246 + $0x78] sm:$0xff] %vm317, %v5601
      %5634 = vst.msk [vmem:[%s246 + $0x80] sm:$0xff] %vm317, %v5602
      %5635 = vst.msk [vmem:[%s246 + $0x88] sm:$0xff] %vm317, %v5603
      %5636 = vst.msk [vmem:[%s246 + $0x90] sm:$0xff] %vm317, %v5604
      %5637 = vst.msk [vmem:[%s246 + $0x98] sm:$0xff] %vm317, %v5605
      %5638 = vst.msk [vmem:[%s246 + $0xa0] sm:$0xff] %vm317, %v5606
      %5639 = vst.msk [vmem:[%s246 + $0xa8] sm:$0xff] %vm317, %v5607
      %5640 = vst.msk [vmem:[%s246 + $0xb0] sm:$0xff] %vm317, %v5608
      %5641 = vst.msk [vmem:[%s246 + $0xb8] sm:$0xff] %vm317, %v5609
      %5642 = vst.msk [vmem:[%s246 + $0xc0] sm:$0xff] %vm317, %v5610
      %5643 = vst.msk [vmem:[%s246 + $0xc8] sm:$0xff] %vm317, %v5611
      %5644 = vst.msk [vmem:[%s246 + $0xd0] sm:$0xff] %vm317, %v5612
      %5645 = vst.msk [vmem:[%s246 + $0xd8] sm:$0xff] %vm317, %v5613
      %5646 = vst.msk [vmem:[%s246 + $0xe0] sm:$0xff] %vm317, %v5614
      %5647 = vst.msk [vmem:[%s246 + $0xe8] sm:$0xff] %vm317, %v5615
      %5648 = vst.msk [vmem:[%s246 + $0xf0] sm:$0xff] %vm317, %v5616
      %5649 = vst.msk [vmem:[%s246 + $0xf8] sm:$0xff] %vm317, %v5617
      %p5650 = scmp.lt.s32.totalorder %s20, 1
      %s5651 = scalar_select %p5650, %s20, 1
      %p5652 = scmp.lt.s32.totalorder %s21, 0
      %s5653 = scalar_select %p5652, %s21, 0
      %s5654 = smul.addr %s5653, 32
      %s5655 = smul.addr %s5651, 32
      %s5656 = sadd.s32 %s5654, %s5655
      %s5657 = smul.addr %s5656, 8
      %s5658 = scalar_lea.vmem %s5, %s5657
      // Predicated region
      $region41: #{tpu_custom_call.1} parent=39 // pred_check
        %p5659 = pneg %p158
      $region42: #{tpu_custom_call.1} parent=39 // pred_check_branch
        %5661 = sbr.rel (%p5659) target = $region44
      $region43: #{tpu_custom_call.1} parent=39 // pred_region
        _
      $region44: #{tpu_custom_call.1} parent=39 // pred_fallthru
        _
    $region40: #{tpu_custom_call.1} parent=5 // pred_fallthru
      _
    %p5662 = scmp.le.s32.totalorder 2, %s11
    // Predicated region
    $region45: #{tpu_custom_call.1} parent=5 // pred_check
      %p5663 = pneg %p5662
    $region46: #{tpu_custom_call.1} parent=5 // pred_check_branch
      %5665 = sbr.rel (%p5663) target = $region48
    $region47: #{tpu_custom_call.1} parent=5 // pred_region
      %s5666 = ssub.s32 %s11, 2
      // Predicated region
      $region49: #{tpu_custom_call.1} parent=47 // pred_check
        %p5667 = pneg %p164
      $region50: #{tpu_custom_call.1} parent=47 // pred_check_branch
        %5669 = sbr.rel (%p5667) target = $region52
      $region51: #{tpu_custom_call.1} parent=47 // pred_region
        %p5670 = scmp.lt.s32.totalorder %s22, 1
        %s5671 = scalar_select %p5670, %s22, 1
        %p5672 = scmp.lt.s32.totalorder %s23, 0
        %s5673 = scalar_select %p5672, %s23, 0
        %s5674 = smul.addr %s5673, 32
        %s5675 = smul.addr %s5671, 32
        %s5676 = sadd.s32 %s5674, %s5675
        %s5677 = smul.addr %s5676, 8
        %s5678 = scalar_lea.vmem %s5, %s5677
      $region52: #{tpu_custom_call.1} parent=47 // pred_fallthru
        _
    $region48: #{tpu_custom_call.1} parent=5 // pred_fallthru
      _
  $region6: #{tpu_custom_call.1} parent=0 // loop_footer
    %s15 = sadd.s32 1, %s11
  $region7: #{tpu_custom_call.1} parent=0 // loop_footer_branch
    %10 = sbr.rel target = $region3
  $region8: #{tpu_custom_call.1} parent=0 // loop_exit
    _

</llo_original>
